<compile_context>
chip_gen: v5e
topology: v5e:2x2
jax: 0.10.0
libtpu: 0.0.40
codegen_flags: <defaults>
</compile_context>

<pallas_src>
import jax
import jax.numpy as jnp
from jax.experimental import pallas as pl
from jax.experimental.pallas import tpu as pltpu


# ---------------------------------------------------------------------------
# Fused kernel: one grid step == one sample's full forward pass.
# ---------------------------------------------------------------------------
def _policy_fused_kernel(p1_ref, x_ref, w1_ref, b1_ref, w2_ref, b2_ref,
                         s1_ref, s2_ref,
                         w1x_ref, w1y_ref, b1fc_ref, hw_ref, hb_ref,
                         out_ref):
    f32 = jnp.float32

    # conv1 (im2col matmul) + bias + relu: (576,25)@(25,10) -> (576,10), row = h*24+w
    y1 = jnp.dot(p1_ref[0], w1_ref[...], preferred_element_type=f32) + b1_ref[...]
    y1 = jnp.maximum(y1, 0.0)

    # max_pool2d(2,2) #1: shift-and-max (VPU) + one gather matmul.
    #   m[r] = max(y1[r + {0,1,24,25}]); pooled (h2,w2) lives at m-row h2*48 + 2*w2,
    #   which s1 (144,551) compacts to y1p row h2*12 + w2.
    m = jnp.maximum(y1[0:575, :], y1[1:576, :])            # (575,10)  w-offset {0,1}
    m = jnp.maximum(m[0:551, :], m[24:575, :])             # (551,10)  h-offset {0,1}
    y1p = jnp.dot(s1_ref[...], m, preferred_element_type=f32)   # (144,10) row=h*12+w

    # conv2: for tap (kh,kw) the rows of y1p needed by all 64 output positions form
    # one contiguous 92-row window starting at kh*12+kw; the (output-row -> window-
    # row) map is identical for every tap, so accumulate over taps on the window.
    acc = jnp.zeros((92, 10), f32)
    for kh in range(5):
        for kw in range(5):
            tap = kh * 5 + kw
            start = kh * 12 + kw
            acc = acc + jnp.dot(y1p[start:start + 92, :],
                                w2_ref[tap * 10:(tap + 1) * 10, :],
                                preferred_element_type=f32)
    # bias + relu directly on the 92-row window layout (row = h*12 + w, h,w < 8 valid)
    y2 = jnp.maximum(acc + b2_ref[...], 0.0)               # (92,10)

    # max_pool2d(2,2) #2 fused with the conv2 row gather: pooled (h2,w2) is the max
    # of y2 rows h2*24 + 2*w2 + {0,1,12,13}; s2 (16,79) compacts to row h2*4 + w2.
    m = jnp.maximum(y2[0:91, :], y2[1:92, :])              # (91,10)
    m = jnp.maximum(m[0:79, :], m[12:91, :])               # (79,10)
    y2p = jnp.dot(s2_ref[...], m, preferred_element_type=f32)   # (16,10) row=h*4+w

    # fc1 + tanh: x part plus the 16 spatial positions of the pooled map (torch NCHW
    # flatten order is handled by the re-ordered fc1 weight columns in the wrapper).
    h = jnp.dot(x_ref[0], w1x_ref[...], preferred_element_type=f32)      # (1,64)
    for p in range(16):
        h = h + jnp.dot(y2p[p:p + 1, :], w1y_ref[p],
                        preferred_element_type=f32)
    h = jnp.tanh(h + b1fc_ref[...])

    # fused heads: single (1,64)@(64,6) matmul -> [mean | sigma | value], one store.
    out = jnp.dot(h, hw_ref[...], preferred_element_type=f32) + hb_ref[...]
    col = jax.lax.broadcasted_iota(jnp.int32, (1, 6), 1)
    is_sigma = jnp.logical_and(col >= 2, col < 4)
    out_ref[0] = jnp.where(is_sigma, jax.nn.sigmoid(out) * 1.0 + 0.001, out)


# ---------------------------------------------------------------------------
# Wrapper: one pallas_call for the whole forward.
# ---------------------------------------------------------------------------
def _row_selector(n_rows, n_cols, col_of_row):
    r = jnp.arange(n_rows)
    cols = jnp.arange(n_cols)
    return (cols[None, :] == col_of_row(r)[:, None]).astype(jnp.float32)


def policy_forward(params, x, image):
    image = image.reshape(-1, 28, 28).astype(jnp.float32)
    x = x.reshape(-1, 3).astype(jnp.float32)
    B = image.shape[0]

    # conv1 im2col patches (depend only on the raw input): (B, 576, 25)
    p1 = jnp.stack([image[:, kh:kh + 24, kw:kw + 24]
                    for kh in range(5) for kw in range(5)], axis=-1)
    p1 = p1.reshape(B, 576, 25)
    x3 = x.reshape(B, 1, 3)

    # weights rearranged once so every in-kernel contraction is a plain 2D matmul
    w1r = params["conv1_w"].transpose(2, 3, 1, 0).reshape(25, 10)
    b1 = params["conv1_b"].reshape(1, 10)
    w2r = params["conv2_w"].transpose(2, 3, 1, 0).reshape(250, 10)
    b2 = params["conv2_b"].reshape(1, 10)
    fc1_w = params["fc1_w"]                                        # (64, 163)
    w1x = fc1_w[:, :3].T                                           # (3, 64)
    w1y = fc1_w[:, 3:].reshape(64, 10, 16).transpose(2, 1, 0)      # (16,10,64)
    b1fc = params["fc1_b"].reshape(1, 64)
    head_w = jnp.concatenate([params["fc2_mean_w"],
                              params["fc2_value_w"]], axis=0).T    # (64, 6)
    head_b = jnp.concatenate([params["fc2_mean_b"],
                              params["fc2_value_b"]]).reshape(1, 6)

    # 0/1 selection matrices for the fused pooling / conv2 row gathers
    sel1 = _row_selector(144, 551, lambda r: (r // 12) * 48 + (r % 12) * 2)
    sel2 = _row_selector(16, 79, lambda r: (r // 4) * 24 + (r % 4) * 2)

    def rep(shape):
        return pl.BlockSpec(shape, lambda b: (0,) * len(shape))

    def per_sample(shape):
        return pl.BlockSpec(shape, lambda b: (b,) + (0,) * (len(shape) - 1))

    out = pl.pallas_call(
        _policy_fused_kernel,
        grid=(B,),
        in_specs=[
            per_sample((1, 576, 25)),            # conv1 patches
            per_sample((1, 1, 3)),               # x
            rep((25, 10)), rep((1, 10)),         # conv1 w, b
            rep((250, 10)), rep((1, 10)),        # conv2 w, b
            rep((144, 551)), rep((16, 79)),      # pooling / gather selectors
            rep((3, 64)), rep((16, 10, 64)), rep((1, 64)),   # fc1
            rep((64, 6)), rep((1, 6)),           # fused mean|sigma|value head
        ],
        out_specs=per_sample((1, 1, 6)),
        out_shape=jax.ShapeDtypeStruct((B, 1, 6), jnp.float32),
        compiler_params=pltpu.CompilerParams(
            dimension_semantics=("parallel",)),
    )(p1, x3, w1r, b1, w2r, b2, sel1, sel2,
      w1x, w1y, b1fc, head_w, head_b)

    res = out.reshape(B, 6)
    return res[:, 0:2], res[:, 2:4], res[:, 4:6]


# ---------------------------------------------------------------------------
# Pure-JAX reference (mirrors the PyTorch forward), for a loose sanity check.
# ---------------------------------------------------------------------------
def policy_forward_ref(params, x, image):
    image = image.reshape(-1, 1, 28, 28).astype(jnp.float32)
    x = x.reshape(-1, 3).astype(jnp.float32)
    dn = ("NCHW", "OIHW", "NCHW")
    y = jax.lax.conv_general_dilated(image, params["conv1_w"], (1, 1), "VALID",
                                     dimension_numbers=dn)
    y = jax.nn.relu(y + params["conv1_b"][None, :, None, None])
    y = jax.lax.reduce_window(y, -jnp.inf, jax.lax.max,
                              (1, 1, 2, 2), (1, 1, 2, 2), "VALID")
    y = jax.lax.conv_general_dilated(y, params["conv2_w"], (1, 1), "VALID",
                                     dimension_numbers=dn)
    y = jax.nn.relu(y + params["conv2_b"][None, :, None, None])
    y = jax.lax.reduce_window(y, -jnp.inf, jax.lax.max,
                              (1, 1, 2, 2), (1, 1, 2, 2), "VALID")
    y = y.reshape(y.shape[0], -1)                 # NCHW flatten -> (B, 160)
    h = jnp.concatenate([x, y], axis=1) @ params["fc1_w"].T + params["fc1_b"]
    h = jnp.tanh(h)
    am = h @ params["fc2_mean_w"].T + params["fc2_mean_b"]
    mean, sigma = am[:, :2], jax.nn.sigmoid(am[:, 2:]) * 1.0 + 0.001
    value = h @ params["fc2_value_w"].T + params["fc2_value_b"]
    return mean, sigma, value


# ---------------------------------------------------------------------------
# Parameter setup (PyTorch layouts; Linear weights xavier_normal, zero biases)
# ---------------------------------------------------------------------------
def init_params(key, state_space=2, action_space=2, hidden=64):
    ks = jax.random.split(key, 8)

    def xavier(k, shape):  # torch.nn.init.xavier_normal_
        fan_out, fan_in = shape
        std = (2.0 / (fan_in + fan_out)) ** 0.5
        return std * jax.random.normal(k, shape, jnp.float32)

    in1 = state_space + 1 + 10 * 4 * 4  # 163
    return {
        "conv1_w": 0.1 * jax.random.normal(ks[0], (10, 1, 5, 5), jnp.float32),
        "conv1_b": 0.01 * jax.random.normal(ks[1], (10,), jnp.float32),
        "conv2_w": 0.1 * jax.random.normal(ks[2], (10, 10, 5, 5), jnp.float32),
        "conv2_b": 0.01 * jax.random.normal(ks[3], (10,), jnp.float32),
        "fc1_w": xavier(ks[4], (hidden, in1)),
        "fc1_b": jnp.zeros((hidden,), jnp.float32),
        "fc2_mean_w": xavier(ks[5], (2 * action_space, hidden)),
        "fc2_mean_b": jnp.zeros((2 * action_space,), jnp.float32),
        "fc2_value_w": xavier(ks[6], (action_space, hidden)),
        "fc2_value_b": jnp.zeros((action_space,), jnp.float32),
    }


if __name__ == "__main__":
    key = jax.random.PRNGKey(0)
    kp, kx, ki = jax.random.split(key, 3)
    params = init_params(kp)

    B = 2
    x = jax.random.normal(kx, (B, 3), jnp.float32)
    image = jax.random.normal(ki, (B, 1, 28, 28), jnp.float32)

    mean, sigma, value = jax.jit(policy_forward)(params, x, image)
    jax.block_until_ready((mean, sigma, value))

    assert mean.shape == (B, 2) and sigma.shape == (B, 2) and value.shape == (B, 2)
    assert bool(jnp.all(sigma > 0.0))
    assert bool(jnp.all(jnp.isfinite(mean))) and bool(jnp.all(jnp.isfinite(value)))

    # Loose tolerance: TPU f32 matmuls/convs default to reduced (bf16-pass) MXU
    # precision and the two paths may pick different accumulation algorithms.
    rm, rs, rv = jax.jit(policy_forward_ref)(params, x, image)
    jax.block_until_ready((rm, rs, rv))
    assert bool(jnp.allclose(mean, rm, atol=0.1, rtol=0.1))
    assert bool(jnp.allclose(sigma, rs, atol=0.1, rtol=0.1))
    assert bool(jnp.allclose(value, rv, atol=0.1, rtol=0.1))

    print("KERNEL_OK")
</pallas_src>

<mosaic_0001>
module attributes {stable_mosaic.version = 11 : i64} {
  func.func @_policy_fused_kernel(%arg0: i32, %arg1: memref<1x576x25xf32, #tpu.memory_space<vmem>>, %arg2: memref<1x1x3xf32, #tpu.memory_space<vmem>>, %arg3: memref<25x10xf32, #tpu.memory_space<vmem>>, %arg4: memref<1x10xf32, #tpu.memory_space<vmem>>, %arg5: memref<250x10xf32, #tpu.memory_space<vmem>>, %arg6: memref<1x10xf32, #tpu.memory_space<vmem>>, %arg7: memref<144x551xf32, #tpu.memory_space<vmem>>, %arg8: memref<16x79xf32, #tpu.memory_space<vmem>>, %arg9: memref<3x64xf32, #tpu.memory_space<vmem>>, %arg10: memref<16x10x64xf32, #tpu.memory_space<vmem>>, %arg11: memref<1x64xf32, #tpu.memory_space<vmem>>, %arg12: memref<64x6xf32, #tpu.memory_space<vmem>>, %arg13: memref<1x6xf32, #tpu.memory_space<vmem>>, %arg14: memref<1x1x6xf32, #tpu.memory_space<vmem>>) attributes {dimension_semantics = [#tpu.dimension_semantics<parallel>], iteration_bounds = array<i64: 2>, scalar_prefetch = 0 : i64, scratch_operands = 0 : i64, tpu.core_type = #tpu.core_type<tc>, window_params = [{transform_indices = @transform_0, window_bounds = array<i64: 1, 576, 25>}, {transform_indices = @transform_1, window_bounds = array<i64: 1, 1, 3>}, {pipeline_mode = #tpu.pipeline_mode<synchronous>, transform_indices = @transform_2, window_bounds = array<i64: 25, 10>}, {pipeline_mode = #tpu.pipeline_mode<synchronous>, transform_indices = @transform_3, window_bounds = array<i64: 1, 10>}, {pipeline_mode = #tpu.pipeline_mode<synchronous>, transform_indices = @transform_4, window_bounds = array<i64: 250, 10>}, {pipeline_mode = #tpu.pipeline_mode<synchronous>, transform_indices = @transform_5, window_bounds = array<i64: 1, 10>}, {pipeline_mode = #tpu.pipeline_mode<synchronous>, transform_indices = @transform_6, window_bounds = array<i64: 144, 551>}, {pipeline_mode = #tpu.pipeline_mode<synchronous>, transform_indices = @transform_7, window_bounds = array<i64: 16, 79>}, {pipeline_mode = #tpu.pipeline_mode<synchronous>, transform_indices = @transform_8, window_bounds = array<i64: 3, 64>}, {pipeline_mode = #tpu.pipeline_mode<synchronous>, transform_indices = @transform_9, window_bounds = array<i64: 16, 10, 64>}, {pipeline_mode = #tpu.pipeline_mode<synchronous>, transform_indices = @transform_10, window_bounds = array<i64: 1, 64>}, {pipeline_mode = #tpu.pipeline_mode<synchronous>, transform_indices = @transform_11, window_bounds = array<i64: 64, 6>}, {pipeline_mode = #tpu.pipeline_mode<synchronous>, transform_indices = @transform_12, window_bounds = array<i64: 1, 6>}, {transform_indices = @transform_13, window_bounds = array<i64: 1, 1, 6>}]} {
    %c0 = arith.constant 0 : index
    %c0_0 = arith.constant 0 : index
    %c0_1 = arith.constant 0 : index
    %0 = vector.load %arg1[%c0, %c0_0, %c0_1] : memref<1x576x25xf32, #tpu.memory_space<vmem>>, vector<1x576x25xf32>
    %1 = vector.shape_cast %0 : vector<1x576x25xf32> to vector<576x25xf32>
    %c0_2 = arith.constant 0 : index
    %c0_3 = arith.constant 0 : index
    %2 = vector.load %arg3[%c0_2, %c0_3] : memref<25x10xf32, #tpu.memory_space<vmem>>, vector<25x10xf32>
    %cst = arith.constant dense<0.000000e+00> : vector<576x10xf32>
    %3 = tpu.matmul %1, %2, %cst {dimension_numbers = #tpu.dot_dimension_numbers<[1], [0], [0], [1], [0, 0, 1, 1], [], []>} : vector<576x25xf32>, vector<25x10xf32>, vector<576x10xf32> -> vector<576x10xf32>
    %c0_4 = arith.constant 0 : index
    %c0_5 = arith.constant 0 : index
    %4 = vector.load %arg4[%c0_4, %c0_5] : memref<1x10xf32, #tpu.memory_space<vmem>>, vector<1x10xf32>
    %5 = vector.broadcast %4 : vector<1x10xf32> to vector<576x10xf32>
    %6 = arith.addf %3, %5 : vector<576x10xf32>
    %cst_6 = arith.constant 0.000000e+00 : f32
    %7 = vector.broadcast %cst_6 : f32 to vector<576x10xf32>
    %8 = arith.maximumf %6, %7 : vector<576x10xf32>
    %9 = vector.extract_strided_slice %8 {offsets = [0, 0], sizes = [575, 10], strides = [1, 1]} : vector<576x10xf32> to vector<575x10xf32>
    %10 = vector.extract_strided_slice %8 {offsets = [1, 0], sizes = [575, 10], strides = [1, 1]} : vector<576x10xf32> to vector<575x10xf32>
    %11 = arith.maximumf %9, %10 : vector<575x10xf32>
    %12 = vector.extract_strided_slice %11 {offsets = [0, 0], sizes = [551, 10], strides = [1, 1]} : vector<575x10xf32> to vector<551x10xf32>
    %13 = vector.extract_strided_slice %11 {offsets = [24, 0], sizes = [551, 10], strides = [1, 1]} : vector<575x10xf32> to vector<551x10xf32>
    %14 = arith.maximumf %12, %13 : vector<551x10xf32>
    %c0_7 = arith.constant 0 : index
    %c0_8 = arith.constant 0 : index
    %15 = vector.load %arg7[%c0_7, %c0_8] : memref<144x551xf32, #tpu.memory_space<vmem>>, vector<144x551xf32>
    %cst_9 = arith.constant dense<0.000000e+00> : vector<144x10xf32>
    %16 = tpu.matmul %15, %14, %cst_9 {dimension_numbers = #tpu.dot_dimension_numbers<[1], [0], [0], [1], [0, 0, 1, 1], [], []>} : vector<144x551xf32>, vector<551x10xf32>, vector<144x10xf32> -> vector<144x10xf32>
    %cst_10 = arith.constant 0.000000e+00 : f32
    %17 = vector.broadcast %cst_10 : f32 to vector<92x10xf32>
    %18 = vector.extract_strided_slice %16 {offsets = [0, 0], sizes = [92, 10], strides = [1, 1]} : vector<144x10xf32> to vector<92x10xf32>
    %c0_11 = arith.constant 0 : index
    %c0_12 = arith.constant 0 : index
    %19 = vector.load %arg5[%c0_11, %c0_12] : memref<250x10xf32, #tpu.memory_space<vmem>>, vector<10x10xf32>
    %cst_13 = arith.constant dense<0.000000e+00> : vector<92x10xf32>
    %20 = tpu.matmul %18, %19, %cst_13 {dimension_numbers = #tpu.dot_dimension_numbers<[1], [0], [0], [1], [0, 0, 1, 1], [], []>} : vector<92x10xf32>, vector<10x10xf32>, vector<92x10xf32> -> vector<92x10xf32>
    %21 = arith.addf %17, %20 : vector<92x10xf32>
    %22 = vector.extract_strided_slice %16 {offsets = [1, 0], sizes = [92, 10], strides = [1, 1]} : vector<144x10xf32> to vector<92x10xf32>
    %c10 = arith.constant 10 : index
    %c0_14 = arith.constant 0 : index
    %23 = vector.load %arg5[%c10, %c0_14] : memref<250x10xf32, #tpu.memory_space<vmem>>, vector<10x10xf32>
    %cst_15 = arith.constant dense<0.000000e+00> : vector<92x10xf32>
    %24 = tpu.matmul %22, %23, %cst_15 {dimension_numbers = #tpu.dot_dimension_numbers<[1], [0], [0], [1], [0, 0, 1, 1], [], []>} : vector<92x10xf32>, vector<10x10xf32>, vector<92x10xf32> -> vector<92x10xf32>
    %25 = arith.addf %21, %24 : vector<92x10xf32>
    %26 = vector.extract_strided_slice %16 {offsets = [2, 0], sizes = [92, 10], strides = [1, 1]} : vector<144x10xf32> to vector<92x10xf32>
    %c20 = arith.constant 20 : index
    %c0_16 = arith.constant 0 : index
    %27 = vector.load %arg5[%c20, %c0_16] : memref<250x10xf32, #tpu.memory_space<vmem>>, vector<10x10xf32>
    %cst_17 = arith.constant dense<0.000000e+00> : vector<92x10xf32>
    %28 = tpu.matmul %26, %27, %cst_17 {dimension_numbers = #tpu.dot_dimension_numbers<[1], [0], [0], [1], [0, 0, 1, 1], [], []>} : vector<92x10xf32>, vector<10x10xf32>, vector<92x10xf32> -> vector<92x10xf32>
    %29 = arith.addf %25, %28 : vector<92x10xf32>
    %30 = vector.extract_strided_slice %16 {offsets = [3, 0], sizes = [92, 10], strides = [1, 1]} : vector<144x10xf32> to vector<92x10xf32>
    %c30 = arith.constant 30 : index
    %c0_18 = arith.constant 0 : index
    %31 = vector.load %arg5[%c30, %c0_18] : memref<250x10xf32, #tpu.memory_space<vmem>>, vector<10x10xf32>
    %cst_19 = arith.constant dense<0.000000e+00> : vector<92x10xf32>
    %32 = tpu.matmul %30, %31, %cst_19 {dimension_numbers = #tpu.dot_dimension_numbers<[1], [0], [0], [1], [0, 0, 1, 1], [], []>} : vector<92x10xf32>, vector<10x10xf32>, vector<92x10xf32> -> vector<92x10xf32>
    %33 = arith.addf %29, %32 : vector<92x10xf32>
    %34 = vector.extract_strided_slice %16 {offsets = [4, 0], sizes = [92, 10], strides = [1, 1]} : vector<144x10xf32> to vector<92x10xf32>
    %c40 = arith.constant 40 : index
    %c0_20 = arith.constant 0 : index
    %35 = vector.load %arg5[%c40, %c0_20] : memref<250x10xf32, #tpu.memory_space<vmem>>, vector<10x10xf32>
    %cst_21 = arith.constant dense<0.000000e+00> : vector<92x10xf32>
    %36 = tpu.matmul %34, %35, %cst_21 {dimension_numbers = #tpu.dot_dimension_numbers<[1], [0], [0], [1], [0, 0, 1, 1], [], []>} : vector<92x10xf32>, vector<10x10xf32>, vector<92x10xf32> -> vector<92x10xf32>
    %37 = arith.addf %33, %36 : vector<92x10xf32>
    %38 = vector.extract_strided_slice %16 {offsets = [12, 0], sizes = [92, 10], strides = [1, 1]} : vector<144x10xf32> to vector<92x10xf32>
    %c50 = arith.constant 50 : index
    %c0_22 = arith.constant 0 : index
    %39 = vector.load %arg5[%c50, %c0_22] : memref<250x10xf32, #tpu.memory_space<vmem>>, vector<10x10xf32>
    %cst_23 = arith.constant dense<0.000000e+00> : vector<92x10xf32>
    %40 = tpu.matmul %38, %39, %cst_23 {dimension_numbers = #tpu.dot_dimension_numbers<[1], [0], [0], [1], [0, 0, 1, 1], [], []>} : vector<92x10xf32>, vector<10x10xf32>, vector<92x10xf32> -> vector<92x10xf32>
    %41 = arith.addf %37, %40 : vector<92x10xf32>
    %42 = vector.extract_strided_slice %16 {offsets = [13, 0], sizes = [92, 10], strides = [1, 1]} : vector<144x10xf32> to vector<92x10xf32>
    %c60 = arith.constant 60 : index
    %c0_24 = arith.constant 0 : index
    %43 = vector.load %arg5[%c60, %c0_24] : memref<250x10xf32, #tpu.memory_space<vmem>>, vector<10x10xf32>
    %cst_25 = arith.constant dense<0.000000e+00> : vector<92x10xf32>
    %44 = tpu.matmul %42, %43, %cst_25 {dimension_numbers = #tpu.dot_dimension_numbers<[1], [0], [0], [1], [0, 0, 1, 1], [], []>} : vector<92x10xf32>, vector<10x10xf32>, vector<92x10xf32> -> vector<92x10xf32>
    %45 = arith.addf %41, %44 : vector<92x10xf32>
    %46 = vector.extract_strided_slice %16 {offsets = [14, 0], sizes = [92, 10], strides = [1, 1]} : vector<144x10xf32> to vector<92x10xf32>
    %c70 = arith.constant 70 : index
    %c0_26 = arith.constant 0 : index
    %47 = vector.load %arg5[%c70, %c0_26] : memref<250x10xf32, #tpu.memory_space<vmem>>, vector<10x10xf32>
    %cst_27 = arith.constant dense<0.000000e+00> : vector<92x10xf32>
    %48 = tpu.matmul %46, %47, %cst_27 {dimension_numbers = #tpu.dot_dimension_numbers<[1], [0], [0], [1], [0, 0, 1, 1], [], []>} : vector<92x10xf32>, vector<10x10xf32>, vector<92x10xf32> -> vector<92x10xf32>
    %49 = arith.addf %45, %48 : vector<92x10xf32>
    %50 = vector.extract_strided_slice %16 {offsets = [15, 0], sizes = [92, 10], strides = [1, 1]} : vector<144x10xf32> to vector<92x10xf32>
    %c80 = arith.constant 80 : index
    %c0_28 = arith.constant 0 : index
    %51 = vector.load %arg5[%c80, %c0_28] : memref<250x10xf32, #tpu.memory_space<vmem>>, vector<10x10xf32>
    %cst_29 = arith.constant dense<0.000000e+00> : vector<92x10xf32>
    %52 = tpu.matmul %50, %51, %cst_29 {dimension_numbers = #tpu.dot_dimension_numbers<[1], [0], [0], [1], [0, 0, 1, 1], [], []>} : vector<92x10xf32>, vector<10x10xf32>, vector<92x10xf32> -> vector<92x10xf32>
    %53 = arith.addf %49, %52 : vector<92x10xf32>
    %54 = vector.extract_strided_slice %16 {offsets = [16, 0], sizes = [92, 10], strides = [1, 1]} : vector<144x10xf32> to vector<92x10xf32>
    %c90 = arith.constant 90 : index
    %c0_30 = arith.constant 0 : index
    %55 = vector.load %arg5[%c90, %c0_30] : memref<250x10xf32, #tpu.memory_space<vmem>>, vector<10x10xf32>
    %cst_31 = arith.constant dense<0.000000e+00> : vector<92x10xf32>
    %56 = tpu.matmul %54, %55, %cst_31 {dimension_numbers = #tpu.dot_dimension_numbers<[1], [0], [0], [1], [0, 0, 1, 1], [], []>} : vector<92x10xf32>, vector<10x10xf32>, vector<92x10xf32> -> vector<92x10xf32>
    %57 = arith.addf %53, %56 : vector<92x10xf32>
    %58 = vector.extract_strided_slice %16 {offsets = [24, 0], sizes = [92, 10], strides = [1, 1]} : vector<144x10xf32> to vector<92x10xf32>
    %c100 = arith.constant 100 : index
    %c0_32 = arith.constant 0 : index
    %59 = vector.load %arg5[%c100, %c0_32] : memref<250x10xf32, #tpu.memory_space<vmem>>, vector<10x10xf32>
    %cst_33 = arith.constant dense<0.000000e+00> : vector<92x10xf32>
    %60 = tpu.matmul %58, %59, %cst_33 {dimension_numbers = #tpu.dot_dimension_numbers<[1], [0], [0], [1], [0, 0, 1, 1], [], []>} : vector<92x10xf32>, vector<10x10xf32>, vector<92x10xf32> -> vector<92x10xf32>
    %61 = arith.addf %57, %60 : vector<92x10xf32>
    %62 = vector.extract_strided_slice %16 {offsets = [25, 0], sizes = [92, 10], strides = [1, 1]} : vector<144x10xf32> to vector<92x10xf32>
    %c110 = arith.constant 110 : index
    %c0_34 = arith.constant 0 : index
    %63 = vector.load %arg5[%c110, %c0_34] : memref<250x10xf32, #tpu.memory_space<vmem>>, vector<10x10xf32>
    %cst_35 = arith.constant dense<0.000000e+00> : vector<92x10xf32>
    %64 = tpu.matmul %62, %63, %cst_35 {dimension_numbers = #tpu.dot_dimension_numbers<[1], [0], [0], [1], [0, 0, 1, 1], [], []>} : vector<92x10xf32>, vector<10x10xf32>, vector<92x10xf32> -> vector<92x10xf32>
    %65 = arith.addf %61, %64 : vector<92x10xf32>
    %66 = vector.extract_strided_slice %16 {offsets = [26, 0], sizes = [92, 10], strides = [1, 1]} : vector<144x10xf32> to vector<92x10xf32>
    %c120 = arith.constant 120 : index
    %c0_36 = arith.constant 0 : index
    %67 = vector.load %arg5[%c120, %c0_36] : memref<250x10xf32, #tpu.memory_space<vmem>>, vector<10x10xf32>
    %cst_37 = arith.constant dense<0.000000e+00> : vector<92x10xf32>
    %68 = tpu.matmul %66, %67, %cst_37 {dimension_numbers = #tpu.dot_dimension_numbers<[1], [0], [0], [1], [0, 0, 1, 1], [], []>} : vector<92x10xf32>, vector<10x10xf32>, vector<92x10xf32> -> vector<92x10xf32>
    %69 = arith.addf %65, %68 : vector<92x10xf32>
    %70 = vector.extract_strided_slice %16 {offsets = [27, 0], sizes = [92, 10], strides = [1, 1]} : vector<144x10xf32> to vector<92x10xf32>
    %c130 = arith.constant 130 : index
    %c0_38 = arith.constant 0 : index
    %71 = vector.load %arg5[%c130, %c0_38] : memref<250x10xf32, #tpu.memory_space<vmem>>, vector<10x10xf32>
    %cst_39 = arith.constant dense<0.000000e+00> : vector<92x10xf32>
    %72 = tpu.matmul %70, %71, %cst_39 {dimension_numbers = #tpu.dot_dimension_numbers<[1], [0], [0], [1], [0, 0, 1, 1], [], []>} : vector<92x10xf32>, vector<10x10xf32>, vector<92x10xf32> -> vector<92x10xf32>
    %73 = arith.addf %69, %72 : vector<92x10xf32>
    %74 = vector.extract_strided_slice %16 {offsets = [28, 0], sizes = [92, 10], strides = [1, 1]} : vector<144x10xf32> to vector<92x10xf32>
    %c140 = arith.constant 140 : index
    %c0_40 = arith.constant 0 : index
    %75 = vector.load %arg5[%c140, %c0_40] : memref<250x10xf32, #tpu.memory_space<vmem>>, vector<10x10xf32>
    %cst_41 = arith.constant dense<0.000000e+00> : vector<92x10xf32>
    %76 = tpu.matmul %74, %75, %cst_41 {dimension_numbers = #tpu.dot_dimension_numbers<[1], [0], [0], [1], [0, 0, 1, 1], [], []>} : vector<92x10xf32>, vector<10x10xf32>, vector<92x10xf32> -> vector<92x10xf32>
    %77 = arith.addf %73, %76 : vector<92x10xf32>
    %78 = vector.extract_strided_slice %16 {offsets = [36, 0], sizes = [92, 10], strides = [1, 1]} : vector<144x10xf32> to vector<92x10xf32>
    %c150 = arith.constant 150 : index
    %c0_42 = arith.constant 0 : index
    %79 = vector.load %arg5[%c150, %c0_42] : memref<250x10xf32, #tpu.memory_space<vmem>>, vector<10x10xf32>
    %cst_43 = arith.constant dense<0.000000e+00> : vector<92x10xf32>
    %80 = tpu.matmul %78, %79, %cst_43 {dimension_numbers = #tpu.dot_dimension_numbers<[1], [0], [0], [1], [0, 0, 1, 1], [], []>} : vector<92x10xf32>, vector<10x10xf32>, vector<92x10xf32> -> vector<92x10xf32>
    %81 = arith.addf %77, %80 : vector<92x10xf32>
    %82 = vector.extract_strided_slice %16 {offsets = [37, 0], sizes = [92, 10], strides = [1, 1]} : vector<144x10xf32> to vector<92x10xf32>
    %c160 = arith.constant 160 : index
    %c0_44 = arith.constant 0 : index
    %83 = vector.load %arg5[%c160, %c0_44] : memref<250x10xf32, #tpu.memory_space<vmem>>, vector<10x10xf32>
    %cst_45 = arith.constant dense<0.000000e+00> : vector<92x10xf32>
    %84 = tpu.matmul %82, %83, %cst_45 {dimension_numbers = #tpu.dot_dimension_numbers<[1], [0], [0], [1], [0, 0, 1, 1], [], []>} : vector<92x10xf32>, vector<10x10xf32>, vector<92x10xf32> -> vector<92x10xf32>
    %85 = arith.addf %81, %84 : vector<92x10xf32>
    %86 = vector.extract_strided_slice %16 {offsets = [38, 0], sizes = [92, 10], strides = [1, 1]} : vector<144x10xf32> to vector<92x10xf32>
    %c170 = arith.constant 170 : index
    %c0_46 = arith.constant 0 : index
    %87 = vector.load %arg5[%c170, %c0_46] : memref<250x10xf32, #tpu.memory_space<vmem>>, vector<10x10xf32>
    %cst_47 = arith.constant dense<0.000000e+00> : vector<92x10xf32>
    %88 = tpu.matmul %86, %87, %cst_47 {dimension_numbers = #tpu.dot_dimension_numbers<[1], [0], [0], [1], [0, 0, 1, 1], [], []>} : vector<92x10xf32>, vector<10x10xf32>, vector<92x10xf32> -> vector<92x10xf32>
    %89 = arith.addf %85, %88 : vector<92x10xf32>
    %90 = vector.extract_strided_slice %16 {offsets = [39, 0], sizes = [92, 10], strides = [1, 1]} : vector<144x10xf32> to vector<92x10xf32>
    %c180 = arith.constant 180 : index
    %c0_48 = arith.constant 0 : index
    %91 = vector.load %arg5[%c180, %c0_48] : memref<250x10xf32, #tpu.memory_space<vmem>>, vector<10x10xf32>
    %cst_49 = arith.constant dense<0.000000e+00> : vector<92x10xf32>
    %92 = tpu.matmul %90, %91, %cst_49 {dimension_numbers = #tpu.dot_dimension_numbers<[1], [0], [0], [1], [0, 0, 1, 1], [], []>} : vector<92x10xf32>, vector<10x10xf32>, vector<92x10xf32> -> vector<92x10xf32>
    %93 = arith.addf %89, %92 : vector<92x10xf32>
    %94 = vector.extract_strided_slice %16 {offsets = [40, 0], sizes = [92, 10], strides = [1, 1]} : vector<144x10xf32> to vector<92x10xf32>
    %c190 = arith.constant 190 : index
    %c0_50 = arith.constant 0 : index
    %95 = vector.load %arg5[%c190, %c0_50] : memref<250x10xf32, #tpu.memory_space<vmem>>, vector<10x10xf32>
    %cst_51 = arith.constant dense<0.000000e+00> : vector<92x10xf32>
    %96 = tpu.matmul %94, %95, %cst_51 {dimension_numbers = #tpu.dot_dimension_numbers<[1], [0], [0], [1], [0, 0, 1, 1], [], []>} : vector<92x10xf32>, vector<10x10xf32>, vector<92x10xf32> -> vector<92x10xf32>
    %97 = arith.addf %93, %96 : vector<92x10xf32>
    %98 = vector.extract_strided_slice %16 {offsets = [48, 0], sizes = [92, 10], strides = [1, 1]} : vector<144x10xf32> to vector<92x10xf32>
    %c200 = arith.constant 200 : index
    %c0_52 = arith.constant 0 : index
    %99 = vector.load %arg5[%c200, %c0_52] : memref<250x10xf32, #tpu.memory_space<vmem>>, vector<10x10xf32>
    %cst_53 = arith.constant dense<0.000000e+00> : vector<92x10xf32>
    %100 = tpu.matmul %98, %99, %cst_53 {dimension_numbers = #tpu.dot_dimension_numbers<[1], [0], [0], [1], [0, 0, 1, 1], [], []>} : vector<92x10xf32>, vector<10x10xf32>, vector<92x10xf32> -> vector<92x10xf32>
    %101 = arith.addf %97, %100 : vector<92x10xf32>
    %102 = vector.extract_strided_slice %16 {offsets = [49, 0], sizes = [92, 10], strides = [1, 1]} : vector<144x10xf32> to vector<92x10xf32>
    %c210 = arith.constant 210 : index
    %c0_54 = arith.constant 0 : index
    %103 = vector.load %arg5[%c210, %c0_54] : memref<250x10xf32, #tpu.memory_space<vmem>>, vector<10x10xf32>
    %cst_55 = arith.constant dense<0.000000e+00> : vector<92x10xf32>
    %104 = tpu.matmul %102, %103, %cst_55 {dimension_numbers = #tpu.dot_dimension_numbers<[1], [0], [0], [1], [0, 0, 1, 1], [], []>} : vector<92x10xf32>, vector<10x10xf32>, vector<92x10xf32> -> vector<92x10xf32>
    %105 = arith.addf %101, %104 : vector<92x10xf32>
    %106 = vector.extract_strided_slice %16 {offsets = [50, 0], sizes = [92, 10], strides = [1, 1]} : vector<144x10xf32> to vector<92x10xf32>
    %c220 = arith.constant 220 : index
    %c0_56 = arith.constant 0 : index
    %107 = vector.load %arg5[%c220, %c0_56] : memref<250x10xf32, #tpu.memory_space<vmem>>, vector<10x10xf32>
    %cst_57 = arith.constant dense<0.000000e+00> : vector<92x10xf32>
    %108 = tpu.matmul %106, %107, %cst_57 {dimension_numbers = #tpu.dot_dimension_numbers<[1], [0], [0], [1], [0, 0, 1, 1], [], []>} : vector<92x10xf32>, vector<10x10xf32>, vector<92x10xf32> -> vector<92x10xf32>
    %109 = arith.addf %105, %108 : vector<92x10xf32>
    %110 = vector.extract_strided_slice %16 {offsets = [51, 0], sizes = [92, 10], strides = [1, 1]} : vector<144x10xf32> to vector<92x10xf32>
    %c230 = arith.constant 230 : index
    %c0_58 = arith.constant 0 : index
    %111 = vector.load %arg5[%c230, %c0_58] : memref<250x10xf32, #tpu.memory_space<vmem>>, vector<10x10xf32>
    %cst_59 = arith.constant dense<0.000000e+00> : vector<92x10xf32>
    %112 = tpu.matmul %110, %111, %cst_59 {dimension_numbers = #tpu.dot_dimension_numbers<[1], [0], [0], [1], [0, 0, 1, 1], [], []>} : vector<92x10xf32>, vector<10x10xf32>, vector<92x10xf32> -> vector<92x10xf32>
    %113 = arith.addf %109, %112 : vector<92x10xf32>
    %114 = vector.extract_strided_slice %16 {offsets = [52, 0], sizes = [92, 10], strides = [1, 1]} : vector<144x10xf32> to vector<92x10xf32>
    %c240 = arith.constant 240 : index
    %c0_60 = arith.constant 0 : index
    %115 = vector.load %arg5[%c240, %c0_60] : memref<250x10xf32, #tpu.memory_space<vmem>>, vector<10x10xf32>
    %cst_61 = arith.constant dense<0.000000e+00> : vector<92x10xf32>
    %116 = tpu.matmul %114, %115, %cst_61 {dimension_numbers = #tpu.dot_dimension_numbers<[1], [0], [0], [1], [0, 0, 1, 1], [], []>} : vector<92x10xf32>, vector<10x10xf32>, vector<92x10xf32> -> vector<92x10xf32>
    %117 = arith.addf %113, %116 : vector<92x10xf32>
    %c0_62 = arith.constant 0 : index
    %c0_63 = arith.constant 0 : index
    %118 = vector.load %arg6[%c0_62, %c0_63] : memref<1x10xf32, #tpu.memory_space<vmem>>, vector<1x10xf32>
    %119 = vector.broadcast %118 : vector<1x10xf32> to vector<92x10xf32>
    %120 = arith.addf %117, %119 : vector<92x10xf32>
    %cst_64 = arith.constant 0.000000e+00 : f32
    %121 = vector.broadcast %cst_64 : f32 to vector<92x10xf32>
    %122 = arith.maximumf %120, %121 : vector<92x10xf32>
    %123 = vector.extract_strided_slice %122 {offsets = [0, 0], sizes = [91, 10], strides = [1, 1]} : vector<92x10xf32> to vector<91x10xf32>
    %124 = vector.extract_strided_slice %122 {offsets = [1, 0], sizes = [91, 10], strides = [1, 1]} : vector<92x10xf32> to vector<91x10xf32>
    %125 = arith.maximumf %123, %124 : vector<91x10xf32>
    %126 = vector.extract_strided_slice %125 {offsets = [0, 0], sizes = [79, 10], strides = [1, 1]} : vector<91x10xf32> to vector<79x10xf32>
    %127 = vector.extract_strided_slice %125 {offsets = [12, 0], sizes = [79, 10], strides = [1, 1]} : vector<91x10xf32> to vector<79x10xf32>
    %128 = arith.maximumf %126, %127 : vector<79x10xf32>
    %c0_65 = arith.constant 0 : index
    %c0_66 = arith.constant 0 : index
    %129 = vector.load %arg8[%c0_65, %c0_66] : memref<16x79xf32, #tpu.memory_space<vmem>>, vector<16x79xf32>
    %cst_67 = arith.constant dense<0.000000e+00> : vector<16x10xf32>
    %130 = tpu.matmul %129, %128, %cst_67 {dimension_numbers = #tpu.dot_dimension_numbers<[1], [0], [0], [1], [0, 0, 1, 1], [], []>} : vector<16x79xf32>, vector<79x10xf32>, vector<16x10xf32> -> vector<16x10xf32>
    %c0_68 = arith.constant 0 : index
    %c0_69 = arith.constant 0 : index
    %c0_70 = arith.constant 0 : index
    %131 = vector.load %arg2[%c0_68, %c0_69, %c0_70] : memref<1x1x3xf32, #tpu.memory_space<vmem>>, vector<1x1x3xf32>
    %132 = vector.shape_cast %131 : vector<1x1x3xf32> to vector<1x3xf32>
    %c0_71 = arith.constant 0 : index
    %c0_72 = arith.constant 0 : index
    %133 = vector.load %arg9[%c0_71, %c0_72] : memref<3x64xf32, #tpu.memory_space<vmem>>, vector<3x64xf32>
    %cst_73 = arith.constant dense<0.000000e+00> : vector<1x64xf32>
    %134 = tpu.matmul %132, %133, %cst_73 {dimension_numbers = #tpu.dot_dimension_numbers<[1], [0], [0], [1], [0, 0, 1, 1], [], []>} : vector<1x3xf32>, vector<3x64xf32>, vector<1x64xf32> -> vector<1x64xf32>
    %135 = vector.extract_strided_slice %130 {offsets = [0, 0], sizes = [1, 10], strides = [1, 1]} : vector<16x10xf32> to vector<1x10xf32>
    %c0_74 = arith.constant 0 : index
    %c0_75 = arith.constant 0 : index
    %c0_76 = arith.constant 0 : index
    %136 = vector.load %arg10[%c0_74, %c0_75, %c0_76] : memref<16x10x64xf32, #tpu.memory_space<vmem>>, vector<1x10x64xf32>
    %137 = vector.shape_cast %136 : vector<1x10x64xf32> to vector<10x64xf32>
    %cst_77 = arith.constant dense<0.000000e+00> : vector<1x64xf32>
    %138 = tpu.matmul %135, %137, %cst_77 {dimension_numbers = #tpu.dot_dimension_numbers<[1], [0], [0], [1], [0, 0, 1, 1], [], []>} : vector<1x10xf32>, vector<10x64xf32>, vector<1x64xf32> -> vector<1x64xf32>
    %139 = arith.addf %134, %138 : vector<1x64xf32>
    %140 = vector.extract_strided_slice %130 {offsets = [1, 0], sizes = [1, 10], strides = [1, 1]} : vector<16x10xf32> to vector<1x10xf32>
    %c1 = arith.constant 1 : index
    %c0_78 = arith.constant 0 : index
    %c0_79 = arith.constant 0 : index
    %141 = vector.load %arg10[%c1, %c0_78, %c0_79] : memref<16x10x64xf32, #tpu.memory_space<vmem>>, vector<1x10x64xf32>
    %142 = vector.shape_cast %141 : vector<1x10x64xf32> to vector<10x64xf32>
    %cst_80 = arith.constant dense<0.000000e+00> : vector<1x64xf32>
    %143 = tpu.matmul %140, %142, %cst_80 {dimension_numbers = #tpu.dot_dimension_numbers<[1], [0], [0], [1], [0, 0, 1, 1], [], []>} : vector<1x10xf32>, vector<10x64xf32>, vector<1x64xf32> -> vector<1x64xf32>
    %144 = arith.addf %139, %143 : vector<1x64xf32>
    %145 = vector.extract_strided_slice %130 {offsets = [2, 0], sizes = [1, 10], strides = [1, 1]} : vector<16x10xf32> to vector<1x10xf32>
    %c2 = arith.constant 2 : index
    %c0_81 = arith.constant 0 : index
    %c0_82 = arith.constant 0 : index
    %146 = vector.load %arg10[%c2, %c0_81, %c0_82] : memref<16x10x64xf32, #tpu.memory_space<vmem>>, vector<1x10x64xf32>
    %147 = vector.shape_cast %146 : vector<1x10x64xf32> to vector<10x64xf32>
    %cst_83 = arith.constant dense<0.000000e+00> : vector<1x64xf32>
    %148 = tpu.matmul %145, %147, %cst_83 {dimension_numbers = #tpu.dot_dimension_numbers<[1], [0], [0], [1], [0, 0, 1, 1], [], []>} : vector<1x10xf32>, vector<10x64xf32>, vector<1x64xf32> -> vector<1x64xf32>
    %149 = arith.addf %144, %148 : vector<1x64xf32>
    %150 = vector.extract_strided_slice %130 {offsets = [3, 0], sizes = [1, 10], strides = [1, 1]} : vector<16x10xf32> to vector<1x10xf32>
    %c3 = arith.constant 3 : index
    %c0_84 = arith.constant 0 : index
    %c0_85 = arith.constant 0 : index
    %151 = vector.load %arg10[%c3, %c0_84, %c0_85] : memref<16x10x64xf32, #tpu.memory_space<vmem>>, vector<1x10x64xf32>
    %152 = vector.shape_cast %151 : vector<1x10x64xf32> to vector<10x64xf32>
    %cst_86 = arith.constant dense<0.000000e+00> : vector<1x64xf32>
    %153 = tpu.matmul %150, %152, %cst_86 {dimension_numbers = #tpu.dot_dimension_numbers<[1], [0], [0], [1], [0, 0, 1, 1], [], []>} : vector<1x10xf32>, vector<10x64xf32>, vector<1x64xf32> -> vector<1x64xf32>
    %154 = arith.addf %149, %153 : vector<1x64xf32>
    %155 = vector.extract_strided_slice %130 {offsets = [4, 0], sizes = [1, 10], strides = [1, 1]} : vector<16x10xf32> to vector<1x10xf32>
    %c4 = arith.constant 4 : index
    %c0_87 = arith.constant 0 : index
    %c0_88 = arith.constant 0 : index
    %156 = vector.load %arg10[%c4, %c0_87, %c0_88] : memref<16x10x64xf32, #tpu.memory_space<vmem>>, vector<1x10x64xf32>
    %157 = vector.shape_cast %156 : vector<1x10x64xf32> to vector<10x64xf32>
    %cst_89 = arith.constant dense<0.000000e+00> : vector<1x64xf32>
    %158 = tpu.matmul %155, %157, %cst_89 {dimension_numbers = #tpu.dot_dimension_numbers<[1], [0], [0], [1], [0, 0, 1, 1], [], []>} : vector<1x10xf32>, vector<10x64xf32>, vector<1x64xf32> -> vector<1x64xf32>
    %159 = arith.addf %154, %158 : vector<1x64xf32>
    %160 = vector.extract_strided_slice %130 {offsets = [5, 0], sizes = [1, 10], strides = [1, 1]} : vector<16x10xf32> to vector<1x10xf32>
    %c5 = arith.constant 5 : index
    %c0_90 = arith.constant 0 : index
    %c0_91 = arith.constant 0 : index
    %161 = vector.load %arg10[%c5, %c0_90, %c0_91] : memref<16x10x64xf32, #tpu.memory_space<vmem>>, vector<1x10x64xf32>
    %162 = vector.shape_cast %161 : vector<1x10x64xf32> to vector<10x64xf32>
    %cst_92 = arith.constant dense<0.000000e+00> : vector<1x64xf32>
    %163 = tpu.matmul %160, %162, %cst_92 {dimension_numbers = #tpu.dot_dimension_numbers<[1], [0], [0], [1], [0, 0, 1, 1], [], []>} : vector<1x10xf32>, vector<10x64xf32>, vector<1x64xf32> -> vector<1x64xf32>
    %164 = arith.addf %159, %163 : vector<1x64xf32>
    %165 = vector.extract_strided_slice %130 {offsets = [6, 0], sizes = [1, 10], strides = [1, 1]} : vector<16x10xf32> to vector<1x10xf32>
    %c6 = arith.constant 6 : index
    %c0_93 = arith.constant 0 : index
    %c0_94 = arith.constant 0 : index
    %166 = vector.load %arg10[%c6, %c0_93, %c0_94] : memref<16x10x64xf32, #tpu.memory_space<vmem>>, vector<1x10x64xf32>
    %167 = vector.shape_cast %166 : vector<1x10x64xf32> to vector<10x64xf32>
    %cst_95 = arith.constant dense<0.000000e+00> : vector<1x64xf32>
    %168 = tpu.matmul %165, %167, %cst_95 {dimension_numbers = #tpu.dot_dimension_numbers<[1], [0], [0], [1], [0, 0, 1, 1], [], []>} : vector<1x10xf32>, vector<10x64xf32>, vector<1x64xf32> -> vector<1x64xf32>
    %169 = arith.addf %164, %168 : vector<1x64xf32>
    %170 = vector.extract_strided_slice %130 {offsets = [7, 0], sizes = [1, 10], strides = [1, 1]} : vector<16x10xf32> to vector<1x10xf32>
    %c7 = arith.constant 7 : index
    %c0_96 = arith.constant 0 : index
    %c0_97 = arith.constant 0 : index
    %171 = vector.load %arg10[%c7, %c0_96, %c0_97] : memref<16x10x64xf32, #tpu.memory_space<vmem>>, vector<1x10x64xf32>
    %172 = vector.shape_cast %171 : vector<1x10x64xf32> to vector<10x64xf32>
    %cst_98 = arith.constant dense<0.000000e+00> : vector<1x64xf32>
    %173 = tpu.matmul %170, %172, %cst_98 {dimension_numbers = #tpu.dot_dimension_numbers<[1], [0], [0], [1], [0, 0, 1, 1], [], []>} : vector<1x10xf32>, vector<10x64xf32>, vector<1x64xf32> -> vector<1x64xf32>
    %174 = arith.addf %169, %173 : vector<1x64xf32>
    %175 = vector.extract_strided_slice %130 {offsets = [8, 0], sizes = [1, 10], strides = [1, 1]} : vector<16x10xf32> to vector<1x10xf32>
    %c8 = arith.constant 8 : index
    %c0_99 = arith.constant 0 : index
    %c0_100 = arith.constant 0 : index
    %176 = vector.load %arg10[%c8, %c0_99, %c0_100] : memref<16x10x64xf32, #tpu.memory_space<vmem>>, vector<1x10x64xf32>
    %177 = vector.shape_cast %176 : vector<1x10x64xf32> to vector<10x64xf32>
    %cst_101 = arith.constant dense<0.000000e+00> : vector<1x64xf32>
    %178 = tpu.matmul %175, %177, %cst_101 {dimension_numbers = #tpu.dot_dimension_numbers<[1], [0], [0], [1], [0, 0, 1, 1], [], []>} : vector<1x10xf32>, vector<10x64xf32>, vector<1x64xf32> -> vector<1x64xf32>
    %179 = arith.addf %174, %178 : vector<1x64xf32>
    %180 = vector.extract_strided_slice %130 {offsets = [9, 0], sizes = [1, 10], strides = [1, 1]} : vector<16x10xf32> to vector<1x10xf32>
    %c9 = arith.constant 9 : index
    %c0_102 = arith.constant 0 : index
    %c0_103 = arith.constant 0 : index
    %181 = vector.load %arg10[%c9, %c0_102, %c0_103] : memref<16x10x64xf32, #tpu.memory_space<vmem>>, vector<1x10x64xf32>
    %182 = vector.shape_cast %181 : vector<1x10x64xf32> to vector<10x64xf32>
    %cst_104 = arith.constant dense<0.000000e+00> : vector<1x64xf32>
    %183 = tpu.matmul %180, %182, %cst_104 {dimension_numbers = #tpu.dot_dimension_numbers<[1], [0], [0], [1], [0, 0, 1, 1], [], []>} : vector<1x10xf32>, vector<10x64xf32>, vector<1x64xf32> -> vector<1x64xf32>
    %184 = arith.addf %179, %183 : vector<1x64xf32>
    %185 = vector.extract_strided_slice %130 {offsets = [10, 0], sizes = [1, 10], strides = [1, 1]} : vector<16x10xf32> to vector<1x10xf32>
    %c10_105 = arith.constant 10 : index
    %c0_106 = arith.constant 0 : index
    %c0_107 = arith.constant 0 : index
    %186 = vector.load %arg10[%c10_105, %c0_106, %c0_107] : memref<16x10x64xf32, #tpu.memory_space<vmem>>, vector<1x10x64xf32>
    %187 = vector.shape_cast %186 : vector<1x10x64xf32> to vector<10x64xf32>
    %cst_108 = arith.constant dense<0.000000e+00> : vector<1x64xf32>
    %188 = tpu.matmul %185, %187, %cst_108 {dimension_numbers = #tpu.dot_dimension_numbers<[1], [0], [0], [1], [0, 0, 1, 1], [], []>} : vector<1x10xf32>, vector<10x64xf32>, vector<1x64xf32> -> vector<1x64xf32>
    %189 = arith.addf %184, %188 : vector<1x64xf32>
    %190 = vector.extract_strided_slice %130 {offsets = [11, 0], sizes = [1, 10], strides = [1, 1]} : vector<16x10xf32> to vector<1x10xf32>
    %c11 = arith.constant 11 : index
    %c0_109 = arith.constant 0 : index
    %c0_110 = arith.constant 0 : index
    %191 = vector.load %arg10[%c11, %c0_109, %c0_110] : memref<16x10x64xf32, #tpu.memory_space<vmem>>, vector<1x10x64xf32>
    %192 = vector.shape_cast %191 : vector<1x10x64xf32> to vector<10x64xf32>
    %cst_111 = arith.constant dense<0.000000e+00> : vector<1x64xf32>
    %193 = tpu.matmul %190, %192, %cst_111 {dimension_numbers = #tpu.dot_dimension_numbers<[1], [0], [0], [1], [0, 0, 1, 1], [], []>} : vector<1x10xf32>, vector<10x64xf32>, vector<1x64xf32> -> vector<1x64xf32>
    %194 = arith.addf %189, %193 : vector<1x64xf32>
    %195 = vector.extract_strided_slice %130 {offsets = [12, 0], sizes = [1, 10], strides = [1, 1]} : vector<16x10xf32> to vector<1x10xf32>
    %c12 = arith.constant 12 : index
    %c0_112 = arith.constant 0 : index
    %c0_113 = arith.constant 0 : index
    %196 = vector.load %arg10[%c12, %c0_112, %c0_113] : memref<16x10x64xf32, #tpu.memory_space<vmem>>, vector<1x10x64xf32>
    %197 = vector.shape_cast %196 : vector<1x10x64xf32> to vector<10x64xf32>
    %cst_114 = arith.constant dense<0.000000e+00> : vector<1x64xf32>
    %198 = tpu.matmul %195, %197, %cst_114 {dimension_numbers = #tpu.dot_dimension_numbers<[1], [0], [0], [1], [0, 0, 1, 1], [], []>} : vector<1x10xf32>, vector<10x64xf32>, vector<1x64xf32> -> vector<1x64xf32>
    %199 = arith.addf %194, %198 : vector<1x64xf32>
    %200 = vector.extract_strided_slice %130 {offsets = [13, 0], sizes = [1, 10], strides = [1, 1]} : vector<16x10xf32> to vector<1x10xf32>
    %c13 = arith.constant 13 : index
    %c0_115 = arith.constant 0 : index
    %c0_116 = arith.constant 0 : index
    %201 = vector.load %arg10[%c13, %c0_115, %c0_116] : memref<16x10x64xf32, #tpu.memory_space<vmem>>, vector<1x10x64xf32>
    %202 = vector.shape_cast %201 : vector<1x10x64xf32> to vector<10x64xf32>
    %cst_117 = arith.constant dense<0.000000e+00> : vector<1x64xf32>
    %203 = tpu.matmul %200, %202, %cst_117 {dimension_numbers = #tpu.dot_dimension_numbers<[1], [0], [0], [1], [0, 0, 1, 1], [], []>} : vector<1x10xf32>, vector<10x64xf32>, vector<1x64xf32> -> vector<1x64xf32>
    %204 = arith.addf %199, %203 : vector<1x64xf32>
    %205 = vector.extract_strided_slice %130 {offsets = [14, 0], sizes = [1, 10], strides = [1, 1]} : vector<16x10xf32> to vector<1x10xf32>
    %c14 = arith.constant 14 : index
    %c0_118 = arith.constant 0 : index
    %c0_119 = arith.constant 0 : index
    %206 = vector.load %arg10[%c14, %c0_118, %c0_119] : memref<16x10x64xf32, #tpu.memory_space<vmem>>, vector<1x10x64xf32>
    %207 = vector.shape_cast %206 : vector<1x10x64xf32> to vector<10x64xf32>
    %cst_120 = arith.constant dense<0.000000e+00> : vector<1x64xf32>
    %208 = tpu.matmul %205, %207, %cst_120 {dimension_numbers = #tpu.dot_dimension_numbers<[1], [0], [0], [1], [0, 0, 1, 1], [], []>} : vector<1x10xf32>, vector<10x64xf32>, vector<1x64xf32> -> vector<1x64xf32>
    %209 = arith.addf %204, %208 : vector<1x64xf32>
    %210 = vector.extract_strided_slice %130 {offsets = [15, 0], sizes = [1, 10], strides = [1, 1]} : vector<16x10xf32> to vector<1x10xf32>
    %c15 = arith.constant 15 : index
    %c0_121 = arith.constant 0 : index
    %c0_122 = arith.constant 0 : index
    %211 = vector.load %arg10[%c15, %c0_121, %c0_122] : memref<16x10x64xf32, #tpu.memory_space<vmem>>, vector<1x10x64xf32>
    %212 = vector.shape_cast %211 : vector<1x10x64xf32> to vector<10x64xf32>
    %cst_123 = arith.constant dense<0.000000e+00> : vector<1x64xf32>
    %213 = tpu.matmul %210, %212, %cst_123 {dimension_numbers = #tpu.dot_dimension_numbers<[1], [0], [0], [1], [0, 0, 1, 1], [], []>} : vector<1x10xf32>, vector<10x64xf32>, vector<1x64xf32> -> vector<1x64xf32>
    %214 = arith.addf %209, %213 : vector<1x64xf32>
    %c0_124 = arith.constant 0 : index
    %c0_125 = arith.constant 0 : index
    %215 = vector.load %arg11[%c0_124, %c0_125] : memref<1x64xf32, #tpu.memory_space<vmem>>, vector<1x64xf32>
    %216 = arith.addf %214, %215 : vector<1x64xf32>
    %217 = math.tanh %216 : vector<1x64xf32>
    %c0_126 = arith.constant 0 : index
    %c0_127 = arith.constant 0 : index
    %218 = vector.load %arg12[%c0_126, %c0_127] : memref<64x6xf32, #tpu.memory_space<vmem>>, vector<64x6xf32>
    %cst_128 = arith.constant dense<0.000000e+00> : vector<1x6xf32>
    %219 = tpu.matmul %217, %218, %cst_128 {dimension_numbers = #tpu.dot_dimension_numbers<[1], [0], [0], [1], [0, 0, 1, 1], [], []>} : vector<1x64xf32>, vector<64x6xf32>, vector<1x6xf32> -> vector<1x6xf32>
    %c0_129 = arith.constant 0 : index
    %c0_130 = arith.constant 0 : index
    %220 = vector.load %arg13[%c0_129, %c0_130] : memref<1x6xf32, #tpu.memory_space<vmem>>, vector<1x6xf32>
    %221 = arith.addf %219, %220 : vector<1x6xf32>
    %222 = tpu.iota {dimensions = array<i32: 1>} : vector<1x6xi32>
    %c2_i32 = arith.constant 2 : i32
    %223 = vector.broadcast %c2_i32 : i32 to vector<1x6xi32>
    %224 = arith.cmpi sge, %222, %223 : vector<1x6xi32>
    %c4_i32 = arith.constant 4 : i32
    %225 = vector.broadcast %c4_i32 : i32 to vector<1x6xi32>
    %226 = arith.cmpi slt, %222, %225 : vector<1x6xi32>
    %227 = arith.andi %224, %226 : vector<1x6xi1>
    %228 = arith.negf %221 : vector<1x6xf32>
    %229 = math.exp %228 : vector<1x6xf32>
    %cst_131 = arith.constant 1.000000e+00 : f32
    %230 = vector.broadcast %cst_131 : f32 to vector<1x6xf32>
    %231 = arith.addf %230, %229 : vector<1x6xf32>
    %232 = arith.divf %230, %231 : vector<1x6xf32>
    %cst_132 = arith.constant 1.000000e+00 : f32
    %233 = vector.broadcast %cst_132 : f32 to vector<1x6xf32>
    %234 = arith.mulf %232, %233 : vector<1x6xf32>
    %cst_133 = arith.constant 1.000000e-03 : f32
    %235 = vector.broadcast %cst_133 : f32 to vector<1x6xf32>
    %236 = arith.addf %234, %235 : vector<1x6xf32>
    %237 = arith.select %227, %236, %221 : vector<1x6xi1>, vector<1x6xf32>
    %c0_134 = arith.constant 0 : index
    %c0_135 = arith.constant 0 : index
    %c0_136 = arith.constant 0 : index
    %238 = vector.load %arg14[%c0_134, %c0_135, %c0_136] : memref<1x1x6xf32, #tpu.memory_space<vmem>>, vector<1x1x6xf32>
    %239 = vector.shape_cast %238 : vector<1x1x6xf32> to vector<1x6xf32>
    %240 = vector.shape_cast %237 : vector<1x6xf32> to vector<1x1x6xf32>
    tpu.vector_store %arg14[%c0_134, %c0_135, %c0_136], %240 {strides = array<i32>} : memref<1x1x6xf32, #tpu.memory_space<vmem>>, vector<1x1x6xf32>,
    return
  }
  func.func @transform_0(%arg0: i32) -> (i32, i32, i32) {
    %c0_i32 = arith.constant 0 : i32
    %c0_i32_0 = arith.constant 0 : i32
    %c0_i32_1 = arith.constant 0 : i32
    return %arg0, %c0_i32, %c0_i32_0 : i32, i32, i32
  }
  func.func @transform_1(%arg0: i32) -> (i32, i32, i32) {
    %c0_i32 = arith.constant 0 : i32
    %c0_i32_0 = arith.constant 0 : i32
    %c0_i32_1 = arith.constant 0 : i32
    return %arg0, %c0_i32, %c0_i32_0 : i32, i32, i32
  }
  func.func @transform_2(%arg0: i32) -> (i32, i32) {
    %c0_i32 = arith.constant 0 : i32
    %c0_i32_0 = arith.constant 0 : i32
    %c0_i32_1 = arith.constant 0 : i32
    return %c0_i32, %c0_i32_0 : i32, i32
  }
  func.func @transform_3(%arg0: i32) -> (i32, i32) {
    %c0_i32 = arith.constant 0 : i32
    %c0_i32_0 = arith.constant 0 : i32
    %c0_i32_1 = arith.constant 0 : i32
    return %c0_i32, %c0_i32_0 : i32, i32
  }
  func.func @transform_4(%arg0: i32) -> (i32, i32) {
    %c0_i32 = arith.constant 0 : i32
    %c0_i32_0 = arith.constant 0 : i32
    %c0_i32_1 = arith.constant 0 : i32
    return %c0_i32, %c0_i32_0 : i32, i32
  }
  func.func @transform_5(%arg0: i32) -> (i32, i32) {
    %c0_i32 = arith.constant 0 : i32
    %c0_i32_0 = arith.constant 0 : i32
    %c0_i32_1 = arith.constant 0 : i32
    return %c0_i32, %c0_i32_0 : i32, i32
  }
  func.func @transform_6(%arg0: i32) -> (i32, i32) {
    %c0_i32 = arith.constant 0 : i32
    %c0_i32_0 = arith.constant 0 : i32
    %c0_i32_1 = arith.constant 0 : i32
    return %c0_i32, %c0_i32_0 : i32, i32
  }
  func.func @transform_7(%arg0: i32) -> (i32, i32) {
    %c0_i32 = arith.constant 0 : i32
    %c0_i32_0 = arith.constant 0 : i32
    %c0_i32_1 = arith.constant 0 : i32
    return %c0_i32, %c0_i32_0 : i32, i32
  }
  func.func @transform_8(%arg0: i32) -> (i32, i32) {
    %c0_i32 = arith.constant 0 : i32
    %c0_i32_0 = arith.constant 0 : i32
    %c0_i32_1 = arith.constant 0 : i32
    return %c0_i32, %c0_i32_0 : i32, i32
  }
  func.func @transform_9(%arg0: i32) -> (i32, i32, i32) {
    %c0_i32 = arith.constant 0 : i32
    %c0_i32_0 = arith.constant 0 : i32
    %c0_i32_1 = arith.constant 0 : i32
    %c0_i32_2 = arith.constant 0 : i32
    return %c0_i32, %c0_i32_0, %c0_i32_1 : i32, i32, i32
  }
  func.func @transform_10(%arg0: i32) -> (i32, i32) {
    %c0_i32 = arith.constant 0 : i32
    %c0_i32_0 = arith.constant 0 : i32
    %c0_i32_1 = arith.constant 0 : i32
    return %c0_i32, %c0_i32_0 : i32, i32
  }
  func.func @transform_11(%arg0: i32) -> (i32, i32) {
    %c0_i32 = arith.constant 0 : i32
    %c0_i32_0 = arith.constant 0 : i32
    %c0_i32_1 = arith.constant 0 : i32
    return %c0_i32, %c0_i32_0 : i32, i32
  }
  func.func @transform_12(%arg0: i32) -> (i32, i32) {
    %c0_i32 = arith.constant 0 : i32
    %c0_i32_0 = arith.constant 0 : i32
    %c0_i32_1 = arith.constant 0 : i32
    return %c0_i32, %c0_i32_0 : i32, i32
  }
  func.func @transform_13(%arg0: i32) -> (i32, i32, i32) {
    %c0_i32 = arith.constant 0 : i32
    %c0_i32_0 = arith.constant 0 : i32
    %c0_i32_1 = arith.constant 0 : i32
    return %arg0, %c0_i32, %c0_i32_0 : i32, i32, i32
  }
}

</mosaic_0001>

<llo_original>
// kernel: policy_forward.1
$region0: #{policy_forward.1}
  #allocation0 [shape = 'u32[]', space=smem, size = 0x4, offset = 0x4, fixed_abs, tag = 'smem constant byte address 0x4 - core index']
  #allocation1 [shape = 'u32[72,128]{1,0:T(1,128)}', space=vmem, size = 0x9000, scoped, tag = 'internal scratch']
  %s0 = inlined_call_operand.vmem [shape: f32[2,576,25], index: 0, kind: input, shape index: {}]
  %s1 = inlined_call_operand.vmem [shape: f32[2,1,3], index: 1, kind: input, shape index: {}]
  %s2 = inlined_call_operand.vmem [shape: f32[25,10], index: 2, kind: input, shape index: {}]
  %s3 = inlined_call_operand.vmem [shape: f32[1,10], index: 3, kind: input, shape index: {}]
  %s4 = inlined_call_operand.vmem [shape: f32[250,10], index: 4, kind: input, shape index: {}]
  %s5 = inlined_call_operand.vmem [shape: f32[1,10], index: 5, kind: input, shape index: {}]
  %s6 = inlined_call_operand.vmem [shape: f32[144,551], index: 6, kind: input, shape index: {}]
  %s7 = inlined_call_operand.vmem [shape: f32[16,79], index: 7, kind: input, shape index: {}]
  %s8 = inlined_call_operand.vmem [shape: f32[3,64], index: 8, kind: input, shape index: {}]
  %s9 = inlined_call_operand.vmem [shape: f32[16,10,64], index: 9, kind: input, shape index: {}]
  %s10 = inlined_call_operand.vmem [shape: f32[1,64], index: 10, kind: input, shape index: {}]
  %s11 = inlined_call_operand.vmem [shape: f32[64,6], index: 11, kind: input, shape index: {}]
  %s12 = inlined_call_operand.vmem [shape: f32[1,6], index: 12, kind: input, shape index: {}]
  %s13 = inlined_call_operand.vmem [shape: f32[2,1,6], index: 13, kind: output, shape index: {}]
  %s14 = sld [smem:[#allocation0]]
  $region85: #{policy_forward.1} parent=0
    _
  %s16 = ssub.s32 1, %s14
  %s17 = scalar_select 0, %s16, %s14
  loop: start=0, step=1, limit=4
  $region2: #{policy_forward.1} parent=0 // loop_pre_header
    _
  $region3: #{policy_forward.1} parent=0 // loop_header
    %s19 = sphi 0, %s23
    %p20 = scmp.ge.s32.totalorder %s19, 4
    %s29 = sphi 0, %s31
    %s32 = sphi 0, %s29
    %s33 = sphi 0, %s32
    %s49 = sphi 0, %s33
    %s55 = sphi 0, %s57
    %s58 = sphi 0, %s55
    %s59 = sphi 0, %s58
    %s75 = sphi 0, %s59
    %s79 = sphi 0, %s79
    %s81 = sphi 0, %s79
    %s82 = sphi 0, %s81
    %s96 = sphi 0, %s82
    %s100 = sphi 0, %s100
    %s102 = sphi 0, %s100
    %s103 = sphi 0, %s102
    %s117 = sphi 0, %s103
    %s121 = sphi 0, %s121
    %s123 = sphi 0, %s121
    %s124 = sphi 0, %s123
    %s138 = sphi 0, %s124
    %s142 = sphi 0, %s142
    %s144 = sphi 0, %s142
    %s145 = sphi 0, %s144
    %s159 = sphi 0, %s145
    %s163 = sphi 0, %s163
    %s165 = sphi 0, %s163
    %s166 = sphi 0, %s165
    %s180 = sphi 0, %s166
    %s184 = sphi 0, %s184
    %s186 = sphi 0, %s184
    %s187 = sphi 0, %s186
    %s201 = sphi 0, %s187
    %s205 = sphi 0, %s205
    %s207 = sphi 0, %s205
    %s208 = sphi 0, %s207
    %s222 = sphi 0, %s208
    %s226 = sphi 0, %s226
    %s228 = sphi 0, %s226
    %s229 = sphi 0, %s228
    %s243 = sphi 0, %s229
    %s247 = sphi 0, %s247
    %s249 = sphi 0, %s247
    %s250 = sphi 0, %s249
    %s264 = sphi 0, %s250
    %s268 = sphi 0, %s268
    %s270 = sphi 0, %s268
    %s271 = sphi 0, %s270
    %s285 = sphi 0, %s271
    %s289 = sphi 0, %s289
    %s291 = sphi 0, %s289
    %s292 = sphi 0, %s291
    %s306 = sphi 0, %s292
    %s312 = sphi 0, %s314
    %s315 = sphi 0, %s312
    %s316 = sphi 0, %s315
    %s332 = sphi 0, %s316
  $region4: #{policy_forward.1} parent=0 // loop_header_branch
    %22 = sbr.rel (%p20) target = $region8
  $region5: #{policy_forward.1} parent=0 // loop_body
    %s24 = ssub.s32 %s19, 1
    %s25 = ssub.s32 %s19, 2
    %s26 = sadd.s32 %s19, 1
    %s27 = ssub.s32 %s19, %s26
    %p28 = scmp.eq.s32.totalorder %s27, 0
    %s30 = sadd.s32 %s29, 1
    %s31 = scalar_select %p28, %s29, %s30
    %p34 = pneg %p28
    %p35 = scmp.eq.s32.totalorder %s19, 1
    %p36 = por %p34, %p35
    %p37 = scmp.ne.s32.totalorder %s29, %s32
    %p38 = scmp.eq.s32.totalorder %s19, 0
    %p39 = por %p37, %p38
    %p40 = scmp.ne.s32.totalorder %s29, %s32
    %p41 = scmp.eq.s32.totalorder %s24, 1
    %p42 = por %p40, %p41
    %p43 = scmp.ne.s32.totalorder %s32, %s33
    %p44 = scmp.eq.s32.totalorder %s24, 0
    %p45 = por %p43, %p44
    %p46 = scmp.ne.s32.totalorder %s32, %s33
    %p47 = scmp.eq.s32.totalorder %s25, 1
    %p48 = por %p46, %p47
    %p50 = scmp.ne.s32.totalorder %s33, %s49
    %p51 = scmp.eq.s32.totalorder %s25, 0
    %p52 = por %p50, %p51
    %s53 = ssub.s32 %s19, %s26
    %p54 = scmp.eq.s32.totalorder %s53, 0
    %s56 = sadd.s32 %s55, 1
    %s57 = scalar_select %p54, %s55, %s56
    %p60 = pneg %p54
    %p61 = scmp.eq.s32.totalorder %s19, 1
    %p62 = por %p60, %p61
    %p63 = scmp.ne.s32.totalorder %s55, %s58
    %p64 = scmp.eq.s32.totalorder %s19, 0
    %p65 = por %p63, %p64
    %p66 = scmp.ne.s32.totalorder %s55, %s58
    %p67 = scmp.eq.s32.totalorder %s24, 1
    %p68 = por %p66, %p67
    %p69 = scmp.ne.s32.totalorder %s58, %s59
    %p70 = scmp.eq.s32.totalorder %s24, 0
    %p71 = por %p69, %p70
    %p72 = scmp.ne.s32.totalorder %s58, %s59
    %p73 = scmp.eq.s32.totalorder %s25, 1
    %p74 = por %p72, %p73
    %p76 = scmp.ne.s32.totalorder %s59, %s75
    %p77 = scmp.eq.s32.totalorder %s25, 0
    %p78 = por %p76, %p77
    %s80 = sadd.s32 %s79, 1
    %p83 = scmp.eq.s32.totalorder %s19, 1
    %p84 = scmp.ne.s32.totalorder %s79, %s81
    %p85 = scmp.eq.s32.totalorder %s19, 0
    %p86 = por %p84, %p85
    %p87 = scmp.ne.s32.totalorder %s79, %s81
    %p88 = scmp.eq.s32.totalorder %s24, 1
    %p89 = por %p87, %p88
    %p90 = scmp.ne.s32.totalorder %s81, %s82
    %p91 = scmp.eq.s32.totalorder %s24, 0
    %p92 = por %p90, %p91
    %p93 = scmp.ne.s32.totalorder %s81, %s82
    %p94 = scmp.eq.s32.totalorder %s25, 1
    %p95 = por %p93, %p94
    %p97 = scmp.ne.s32.totalorder %s82, %s96
    %p98 = scmp.eq.s32.totalorder %s25, 0
    %p99 = por %p97, %p98
    %s101 = sadd.s32 %s100, 1
    %p104 = scmp.eq.s32.totalorder %s19, 1
    %p105 = scmp.ne.s32.totalorder %s100, %s102
    %p106 = scmp.eq.s32.totalorder %s19, 0
    %p107 = por %p105, %p106
    %p108 = scmp.ne.s32.totalorder %s100, %s102
    %p109 = scmp.eq.s32.totalorder %s24, 1
    %p110 = por %p108, %p109
    %p111 = scmp.ne.s32.totalorder %s102, %s103
    %p112 = scmp.eq.s32.totalorder %s24, 0
    %p113 = por %p111, %p112
    %p114 = scmp.ne.s32.totalorder %s102, %s103
    %p115 = scmp.eq.s32.totalorder %s25, 1
    %p116 = por %p114, %p115
    %p118 = scmp.ne.s32.totalorder %s103, %s117
    %p119 = scmp.eq.s32.totalorder %s25, 0
    %p120 = por %p118, %p119
    %s122 = sadd.s32 %s121, 1
    %p125 = scmp.eq.s32.totalorder %s19, 1
    %p126 = scmp.ne.s32.totalorder %s121, %s123
    %p127 = scmp.eq.s32.totalorder %s19, 0
    %p128 = por %p126, %p127
    %p129 = scmp.ne.s32.totalorder %s121, %s123
    %p130 = scmp.eq.s32.totalorder %s24, 1
    %p131 = por %p129, %p130
    %p132 = scmp.ne.s32.totalorder %s123, %s124
    %p133 = scmp.eq.s32.totalorder %s24, 0
    %p134 = por %p132, %p133
    %p135 = scmp.ne.s32.totalorder %s123, %s124
    %p136 = scmp.eq.s32.totalorder %s25, 1
    %p137 = por %p135, %p136
    %p139 = scmp.ne.s32.totalorder %s124, %s138
    %p140 = scmp.eq.s32.totalorder %s25, 0
    %p141 = por %p139, %p140
    %s143 = sadd.s32 %s142, 1
    %p146 = scmp.eq.s32.totalorder %s19, 1
    %p147 = scmp.ne.s32.totalorder %s142, %s144
    %p148 = scmp.eq.s32.totalorder %s19, 0
    %p149 = por %p147, %p148
    %p150 = scmp.ne.s32.totalorder %s142, %s144
    %p151 = scmp.eq.s32.totalorder %s24, 1
    %p152 = por %p150, %p151
    %p153 = scmp.ne.s32.totalorder %s144, %s145
    %p154 = scmp.eq.s32.totalorder %s24, 0
    %p155 = por %p153, %p154
    %p156 = scmp.ne.s32.totalorder %s144, %s145
    %p157 = scmp.eq.s32.totalorder %s25, 1
    %p158 = por %p156, %p157
    %p160 = scmp.ne.s32.totalorder %s145, %s159
    %p161 = scmp.eq.s32.totalorder %s25, 0
    %p162 = por %p160, %p161
    %s164 = sadd.s32 %s163, 1
    %p167 = scmp.eq.s32.totalorder %s19, 1
    %p168 = scmp.ne.s32.totalorder %s163, %s165
    %p169 = scmp.eq.s32.totalorder %s19, 0
    %p170 = por %p168, %p169
    %p171 = scmp.ne.s32.totalorder %s163, %s165
    %p172 = scmp.eq.s32.totalorder %s24, 1
    %p173 = por %p171, %p172
    %p174 = scmp.ne.s32.totalorder %s165, %s166
    %p175 = scmp.eq.s32.totalorder %s24, 0
    %p176 = por %p174, %p175
    %p177 = scmp.ne.s32.totalorder %s165, %s166
    %p178 = scmp.eq.s32.totalorder %s25, 1
    %p179 = por %p177, %p178
    %p181 = scmp.ne.s32.totalorder %s166, %s180
    %p182 = scmp.eq.s32.totalorder %s25, 0
    %p183 = por %p181, %p182
    %s185 = sadd.s32 %s184, 1
    %p188 = scmp.eq.s32.totalorder %s19, 1
    %p189 = scmp.ne.s32.totalorder %s184, %s186
    %p190 = scmp.eq.s32.totalorder %s19, 0
    %p191 = por %p189, %p190
    %p192 = scmp.ne.s32.totalorder %s184, %s186
    %p193 = scmp.eq.s32.totalorder %s24, 1
    %p194 = por %p192, %p193
    %p195 = scmp.ne.s32.totalorder %s186, %s187
    %p196 = scmp.eq.s32.totalorder %s24, 0
    %p197 = por %p195, %p196
    %p198 = scmp.ne.s32.totalorder %s186, %s187
    %p199 = scmp.eq.s32.totalorder %s25, 1
    %p200 = por %p198, %p199
    %p202 = scmp.ne.s32.totalorder %s187, %s201
    %p203 = scmp.eq.s32.totalorder %s25, 0
    %p204 = por %p202, %p203
    %s206 = sadd.s32 %s205, 1
    %p209 = scmp.eq.s32.totalorder %s19, 1
    %p210 = scmp.ne.s32.totalorder %s205, %s207
    %p211 = scmp.eq.s32.totalorder %s19, 0
    %p212 = por %p210, %p211
    %p213 = scmp.ne.s32.totalorder %s205, %s207
    %p214 = scmp.eq.s32.totalorder %s24, 1
    %p215 = por %p213, %p214
    %p216 = scmp.ne.s32.totalorder %s207, %s208
    %p217 = scmp.eq.s32.totalorder %s24, 0
    %p218 = por %p216, %p217
    %p219 = scmp.ne.s32.totalorder %s207, %s208
    %p220 = scmp.eq.s32.totalorder %s25, 1
    %p221 = por %p219, %p220
    %p223 = scmp.ne.s32.totalorder %s208, %s222
    %p224 = scmp.eq.s32.totalorder %s25, 0
    %p225 = por %p223, %p224
    %s227 = sadd.s32 %s226, 1
    %p230 = scmp.eq.s32.totalorder %s19, 1
    %p231 = scmp.ne.s32.totalorder %s226, %s228
    %p232 = scmp.eq.s32.totalorder %s19, 0
    %p233 = por %p231, %p232
    %p234 = scmp.ne.s32.totalorder %s226, %s228
    %p235 = scmp.eq.s32.totalorder %s24, 1
    %p236 = por %p234, %p235
    %p237 = scmp.ne.s32.totalorder %s228, %s229
    %p238 = scmp.eq.s32.totalorder %s24, 0
    %p239 = por %p237, %p238
    %p240 = scmp.ne.s32.totalorder %s228, %s229
    %p241 = scmp.eq.s32.totalorder %s25, 1
    %p242 = por %p240, %p241
    %p244 = scmp.ne.s32.totalorder %s229, %s243
    %p245 = scmp.eq.s32.totalorder %s25, 0
    %p246 = por %p244, %p245
    %s248 = sadd.s32 %s247, 1
    %p251 = scmp.eq.s32.totalorder %s19, 1
    %p252 = scmp.ne.s32.totalorder %s247, %s249
    %p253 = scmp.eq.s32.totalorder %s19, 0
    %p254 = por %p252, %p253
    %p255 = scmp.ne.s32.totalorder %s247, %s249
    %p256 = scmp.eq.s32.totalorder %s24, 1
    %p257 = por %p255, %p256
    %p258 = scmp.ne.s32.totalorder %s249, %s250
    %p259 = scmp.eq.s32.totalorder %s24, 0
    %p260 = por %p258, %p259
    %p261 = scmp.ne.s32.totalorder %s249, %s250
    %p262 = scmp.eq.s32.totalorder %s25, 1
    %p263 = por %p261, %p262
    %p265 = scmp.ne.s32.totalorder %s250, %s264
    %p266 = scmp.eq.s32.totalorder %s25, 0
    %p267 = por %p265, %p266
    %s269 = sadd.s32 %s268, 1
    %p272 = scmp.eq.s32.totalorder %s19, 1
    %p273 = scmp.ne.s32.totalorder %s268, %s270
    %p274 = scmp.eq.s32.totalorder %s19, 0
    %p275 = por %p273, %p274
    %p276 = scmp.ne.s32.totalorder %s268, %s270
    %p277 = scmp.eq.s32.totalorder %s24, 1
    %p278 = por %p276, %p277
    %p279 = scmp.ne.s32.totalorder %s270, %s271
    %p280 = scmp.eq.s32.totalorder %s24, 0
    %p281 = por %p279, %p280
    %p282 = scmp.ne.s32.totalorder %s270, %s271
    %p283 = scmp.eq.s32.totalorder %s25, 1
    %p284 = por %p282, %p283
    %p286 = scmp.ne.s32.totalorder %s271, %s285
    %p287 = scmp.eq.s32.totalorder %s25, 0
    %p288 = por %p286, %p287
    %s290 = sadd.s32 %s289, 1
    %p293 = scmp.eq.s32.totalorder %s19, 1
    %p294 = scmp.ne.s32.totalorder %s289, %s291
    %p295 = scmp.eq.s32.totalorder %s19, 0
    %p296 = por %p294, %p295
    %p297 = scmp.ne.s32.totalorder %s289, %s291
    %p298 = scmp.eq.s32.totalorder %s24, 1
    %p299 = por %p297, %p298
    %p300 = scmp.ne.s32.totalorder %s291, %s292
    %p301 = scmp.eq.s32.totalorder %s24, 0
    %p302 = por %p300, %p301
    %p303 = scmp.ne.s32.totalorder %s291, %s292
    %p304 = scmp.eq.s32.totalorder %s25, 1
    %p305 = por %p303, %p304
    %p307 = scmp.ne.s32.totalorder %s292, %s306
    %p308 = scmp.eq.s32.totalorder %s25, 0
    %p309 = por %p307, %p308
    %s310 = ssub.s32 %s19, %s26
    %p311 = scmp.eq.s32.totalorder %s310, 0
    %s313 = sadd.s32 %s312, 1
    %s314 = scalar_select %p311, %s312, %s313
    %p317 = pneg %p311
    %p318 = scmp.eq.s32.totalorder %s19, 1
    %p319 = por %p317, %p318
    %p320 = scmp.ne.s32.totalorder %s312, %s315
    %p321 = scmp.eq.s32.totalorder %s19, 0
    %p322 = por %p320, %p321
    %p323 = scmp.ne.s32.totalorder %s312, %s315
    %p324 = scmp.eq.s32.totalorder %s24, 1
    %p325 = por %p323, %p324
    %p326 = scmp.ne.s32.totalorder %s315, %s316
    %p327 = scmp.eq.s32.totalorder %s24, 0
    %p328 = por %p326, %p327
    %p329 = scmp.ne.s32.totalorder %s315, %s316
    %p330 = scmp.eq.s32.totalorder %s25, 1
    %p331 = por %p329, %p330
    %p333 = scmp.ne.s32.totalorder %s316, %s332
    %p334 = scmp.eq.s32.totalorder %s25, 0
    %p335 = por %p333, %p334
    %p336 = scmp.le.s32.totalorder 1, %s19
    %p337 = scmp.lt.s32.totalorder %s19, 3
    %p338 = pnand %p336, %p337
    %p339 = pneg %p338
    // Predicated region
    $region9: #{policy_forward.1} parent=5 // pred_check
      _
    $region10: #{policy_forward.1} parent=5 // pred_check_branch
      %341 = sbr.rel (%p338) target = $region12
    $region11: #{policy_forward.1} parent=5 // pred_region
      %s342 = ssub.s32 %s19, 1
      // Predicated region
      $region13: #{policy_forward.1} parent=11 // pred_check
        %p343 = pneg %p92
      $region14: #{policy_forward.1} parent=11 // pred_check_branch
        %345 = sbr.rel (%p343) target = $region16
      $region15: #{policy_forward.1} parent=11 // pred_region
        _
      $region16: #{policy_forward.1} parent=11 // pred_fallthru
        _
      // Predicated region
      $region17: #{policy_forward.1} parent=11 // pred_check
        %p346 = pneg %p113
      $region18: #{policy_forward.1} parent=11 // pred_check_branch
        %348 = sbr.rel (%p346) target = $region20
      $region19: #{policy_forward.1} parent=11 // pred_region
        _
      $region20: #{policy_forward.1} parent=11 // pred_fallthru
        _
      // Predicated region
      $region21: #{policy_forward.1} parent=11 // pred_check
        %p349 = pneg %p134
      $region22: #{policy_forward.1} parent=11 // pred_check_branch
        %351 = sbr.rel (%p349) target = $region24
      $region23: #{policy_forward.1} parent=11 // pred_region
        _
      $region24: #{policy_forward.1} parent=11 // pred_fallthru
        _
      // Predicated region
      $region25: #{policy_forward.1} parent=11 // pred_check
        %p352 = pneg %p155
      $region26: #{policy_forward.1} parent=11 // pred_check_branch
        %354 = sbr.rel (%p352) target = $region28
      $region27: #{policy_forward.1} parent=11 // pred_region
        _
      $region28: #{policy_forward.1} parent=11 // pred_fallthru
        _
      // Predicated region
      $region29: #{policy_forward.1} parent=11 // pred_check
        %p355 = pneg %p176
      $region30: #{policy_forward.1} parent=11 // pred_check_branch
        %357 = sbr.rel (%p355) target = $region32
      $region31: #{policy_forward.1} parent=11 // pred_region
        _
      $region32: #{policy_forward.1} parent=11 // pred_fallthru
        _
      // Predicated region
      $region33: #{policy_forward.1} parent=11 // pred_check
        %p358 = pneg %p197
      $region34: #{policy_forward.1} parent=11 // pred_check_branch
        %360 = sbr.rel (%p358) target = $region36
      $region35: #{policy_forward.1} parent=11 // pred_region
        _
      $region36: #{policy_forward.1} parent=11 // pred_fallthru
        _
      // Predicated region
      $region37: #{policy_forward.1} parent=11 // pred_check
        %p361 = pneg %p218
      $region38: #{policy_forward.1} parent=11 // pred_check_branch
        %363 = sbr.rel (%p361) target = $region40
      $region39: #{policy_forward.1} parent=11 // pred_region
        _
      $region40: #{policy_forward.1} parent=11 // pred_fallthru
        _
      // Predicated region
      $region41: #{policy_forward.1} parent=11 // pred_check
        %p364 = pneg %p239
      $region42: #{policy_forward.1} parent=11 // pred_check_branch
        %366 = sbr.rel (%p364) target = $region44
      $region43: #{policy_forward.1} parent=11 // pred_region
        _
      $region44: #{policy_forward.1} parent=11 // pred_fallthru
        _
      // Predicated region
      $region45: #{policy_forward.1} parent=11 // pred_check
        %p367 = pneg %p260
      $region46: #{policy_forward.1} parent=11 // pred_check_branch
        %369 = sbr.rel (%p367) target = $region48
      $region47: #{policy_forward.1} parent=11 // pred_region
        _
      $region48: #{policy_forward.1} parent=11 // pred_fallthru
        _
      // Predicated region
      $region49: #{policy_forward.1} parent=11 // pred_check
        %p370 = pneg %p281
      $region50: #{policy_forward.1} parent=11 // pred_check_branch
        %372 = sbr.rel (%p370) target = $region52
      $region51: #{policy_forward.1} parent=11 // pred_region
        _
      $region52: #{policy_forward.1} parent=11 // pred_fallthru
        _
      // Predicated region
      $region53: #{policy_forward.1} parent=11 // pred_check
        %p373 = pneg %p302
      $region54: #{policy_forward.1} parent=11 // pred_check_branch
        %375 = sbr.rel (%p373) target = $region56
      $region55: #{policy_forward.1} parent=11 // pred_region
        _
      $region56: #{policy_forward.1} parent=11 // pred_fallthru
        _
    $region12: #{policy_forward.1} parent=5 // pred_fallthru
      _
    %p376 = scmp.lt.s32.totalorder %s19, 2
    // Predicated region
    $region57: #{policy_forward.1} parent=5 // pred_check
      %p377 = pneg %p376
    $region58: #{policy_forward.1} parent=5 // pred_check_branch
      %379 = sbr.rel (%p377) target = $region60
    $region59: #{policy_forward.1} parent=5 // pred_region
      // Predicated region
      $region61: #{policy_forward.1} parent=59 // pred_check
        %p380 = pneg %p39
      $region62: #{policy_forward.1} parent=59 // pred_check_branch
        %382 = sbr.rel (%p380) target = $region64
      $region63: #{policy_forward.1} parent=59 // pred_region
        %p383 = scmp.lt.s32.totalorder %s19, 1
        %s384 = scalar_select %p383, %s19, 1
        %s385 = smul.addr %s384, 72
        %s386 = smul.addr %s385, 8
        %s387 = scalar_lea.vmem %s0, %s386
      $region64: #{policy_forward.1} parent=59 // pred_fallthru
        _
      // Predicated region
      $region65: #{policy_forward.1} parent=59 // pred_check
        %p388 = pneg %p65
      $region66: #{policy_forward.1} parent=59 // pred_check_branch
        %390 = sbr.rel (%p388) target = $region68
      $region67: #{policy_forward.1} parent=59 // pred_region
        %p391 = scmp.lt.s32.totalorder %s19, 1
        %s392 = scalar_select %p391, %s19, 1
        %s393 = scalar_lea.vmem %s1, %s392
      $region68: #{policy_forward.1} parent=59 // pred_fallthru
        _
    $region60: #{policy_forward.1} parent=5 // pred_fallthru
      _
    %p394 = scmp.le.s32.totalorder 1, %s19
    %p395 = scmp.lt.s32.totalorder %s19, 3
    %p396 = pnand %p394, %p395
    %p397 = pneg %p396
    // Predicated region
    $region69: #{policy_forward.1} parent=5 // pred_check
      _
    $region70: #{policy_forward.1} parent=5 // pred_check_branch
      %399 = sbr.rel (%p396) target = $region72
    $region71: #{policy_forward.1} parent=5 // pred_region
      %s400 = ssub.s32 %s19, 1
      %p401 = scmp.lt.s32.totalorder %s24, 1
      %s402 = scalar_select %p401, %s24, 1
      %s403 = smul.addr %s402, 72
      %s404 = smul.addr %s403, 8
      %s405 = scalar_lea.vmem %s0, %s404
      %p406 = pneg %p45
      %p407 = pneg %p42
      %p408 = scmp.lt.s32.totalorder %s24, 1
      %s409 = scalar_select %p408, %s24, 1
      %s410 = scalar_lea.vmem %s1, %s409
      %p411 = pneg %p71
      %p412 = pneg %p68
      %p413 = pneg %p92
      %p414 = pneg %p89
      %p415 = pneg %p113
      %p416 = pneg %p110
      %p417 = pneg %p134
      %p418 = pneg %p131
      %p419 = pneg %p155
      %p420 = pneg %p152
      %p421 = pneg %p176
      %p422 = pneg %p173
      %p423 = pneg %p197
      %p424 = pneg %p194
      %p425 = pneg %p218
      %p426 = pneg %p215
      %p427 = pneg %p239
      %p428 = pneg %p236
      %p429 = pneg %p260
      %p430 = pneg %p257
      %p431 = pneg %p281
      %p432 = pneg %p278
      %p433 = pneg %p302
      %p434 = pneg %p299
      %p435 = pneg %p328
      %p436 = pneg %p325
      %p437 = scmp.lt.s32.totalorder %s24, 1
      %s438 = scalar_select %p437, %s24, 1
      %s439 = scalar_lea.vmem %s13, %s438
      %p440 = scmp.lt.s32.totalorder %s24, 1
      %s441 = scalar_select %p440, %s24, 1
      %s442 = smul.addr %s441, 72
      %s443 = smul.addr %s442, 8
      %s444 = scalar_lea.vmem %s0, %s443
      %p445 = scmp.lt.s32.totalorder %s24, 1
      %s446 = scalar_select %p445, %s24, 1
      %s447 = scalar_lea.vmem %s1, %s446
      %p448 = scmp.lt.s32.totalorder %s24, 1
      %s449 = scalar_select %p448, %s24, 1
      %s450 = scalar_lea.vmem %s13, %s449
      %v451 = vld [vmem:[%s444] sm:$0xff]
      %v452 = vld [vmem:[%s444 + $0x8] sm:$0xff]
      %v453 = vld [vmem:[%s444 + $0x10] sm:$0xff]
      %v454 = vld [vmem:[%s444 + $0x18] sm:$0xff]
      %v455 = vld [vmem:[%s444 + $0x20] sm:$0xff]
      %v456 = vld [vmem:[%s444 + $0x28] sm:$0xff]
      %v457 = vld [vmem:[%s444 + $0x30] sm:$0xff]
      %v458 = vld [vmem:[%s444 + $0x38] sm:$0xff]
      %v459 = vld [vmem:[%s444 + $0x40] sm:$0xff]
      %v460 = vld [vmem:[%s444 + $0x48] sm:$0xff]
      %v461 = vld [vmem:[%s444 + $0x50] sm:$0xff]
      %v462 = vld [vmem:[%s444 + $0x58] sm:$0xff]
      %v463 = vld [vmem:[%s444 + $0x60] sm:$0xff]
      %v464 = vld [vmem:[%s444 + $0x68] sm:$0xff]
      %v465 = vld [vmem:[%s444 + $0x70] sm:$0xff]
      %v466 = vld [vmem:[%s444 + $0x78] sm:$0xff]
      %v467 = vld [vmem:[%s444 + $0x80] sm:$0xff]
      %v468 = vld [vmem:[%s444 + $0x88] sm:$0xff]
      %v469 = vld [vmem:[%s444 + $0x90] sm:$0xff]
      %v470 = vld [vmem:[%s444 + $0x98] sm:$0xff]
      %v471 = vld [vmem:[%s444 + $0xa0] sm:$0xff]
      %v472 = vld [vmem:[%s444 + $0xa8] sm:$0xff]
      %v473 = vld [vmem:[%s444 + $0xb0] sm:$0xff]
      %v474 = vld [vmem:[%s444 + $0xb8] sm:$0xff]
      %v475 = vld [vmem:[%s444 + $0xc0] sm:$0xff]
      %v476 = vld [vmem:[%s444 + $0xc8] sm:$0xff]
      %v477 = vld [vmem:[%s444 + $0xd0] sm:$0xff]
      %v478 = vld [vmem:[%s444 + $0xd8] sm:$0xff]
      %v479 = vld [vmem:[%s444 + $0xe0] sm:$0xff]
      %v480 = vld [vmem:[%s444 + $0xe8] sm:$0xff]
      %v481 = vld [vmem:[%s444 + $0xf0] sm:$0xff]
      %v482 = vld [vmem:[%s444 + $0xf8] sm:$0xff]
      %v483 = vld [vmem:[%s444 + $0x100] sm:$0xff]
      %v484 = vld [vmem:[%s444 + $0x108] sm:$0xff]
      %v485 = vld [vmem:[%s444 + $0x110] sm:$0xff]
      %v486 = vld [vmem:[%s444 + $0x118] sm:$0xff]
      %v487 = vld [vmem:[%s444 + $0x120] sm:$0xff]
      %v488 = vld [vmem:[%s444 + $0x128] sm:$0xff]
      %v489 = vld [vmem:[%s444 + $0x130] sm:$0xff]
      %v490 = vld [vmem:[%s444 + $0x138] sm:$0xff]
      %v491 = vld [vmem:[%s444 + $0x140] sm:$0xff]
      %v492 = vld [vmem:[%s444 + $0x148] sm:$0xff]
      %v493 = vld [vmem:[%s444 + $0x150] sm:$0xff]
      %v494 = vld [vmem:[%s444 + $0x158] sm:$0xff]
      %v495 = vld [vmem:[%s444 + $0x160] sm:$0xff]
      %v496 = vld [vmem:[%s444 + $0x168] sm:$0xff]
      %v497 = vld [vmem:[%s444 + $0x170] sm:$0xff]
      %v498 = vld [vmem:[%s444 + $0x178] sm:$0xff]
      %v499 = vld [vmem:[%s444 + $0x180] sm:$0xff]
      %v500 = vld [vmem:[%s444 + $0x188] sm:$0xff]
      %v501 = vld [vmem:[%s444 + $0x190] sm:$0xff]
      %v502 = vld [vmem:[%s444 + $0x198] sm:$0xff]
      %v503 = vld [vmem:[%s444 + $0x1a0] sm:$0xff]
      %v504 = vld [vmem:[%s444 + $0x1a8] sm:$0xff]
      %v505 = vld [vmem:[%s444 + $0x1b0] sm:$0xff]
      %v506 = vld [vmem:[%s444 + $0x1b8] sm:$0xff]
      %v507 = vld [vmem:[%s444 + $0x1c0] sm:$0xff]
      %v508 = vld [vmem:[%s444 + $0x1c8] sm:$0xff]
      %v509 = vld [vmem:[%s444 + $0x1d0] sm:$0xff]
      %v510 = vld [vmem:[%s444 + $0x1d8] sm:$0xff]
      %v511 = vld [vmem:[%s444 + $0x1e0] sm:$0xff]
      %v512 = vld [vmem:[%s444 + $0x1e8] sm:$0xff]
      %v513 = vld [vmem:[%s444 + $0x1f0] sm:$0xff]
      %v514 = vld [vmem:[%s444 + $0x1f8] sm:$0xff]
      %v515 = vld [vmem:[%s444 + $0x200] sm:$0xff]
      %v516 = vld [vmem:[%s444 + $0x208] sm:$0xff]
      %v517 = vld [vmem:[%s444 + $0x210] sm:$0xff]
      %v518 = vld [vmem:[%s444 + $0x218] sm:$0xff]
      %v519 = vld [vmem:[%s444 + $0x220] sm:$0xff]
      %v520 = vld [vmem:[%s444 + $0x228] sm:$0xff]
      %v521 = vld [vmem:[%s444 + $0x230] sm:$0xff]
      %v522 = vld [vmem:[%s444 + $0x238] sm:$0xff]
      %v523 = vld [vmem:[%s2] sm:$0xff]
      %v524 = vld [vmem:[%s2 + $0x8] sm:$0xff]
      %v525 = vld [vmem:[%s2 + $0x10] sm:$0xff]
      %v526 = vld [vmem:[%s2 + $0x18] sm:$0x1]
      %v527 = vld [vmem:[%s3] sm:$0x1]
      %v529 = vperm.slane %v527, 0
      %vm531 = vcmask 203776
      %v533 = vsel %vm531, %v451, 0
      %v536 = vsel %vm531, %v452, 0
      %v539 = vsel %vm531, %v453, 0
      %v542 = vsel %vm531, %v454, 0
      %v545 = vsel %vm531, %v455, 0
      %v548 = vsel %vm531, %v456, 0
      %v551 = vsel %vm531, %v457, 0
      %v554 = vsel %vm531, %v458, 0
      %v557 = vsel %vm531, %v459, 0
      %v560 = vsel %vm531, %v460, 0
      %v563 = vsel %vm531, %v461, 0
      %v566 = vsel %vm531, %v462, 0
      %v569 = vsel %vm531, %v463, 0
      %v572 = vsel %vm531, %v464, 0
      %v575 = vsel %vm531, %v465, 0
      %v578 = vsel %vm531, %v466, 0
      %v581 = vsel %vm531, %v467, 0
      %v584 = vsel %vm531, %v468, 0
      %v587 = vsel %vm531, %v469, 0
      %v590 = vsel %vm531, %v470, 0
      %v593 = vsel %vm531, %v471, 0
      %v596 = vsel %vm531, %v472, 0
      %v599 = vsel %vm531, %v473, 0
      %v602 = vsel %vm531, %v474, 0
      %v605 = vsel %vm531, %v475, 0
      %v608 = vsel %vm531, %v476, 0
      %v611 = vsel %vm531, %v477, 0
      %v614 = vsel %vm531, %v478, 0
      %v617 = vsel %vm531, %v479, 0
      %v620 = vsel %vm531, %v480, 0
      %v623 = vsel %vm531, %v481, 0
      %v626 = vsel %vm531, %v482, 0
      %v629 = vsel %vm531, %v483, 0
      %v632 = vsel %vm531, %v484, 0
      %v635 = vsel %vm531, %v485, 0
      %v638 = vsel %vm531, %v486, 0
      %v641 = vsel %vm531, %v487, 0
      %v644 = vsel %vm531, %v488, 0
      %v647 = vsel %vm531, %v489, 0
      %v650 = vsel %vm531, %v490, 0
      %v653 = vsel %vm531, %v491, 0
      %v656 = vsel %vm531, %v492, 0
      %v659 = vsel %vm531, %v493, 0
      %v662 = vsel %vm531, %v494, 0
      %v665 = vsel %vm531, %v495, 0
      %v668 = vsel %vm531, %v496, 0
      %v671 = vsel %vm531, %v497, 0
      %v674 = vsel %vm531, %v498, 0
      %v677 = vsel %vm531, %v499, 0
      %v680 = vsel %vm531, %v500, 0
      %v683 = vsel %vm531, %v501, 0
      %v686 = vsel %vm531, %v502, 0
      %v689 = vsel %vm531, %v503, 0
      %v692 = vsel %vm531, %v504, 0
      %v695 = vsel %vm531, %v505, 0
      %v698 = vsel %vm531, %v506, 0
      %v701 = vsel %vm531, %v507, 0
      %v704 = vsel %vm531, %v508, 0
      %v707 = vsel %vm531, %v509, 0
      %v710 = vsel %vm531, %v510, 0
      %v713 = vsel %vm531, %v511, 0
      %v716 = vsel %vm531, %v512, 0
      %v719 = vsel %vm531, %v513, 0
      %v722 = vsel %vm531, %v514, 0
      %v725 = vsel %vm531, %v515, 0
      %v728 = vsel %vm531, %v516, 0
      %v731 = vsel %vm531, %v517, 0
      %v734 = vsel %vm531, %v518, 0
      %v737 = vsel %vm531, %v519, 0
      %v740 = vsel %vm531, %v520, 0
      %v743 = vsel %vm531, %v521, 0
      %v746 = vsel %vm531, %v522, 0
      %vm748 = vcmask 1040384
      %v750 = vsel %vm748, %v526, 0
      %752 = vmatpush.msra.mxu0 0.0
      %753 = vmatpush.msra.mxu0 0.0
      %754 = vmatpush.msra.mxu0 0.0
      %755 = vmatpush.msra.mxu0 0.0
      %756 = vmatpush.msra.mxu0 0.0
      %757 = vmatpush.msra.mxu0 0.0
      %758 = vmatpush.msra.mxu0 0.0
      %759 = vmatpush.msra.mxu0 0.0
      %760 = vmatpush.msra.mxu0 0.0
      %761 = vmatpush.msra.mxu0 0.0
      %762 = vmatpush.msra.mxu0 0.0
      %763 = vmatpush.msra.mxu0 0.0
      %764 = vmatpush.msra.mxu0 %v750
      %765 = vmatpush.msra.mxu0 %v525
      %766 = vmatpush.msra.mxu0 %v524
      %767 = vmatpush.msra.mxu0 %v523
      %768 = vmatmul.f32.gmra.mxu0 %v533
      %v769 = vpop.f32.mrf.mxu0
      %v770 = vadd.f32 %v529, %v769
      %771 = vmatmul.f32.gmra.mxu0 %v536
      %v772 = vpop.f32.mrf.mxu0
      %v773 = vadd.f32 %v529, %v772
      %774 = vmatmul.f32.gmra.mxu0 %v539
      %v775 = vpop.f32.mrf.mxu0
      %v776 = vadd.f32 %v529, %v775
      %777 = vmatmul.f32.gmra.mxu0 %v542
      %v778 = vpop.f32.mrf.mxu0
      %v779 = vadd.f32 %v529, %v778
      %780 = vmatmul.f32.gmra.mxu0 %v545
      %v781 = vpop.f32.mrf.mxu0
      %v782 = vadd.f32 %v529, %v781
      %783 = vmatmul.f32.gmra.mxu0 %v548
      %v784 = vpop.f32.mrf.mxu0
      %v785 = vadd.f32 %v529, %v784
      %786 = vmatmul.f32.gmra.mxu0 %v551
      %v787 = vpop.f32.mrf.mxu0
      %v788 = vadd.f32 %v529, %v787
      %789 = vmatmul.f32.gmra.mxu0 %v554
      %v790 = vpop.f32.mrf.mxu0
      %v791 = vadd.f32 %v529, %v790
      %792 = vmatmul.f32.gmra.mxu0 %v557
      %v793 = vpop.f32.mrf.mxu0
      %v794 = vadd.f32 %v529, %v793
      %795 = vmatmul.f32.gmra.mxu0 %v560
      %v796 = vpop.f32.mrf.mxu0
      %v797 = vadd.f32 %v529, %v796
      %798 = vmatmul.f32.gmra.mxu0 %v563
      %v799 = vpop.f32.mrf.mxu0
      %v800 = vadd.f32 %v529, %v799
      %801 = vmatmul.f32.gmra.mxu0 %v566
      %v802 = vpop.f32.mrf.mxu0
      %v803 = vadd.f32 %v529, %v802
      %804 = vmatmul.f32.gmra.mxu0 %v569
      %v805 = vpop.f32.mrf.mxu0
      %v806 = vadd.f32 %v529, %v805
      %807 = vmatmul.f32.gmra.mxu0 %v572
      %v808 = vpop.f32.mrf.mxu0
      %v809 = vadd.f32 %v529, %v808
      %810 = vmatmul.f32.gmra.mxu0 %v575
      %v811 = vpop.f32.mrf.mxu0
      %v812 = vadd.f32 %v529, %v811
      %813 = vmatmul.f32.gmra.mxu0 %v578
      %v814 = vpop.f32.mrf.mxu0
      %v815 = vadd.f32 %v529, %v814
      %816 = vmatmul.f32.gmra.mxu0 %v581
      %v817 = vpop.f32.mrf.mxu0
      %v818 = vadd.f32 %v529, %v817
      %819 = vmatmul.f32.gmra.mxu0 %v584
      %v820 = vpop.f32.mrf.mxu0
      %v821 = vadd.f32 %v529, %v820
      %822 = vmatmul.f32.gmra.mxu0 %v587
      %v823 = vpop.f32.mrf.mxu0
      %v824 = vadd.f32 %v529, %v823
      %825 = vmatmul.f32.gmra.mxu0 %v590
      %v826 = vpop.f32.mrf.mxu0
      %v827 = vadd.f32 %v529, %v826
      %828 = vmatmul.f32.gmra.mxu0 %v593
      %v829 = vpop.f32.mrf.mxu0
      %v830 = vadd.f32 %v529, %v829
      %831 = vmatmul.f32.gmra.mxu0 %v596
      %v832 = vpop.f32.mrf.mxu0
      %v833 = vadd.f32 %v529, %v832
      %834 = vmatmul.f32.gmra.mxu0 %v599
      %v835 = vpop.f32.mrf.mxu0
      %v836 = vadd.f32 %v529, %v835
      %837 = vmatmul.f32.gmra.mxu0 %v602
      %v838 = vpop.f32.mrf.mxu0
      %v839 = vadd.f32 %v529, %v838
      %840 = vmatmul.f32.gmra.mxu0 %v605
      %v841 = vpop.f32.mrf.mxu0
      %v842 = vadd.f32 %v529, %v841
      %843 = vmatmul.f32.gmra.mxu0 %v608
      %v844 = vpop.f32.mrf.mxu0
      %v845 = vadd.f32 %v529, %v844
      %846 = vmatmul.f32.gmra.mxu0 %v611
      %v847 = vpop.f32.mrf.mxu0
      %v848 = vadd.f32 %v529, %v847
      %849 = vmatmul.f32.gmra.mxu0 %v614
      %v850 = vpop.f32.mrf.mxu0
      %v851 = vadd.f32 %v529, %v850
      %852 = vmatmul.f32.gmra.mxu0 %v617
      %v853 = vpop.f32.mrf.mxu0
      %v854 = vadd.f32 %v529, %v853
      %855 = vmatmul.f32.gmra.mxu0 %v620
      %v856 = vpop.f32.mrf.mxu0
      %v857 = vadd.f32 %v529, %v856
      %858 = vmatmul.f32.gmra.mxu0 %v623
      %v859 = vpop.f32.mrf.mxu0
      %v860 = vadd.f32 %v529, %v859
      %861 = vmatmul.f32.gmra.mxu0 %v626
      %v862 = vpop.f32.mrf.mxu0
      %v863 = vadd.f32 %v529, %v862
      %864 = vmatmul.f32.gmra.mxu0 %v629
      %v865 = vpop.f32.mrf.mxu0
      %v866 = vadd.f32 %v529, %v865
      %867 = vmatmul.f32.gmra.mxu0 %v632
      %v868 = vpop.f32.mrf.mxu0
      %v869 = vadd.f32 %v529, %v868
      %870 = vmatmul.f32.gmra.mxu0 %v635
      %v871 = vpop.f32.mrf.mxu0
      %v872 = vadd.f32 %v529, %v871
      %873 = vmatmul.f32.gmra.mxu0 %v638
      %v874 = vpop.f32.mrf.mxu0
      %v875 = vadd.f32 %v529, %v874
      %876 = vmatmul.f32.gmra.mxu0 %v641
      %v877 = vpop.f32.mrf.mxu0
      %v878 = vadd.f32 %v529, %v877
      %879 = vmatmul.f32.gmra.mxu0 %v644
      %v880 = vpop.f32.mrf.mxu0
      %v881 = vadd.f32 %v529, %v880
      %882 = vmatmul.f32.gmra.mxu0 %v647
      %v883 = vpop.f32.mrf.mxu0
      %v884 = vadd.f32 %v529, %v883
      %885 = vmatmul.f32.gmra.mxu0 %v650
      %v886 = vpop.f32.mrf.mxu0
      %v887 = vadd.f32 %v529, %v886
      %888 = vmatmul.f32.gmra.mxu0 %v653
      %v889 = vpop.f32.mrf.mxu0
      %v890 = vadd.f32 %v529, %v889
      %891 = vmatmul.f32.gmra.mxu0 %v656
      %v892 = vpop.f32.mrf.mxu0
      %v893 = vadd.f32 %v529, %v892
      %894 = vmatmul.f32.gmra.mxu0 %v659
      %v895 = vpop.f32.mrf.mxu0
      %v896 = vadd.f32 %v529, %v895
      %897 = vmatmul.f32.gmra.mxu0 %v662
      %v898 = vpop.f32.mrf.mxu0
      %v899 = vadd.f32 %v529, %v898
      %900 = vmatmul.f32.gmra.mxu0 %v665
      %v901 = vpop.f32.mrf.mxu0
      %v902 = vadd.f32 %v529, %v901
      %903 = vmatmul.f32.gmra.mxu0 %v668
      %v904 = vpop.f32.mrf.mxu0
      %v905 = vadd.f32 %v529, %v904
      %906 = vmatmul.f32.gmra.mxu0 %v671
      %v907 = vpop.f32.mrf.mxu0
      %v908 = vadd.f32 %v529, %v907
      %909 = vmatmul.f32.gmra.mxu0 %v674
      %v910 = vpop.f32.mrf.mxu0
      %v911 = vadd.f32 %v529, %v910
      %912 = vmatmul.f32.gmra.mxu0 %v677
      %v913 = vpop.f32.mrf.mxu0
      %v914 = vadd.f32 %v529, %v913
      %915 = vmatmul.f32.gmra.mxu0 %v680
      %v916 = vpop.f32.mrf.mxu0
      %v917 = vadd.f32 %v529, %v916
      %918 = vmatmul.f32.gmra.mxu0 %v683
      %v919 = vpop.f32.mrf.mxu0
      %v920 = vadd.f32 %v529, %v919
      %921 = vmatmul.f32.gmra.mxu0 %v686
      %v922 = vpop.f32.mrf.mxu0
      %v923 = vadd.f32 %v529, %v922
      %924 = vmatmul.f32.gmra.mxu0 %v689
      %v925 = vpop.f32.mrf.mxu0
      %v926 = vadd.f32 %v529, %v925
      %927 = vmatmul.f32.gmra.mxu0 %v692
      %v928 = vpop.f32.mrf.mxu0
      %v929 = vadd.f32 %v529, %v928
      %930 = vmatmul.f32.gmra.mxu0 %v695
      %v931 = vpop.f32.mrf.mxu0
      %v932 = vadd.f32 %v529, %v931
      %933 = vmatmul.f32.gmra.mxu0 %v698
      %v934 = vpop.f32.mrf.mxu0
      %v935 = vadd.f32 %v529, %v934
      %936 = vmatmul.f32.gmra.mxu0 %v701
      %v937 = vpop.f32.mrf.mxu0
      %v938 = vadd.f32 %v529, %v937
      %939 = vmatmul.f32.gmra.mxu0 %v704
      %v940 = vpop.f32.mrf.mxu0
      %v941 = vadd.f32 %v529, %v940
      %942 = vmatmul.f32.gmra.mxu0 %v707
      %v943 = vpop.f32.mrf.mxu0
      %v944 = vadd.f32 %v529, %v943
      %945 = vmatmul.f32.gmra.mxu0 %v710
      %v946 = vpop.f32.mrf.mxu0
      %v947 = vadd.f32 %v529, %v946
      %948 = vmatmul.f32.gmra.mxu0 %v713
      %v949 = vpop.f32.mrf.mxu0
      %v950 = vadd.f32 %v529, %v949
      %951 = vmatmul.f32.gmra.mxu0 %v716
      %v952 = vpop.f32.mrf.mxu0
      %v953 = vadd.f32 %v529, %v952
      %954 = vmatmul.f32.gmra.mxu0 %v719
      %v955 = vpop.f32.mrf.mxu0
      %v956 = vadd.f32 %v529, %v955
      %957 = vmatmul.f32.gmra.mxu0 %v722
      %v958 = vpop.f32.mrf.mxu0
      %v959 = vadd.f32 %v529, %v958
      %960 = vmatmul.f32.gmra.mxu0 %v725
      %v961 = vpop.f32.mrf.mxu0
      %v962 = vadd.f32 %v529, %v961
      %963 = vmatmul.f32.gmra.mxu0 %v728
      %v964 = vpop.f32.mrf.mxu0
      %v965 = vadd.f32 %v529, %v964
      %966 = vmatmul.f32.gmra.mxu0 %v731
      %v967 = vpop.f32.mrf.mxu0
      %v968 = vadd.f32 %v529, %v967
      %969 = vmatmul.f32.gmra.mxu0 %v734
      %v970 = vpop.f32.mrf.mxu0
      %v971 = vadd.f32 %v529, %v970
      %972 = vmatmul.f32.gmra.mxu0 %v737
      %v973 = vpop.f32.mrf.mxu0
      %v974 = vadd.f32 %v529, %v973
      %975 = vmatmul.f32.gmra.mxu0 %v740
      %v976 = vpop.f32.mrf.mxu0
      %v977 = vadd.f32 %v529, %v976
      %978 = vmatmul.f32.gmra.mxu0 %v743
      %v979 = vpop.f32.mrf.mxu0
      %v980 = vadd.f32 %v529, %v979
      %981 = vmatmul.f32.gmra.mxu0 %v746
      %v982 = vpop.f32.mrf.mxu0
      %v983 = vadd.f32 %v529, %v982
      %984 = vdwg.mxu0
      %v985 = vmax.f32 %v770, 0.0
      %v986 = vmax.f32 %v773, 0.0
      %v987 = vmax.f32 %v776, 0.0
      %v988 = vmax.f32 %v779, 0.0
      %v989 = vmax.f32 %v782, 0.0
      %v990 = vmax.f32 %v785, 0.0
      %v991 = vmax.f32 %v788, 0.0
      %v992 = vmax.f32 %v791, 0.0
      %v993 = vmax.f32 %v794, 0.0
      %v994 = vmax.f32 %v797, 0.0
      %v995 = vmax.f32 %v800, 0.0
      %v996 = vmax.f32 %v803, 0.0
      %v997 = vmax.f32 %v806, 0.0
      %v998 = vmax.f32 %v809, 0.0
      %v999 = vmax.f32 %v812, 0.0
      %v1000 = vmax.f32 %v815, 0.0
      %v1001 = vmax.f32 %v818, 0.0
      %v1002 = vmax.f32 %v821, 0.0
      %v1003 = vmax.f32 %v824, 0.0
      %v1004 = vmax.f32 %v827, 0.0
      %v1005 = vmax.f32 %v830, 0.0
      %v1006 = vmax.f32 %v833, 0.0
      %v1007 = vmax.f32 %v836, 0.0
      %v1008 = vmax.f32 %v839, 0.0
      %v1009 = vmax.f32 %v842, 0.0
      %v1010 = vmax.f32 %v845, 0.0
      %v1011 = vmax.f32 %v848, 0.0
      %v1012 = vmax.f32 %v851, 0.0
      %v1013 = vmax.f32 %v854, 0.0
      %v1014 = vmax.f32 %v857, 0.0
      %v1015 = vmax.f32 %v860, 0.0
      %v1016 = vmax.f32 %v863, 0.0
      %v1017 = vmax.f32 %v866, 0.0
      %v1018 = vmax.f32 %v869, 0.0
      %v1019 = vmax.f32 %v872, 0.0
      %v1020 = vmax.f32 %v875, 0.0
      %v1021 = vmax.f32 %v878, 0.0
      %v1022 = vmax.f32 %v881, 0.0
      %v1023 = vmax.f32 %v884, 0.0
      %v1024 = vmax.f32 %v887, 0.0
      %v1025 = vmax.f32 %v890, 0.0
      %v1026 = vmax.f32 %v893, 0.0
      %v1027 = vmax.f32 %v896, 0.0
      %v1028 = vmax.f32 %v899, 0.0
      %v1029 = vmax.f32 %v902, 0.0
      %v1030 = vmax.f32 %v905, 0.0
      %v1031 = vmax.f32 %v908, 0.0
      %v1032 = vmax.f32 %v911, 0.0
      %v1033 = vmax.f32 %v914, 0.0
      %v1034 = vmax.f32 %v917, 0.0
      %v1035 = vmax.f32 %v920, 0.0
      %v1036 = vmax.f32 %v923, 0.0
      %v1037 = vmax.f32 %v926, 0.0
      %v1038 = vmax.f32 %v929, 0.0
      %v1039 = vmax.f32 %v932, 0.0
      %v1040 = vmax.f32 %v935, 0.0
      %v1041 = vmax.f32 %v938, 0.0
      %v1042 = vmax.f32 %v941, 0.0
      %v1043 = vmax.f32 %v944, 0.0
      %v1044 = vmax.f32 %v947, 0.0
      %v1045 = vmax.f32 %v950, 0.0
      %v1046 = vmax.f32 %v953, 0.0
      %v1047 = vmax.f32 %v956, 0.0
      %v1048 = vmax.f32 %v959, 0.0
      %v1049 = vmax.f32 %v962, 0.0
      %v1050 = vmax.f32 %v965, 0.0
      %v1051 = vmax.f32 %v968, 0.0
      %v1052 = vmax.f32 %v971, 0.0
      %v1053 = vmax.f32 %v974, 0.0
      %v1054 = vmax.f32 %v977, 0.0
      %v1055 = vmax.f32 %v980, 0.0
      %v1056 = vmax.f32 %v983, 0.0
      %vm1129 = vcmask 1046528
      %v1130 = vrot.slane %v985, 1
      %v1131 = vrot.slane %v986, 1
      %v1132 = vsel %vm1129, %v1130, %v1131
      %v1133 = vrot.slane %v987, 1
      %v1134 = vsel %vm1129, %v1131, %v1133
      %v1135 = vrot.slane %v988, 1
      %v1136 = vsel %vm1129, %v1133, %v1135
      %v1137 = vrot.slane %v989, 1
      %v1138 = vsel %vm1129, %v1135, %v1137
      %v1139 = vrot.slane %v990, 1
      %v1140 = vsel %vm1129, %v1137, %v1139
      %v1141 = vrot.slane %v991, 1
      %v1142 = vsel %vm1129, %v1139, %v1141
      %v1143 = vrot.slane %v992, 1
      %v1144 = vsel %vm1129, %v1141, %v1143
      %v1145 = vrot.slane %v993, 1
      %v1146 = vsel %vm1129, %v1143, %v1145
      %v1147 = vrot.slane %v994, 1
      %v1148 = vsel %vm1129, %v1145, %v1147
      %v1149 = vrot.slane %v995, 1
      %v1150 = vsel %vm1129, %v1147, %v1149
      %v1151 = vrot.slane %v996, 1
      %v1152 = vsel %vm1129, %v1149, %v1151
      %v1153 = vrot.slane %v997, 1
      %v1154 = vsel %vm1129, %v1151, %v1153
      %v1155 = vrot.slane %v998, 1
      %v1156 = vsel %vm1129, %v1153, %v1155
      %v1157 = vrot.slane %v999, 1
      %v1158 = vsel %vm1129, %v1155, %v1157
      %v1159 = vrot.slane %v1000, 1
      %v1160 = vsel %vm1129, %v1157, %v1159
      %v1161 = vrot.slane %v1001, 1
      %v1162 = vsel %vm1129, %v1159, %v1161
      %v1163 = vrot.slane %v1002, 1
      %v1164 = vsel %vm1129, %v1161, %v1163
      %v1165 = vrot.slane %v1003, 1
      %v1166 = vsel %vm1129, %v1163, %v1165
      %v1167 = vrot.slane %v1004, 1
      %v1168 = vsel %vm1129, %v1165, %v1167
      %v1169 = vrot.slane %v1005, 1
      %v1170 = vsel %vm1129, %v1167, %v1169
      %v1171 = vrot.slane %v1006, 1
      %v1172 = vsel %vm1129, %v1169, %v1171
      %v1173 = vrot.slane %v1007, 1
      %v1174 = vsel %vm1129, %v1171, %v1173
      %v1175 = vrot.slane %v1008, 1
      %v1176 = vsel %vm1129, %v1173, %v1175
      %v1177 = vrot.slane %v1009, 1
      %v1178 = vsel %vm1129, %v1175, %v1177
      %v1179 = vrot.slane %v1010, 1
      %v1180 = vsel %vm1129, %v1177, %v1179
      %v1181 = vrot.slane %v1011, 1
      %v1182 = vsel %vm1129, %v1179, %v1181
      %v1183 = vrot.slane %v1012, 1
      %v1184 = vsel %vm1129, %v1181, %v1183
      %v1185 = vrot.slane %v1013, 1
      %v1186 = vsel %vm1129, %v1183, %v1185
      %v1187 = vrot.slane %v1014, 1
      %v1188 = vsel %vm1129, %v1185, %v1187
      %v1189 = vrot.slane %v1015, 1
      %v1190 = vsel %vm1129, %v1187, %v1189
      %v1191 = vrot.slane %v1016, 1
      %v1192 = vsel %vm1129, %v1189, %v1191
      %v1193 = vrot.slane %v1017, 1
      %v1194 = vsel %vm1129, %v1191, %v1193
      %v1195 = vrot.slane %v1018, 1
      %v1196 = vsel %vm1129, %v1193, %v1195
      %v1197 = vrot.slane %v1019, 1
      %v1198 = vsel %vm1129, %v1195, %v1197
      %v1199 = vrot.slane %v1020, 1
      %v1200 = vsel %vm1129, %v1197, %v1199
      %v1201 = vrot.slane %v1021, 1
      %v1202 = vsel %vm1129, %v1199, %v1201
      %v1203 = vrot.slane %v1022, 1
      %v1204 = vsel %vm1129, %v1201, %v1203
      %v1205 = vrot.slane %v1023, 1
      %v1206 = vsel %vm1129, %v1203, %v1205
      %v1207 = vrot.slane %v1024, 1
      %v1208 = vsel %vm1129, %v1205, %v1207
      %v1209 = vrot.slane %v1025, 1
      %v1210 = vsel %vm1129, %v1207, %v1209
      %v1211 = vrot.slane %v1026, 1
      %v1212 = vsel %vm1129, %v1209, %v1211
      %v1213 = vrot.slane %v1027, 1
      %v1214 = vsel %vm1129, %v1211, %v1213
      %v1215 = vrot.slane %v1028, 1
      %v1216 = vsel %vm1129, %v1213, %v1215
      %v1217 = vrot.slane %v1029, 1
      %v1218 = vsel %vm1129, %v1215, %v1217
      %v1219 = vrot.slane %v1030, 1
      %v1220 = vsel %vm1129, %v1217, %v1219
      %v1221 = vrot.slane %v1031, 1
      %v1222 = vsel %vm1129, %v1219, %v1221
      %v1223 = vrot.slane %v1032, 1
      %v1224 = vsel %vm1129, %v1221, %v1223
      %v1225 = vrot.slane %v1033, 1
      %v1226 = vsel %vm1129, %v1223, %v1225
      %v1227 = vrot.slane %v1034, 1
      %v1228 = vsel %vm1129, %v1225, %v1227
      %v1229 = vrot.slane %v1035, 1
      %v1230 = vsel %vm1129, %v1227, %v1229
      %v1231 = vrot.slane %v1036, 1
      %v1232 = vsel %vm1129, %v1229, %v1231
      %v1233 = vrot.slane %v1037, 1
      %v1234 = vsel %vm1129, %v1231, %v1233
      %v1235 = vrot.slane %v1038, 1
      %v1236 = vsel %vm1129, %v1233, %v1235
      %v1237 = vrot.slane %v1039, 1
      %v1238 = vsel %vm1129, %v1235, %v1237
      %v1239 = vrot.slane %v1040, 1
      %v1240 = vsel %vm1129, %v1237, %v1239
      %v1241 = vrot.slane %v1041, 1
      %v1242 = vsel %vm1129, %v1239, %v1241
      %v1243 = vrot.slane %v1042, 1
      %v1244 = vsel %vm1129, %v1241, %v1243
      %v1245 = vrot.slane %v1043, 1
      %v1246 = vsel %vm1129, %v1243, %v1245
      %v1247 = vrot.slane %v1044, 1
      %v1248 = vsel %vm1129, %v1245, %v1247
      %v1249 = vrot.slane %v1045, 1
      %v1250 = vsel %vm1129, %v1247, %v1249
      %v1251 = vrot.slane %v1046, 1
      %v1252 = vsel %vm1129, %v1249, %v1251
      %v1253 = vrot.slane %v1047, 1
      %v1254 = vsel %vm1129, %v1251, %v1253
      %v1255 = vrot.slane %v1048, 1
      %v1256 = vsel %vm1129, %v1253, %v1255
      %v1257 = vrot.slane %v1049, 1
      %v1258 = vsel %vm1129, %v1255, %v1257
      %v1259 = vrot.slane %v1050, 1
      %v1260 = vsel %vm1129, %v1257, %v1259
      %v1261 = vrot.slane %v1051, 1
      %v1262 = vsel %vm1129, %v1259, %v1261
      %v1263 = vrot.slane %v1052, 1
      %v1264 = vsel %vm1129, %v1261, %v1263
      %v1265 = vrot.slane %v1053, 1
      %v1266 = vsel %vm1129, %v1263, %v1265
      %v1267 = vrot.slane %v1054, 1
      %v1268 = vsel %vm1129, %v1265, %v1267
      %v1269 = vrot.slane %v1055, 1
      %v1270 = vsel %vm1129, %v1267, %v1269
      %v1271 = vrot.slane %v1056, 1
      %v1272 = vsel %vm1129, %v1269, %v1271
      %v1345 = vmax.f32 %v985, %v1132
      %v1346 = vmax.f32 %v986, %v1134
      %v1347 = vmax.f32 %v987, %v1136
      %v1348 = vmax.f32 %v988, %v1138
      %v1349 = vmax.f32 %v989, %v1140
      %v1350 = vmax.f32 %v990, %v1142
      %v1351 = vmax.f32 %v991, %v1144
      %v1352 = vmax.f32 %v992, %v1146
      %v1353 = vmax.f32 %v993, %v1148
      %v1354 = vmax.f32 %v994, %v1150
      %v1355 = vmax.f32 %v995, %v1152
      %v1356 = vmax.f32 %v996, %v1154
      %v1357 = vmax.f32 %v997, %v1156
      %v1358 = vmax.f32 %v998, %v1158
      %v1359 = vmax.f32 %v999, %v1160
      %v1360 = vmax.f32 %v1000, %v1162
      %v1361 = vmax.f32 %v1001, %v1164
      %v1362 = vmax.f32 %v1002, %v1166
      %v1363 = vmax.f32 %v1003, %v1168
      %v1364 = vmax.f32 %v1004, %v1170
      %v1365 = vmax.f32 %v1005, %v1172
      %v1366 = vmax.f32 %v1006, %v1174
      %v1367 = vmax.f32 %v1007, %v1176
      %v1368 = vmax.f32 %v1008, %v1178
      %v1369 = vmax.f32 %v1009, %v1180
      %v1370 = vmax.f32 %v1010, %v1182
      %v1371 = vmax.f32 %v1011, %v1184
      %v1372 = vmax.f32 %v1012, %v1186
      %v1373 = vmax.f32 %v1013, %v1188
      %v1374 = vmax.f32 %v1014, %v1190
      %v1375 = vmax.f32 %v1015, %v1192
      %v1376 = vmax.f32 %v1016, %v1194
      %v1377 = vmax.f32 %v1017, %v1196
      %v1378 = vmax.f32 %v1018, %v1198
      %v1379 = vmax.f32 %v1019, %v1200
      %v1380 = vmax.f32 %v1020, %v1202
      %v1381 = vmax.f32 %v1021, %v1204
      %v1382 = vmax.f32 %v1022, %v1206
      %v1383 = vmax.f32 %v1023, %v1208
      %v1384 = vmax.f32 %v1024, %v1210
      %v1385 = vmax.f32 %v1025, %v1212
      %v1386 = vmax.f32 %v1026, %v1214
      %v1387 = vmax.f32 %v1027, %v1216
      %v1388 = vmax.f32 %v1028, %v1218
      %v1389 = vmax.f32 %v1029, %v1220
      %v1390 = vmax.f32 %v1030, %v1222
      %v1391 = vmax.f32 %v1031, %v1224
      %v1392 = vmax.f32 %v1032, %v1226
      %v1393 = vmax.f32 %v1033, %v1228
      %v1394 = vmax.f32 %v1034, %v1230
      %v1395 = vmax.f32 %v1035, %v1232
      %v1396 = vmax.f32 %v1036, %v1234
      %v1397 = vmax.f32 %v1037, %v1236
      %v1398 = vmax.f32 %v1038, %v1238
      %v1399 = vmax.f32 %v1039, %v1240
      %v1400 = vmax.f32 %v1040, %v1242
      %v1401 = vmax.f32 %v1041, %v1244
      %v1402 = vmax.f32 %v1042, %v1246
      %v1403 = vmax.f32 %v1043, %v1248
      %v1404 = vmax.f32 %v1044, %v1250
      %v1405 = vmax.f32 %v1045, %v1252
      %v1406 = vmax.f32 %v1046, %v1254
      %v1407 = vmax.f32 %v1047, %v1256
      %v1408 = vmax.f32 %v1048, %v1258
      %v1409 = vmax.f32 %v1049, %v1260
      %v1410 = vmax.f32 %v1050, %v1262
      %v1411 = vmax.f32 %v1051, %v1264
      %v1412 = vmax.f32 %v1052, %v1266
      %v1413 = vmax.f32 %v1053, %v1268
      %v1414 = vmax.f32 %v1054, %v1270
      %v1415 = vmax.f32 %v1055, %v1272
      %v1416 = vmax.f32 %v1056, %v1271
      %v1417 = vmax.f32 %v1345, %v1348
      %v1418 = vmax.f32 %v1346, %v1349
      %v1419 = vmax.f32 %v1347, %v1350
      %v1420 = vmax.f32 %v1348, %v1351
      %v1421 = vmax.f32 %v1349, %v1352
      %v1422 = vmax.f32 %v1350, %v1353
      %v1423 = vmax.f32 %v1351, %v1354
      %v1424 = vmax.f32 %v1352, %v1355
      %v1425 = vmax.f32 %v1353, %v1356
      %v1426 = vmax.f32 %v1354, %v1357
      %v1427 = vmax.f32 %v1355, %v1358
      %v1428 = vmax.f32 %v1356, %v1359
      %v1429 = vmax.f32 %v1357, %v1360
      %v1430 = vmax.f32 %v1358, %v1361
      %v1431 = vmax.f32 %v1359, %v1362
      %v1432 = vmax.f32 %v1360, %v1363
      %v1433 = vmax.f32 %v1361, %v1364
      %v1434 = vmax.f32 %v1362, %v1365
      %v1435 = vmax.f32 %v1363, %v1366
      %v1436 = vmax.f32 %v1364, %v1367
      %v1437 = vmax.f32 %v1365, %v1368
      %v1438 = vmax.f32 %v1366, %v1369
      %v1439 = vmax.f32 %v1367, %v1370
      %v1440 = vmax.f32 %v1368, %v1371
      %v1441 = vmax.f32 %v1369, %v1372
      %v1442 = vmax.f32 %v1370, %v1373
      %v1443 = vmax.f32 %v1371, %v1374
      %v1444 = vmax.f32 %v1372, %v1375
      %v1445 = vmax.f32 %v1373, %v1376
      %v1446 = vmax.f32 %v1374, %v1377
      %v1447 = vmax.f32 %v1375, %v1378
      %v1448 = vmax.f32 %v1376, %v1379
      %v1449 = vmax.f32 %v1377, %v1380
      %v1450 = vmax.f32 %v1378, %v1381
      %v1451 = vmax.f32 %v1379, %v1382
      %v1452 = vmax.f32 %v1380, %v1383
      %v1453 = vmax.f32 %v1381, %v1384
      %v1454 = vmax.f32 %v1382, %v1385
      %v1455 = vmax.f32 %v1383, %v1386
      %v1456 = vmax.f32 %v1384, %v1387
      %v1457 = vmax.f32 %v1385, %v1388
      %v1458 = vmax.f32 %v1386, %v1389
      %v1459 = vmax.f32 %v1387, %v1390
      %v1460 = vmax.f32 %v1388, %v1391
      %v1461 = vmax.f32 %v1389, %v1392
      %v1462 = vmax.f32 %v1390, %v1393
      %v1463 = vmax.f32 %v1391, %v1394
      %v1464 = vmax.f32 %v1392, %v1395
      %v1465 = vmax.f32 %v1393, %v1396
      %v1466 = vmax.f32 %v1394, %v1397
      %v1467 = vmax.f32 %v1395, %v1398
      %v1468 = vmax.f32 %v1396, %v1399
      %v1469 = vmax.f32 %v1397, %v1400
      %v1470 = vmax.f32 %v1398, %v1401
      %v1471 = vmax.f32 %v1399, %v1402
      %v1472 = vmax.f32 %v1400, %v1403
      %v1473 = vmax.f32 %v1401, %v1404
      %v1474 = vmax.f32 %v1402, %v1405
      %v1475 = vmax.f32 %v1403, %v1406
      %v1476 = vmax.f32 %v1404, %v1407
      %v1477 = vmax.f32 %v1405, %v1408
      %v1478 = vmax.f32 %v1406, %v1409
      %v1479 = vmax.f32 %v1407, %v1410
      %v1480 = vmax.f32 %v1408, %v1411
      %v1481 = vmax.f32 %v1409, %v1412
      %v1482 = vmax.f32 %v1410, %v1413
      %v1483 = vmax.f32 %v1411, %v1414
      %v1484 = vmax.f32 %v1412, %v1415
      %v1485 = vmax.f32 %v1413, %v1416
      %v1486 = vld [vmem:[%s6] sm:$0xff]
      %v1487 = vld [vmem:[%s6 + $0x8] sm:$0xff]
      %v1488 = vld [vmem:[%s6 + $0x10] sm:$0xff]
      %v1489 = vld [vmem:[%s6 + $0x18] sm:$0xff]
      %v1490 = vld [vmem:[%s6 + $0x20] sm:$0xff]
      %v1491 = vld [vmem:[%s6 + $0x28] sm:$0xff]
      %v1492 = vld [vmem:[%s6 + $0x30] sm:$0xff]
      %v1493 = vld [vmem:[%s6 + $0x38] sm:$0xff]
      %v1494 = vld [vmem:[%s6 + $0x40] sm:$0xff]
      %v1495 = vld [vmem:[%s6 + $0x48] sm:$0xff]
      %v1496 = vld [vmem:[%s6 + $0x50] sm:$0xff]
      %v1497 = vld [vmem:[%s6 + $0x58] sm:$0xff]
      %v1498 = vld [vmem:[%s6 + $0x60] sm:$0xff]
      %v1499 = vld [vmem:[%s6 + $0x68] sm:$0xff]
      %v1500 = vld [vmem:[%s6 + $0x70] sm:$0xff]
      %v1501 = vld [vmem:[%s6 + $0x78] sm:$0xff]
      %v1502 = vld [vmem:[%s6 + $0x80] sm:$0xff]
      %v1503 = vld [vmem:[%s6 + $0x88] sm:$0xff]
      %v1504 = vld [vmem:[%s6 + $0x90] sm:$0xff]
      %v1505 = vld [vmem:[%s6 + $0x98] sm:$0xff]
      %v1506 = vld [vmem:[%s6 + $0xa0] sm:$0xff]
      %v1507 = vld [vmem:[%s6 + $0xa8] sm:$0xff]
      %v1508 = vld [vmem:[%s6 + $0xb0] sm:$0xff]
      %v1509 = vld [vmem:[%s6 + $0xb8] sm:$0xff]
      %v1510 = vld [vmem:[%s6 + $0xc0] sm:$0xff]
      %v1511 = vld [vmem:[%s6 + $0xc8] sm:$0xff]
      %v1512 = vld [vmem:[%s6 + $0xd0] sm:$0xff]
      %v1513 = vld [vmem:[%s6 + $0xd8] sm:$0xff]
      %v1514 = vld [vmem:[%s6 + $0xe0] sm:$0xff]
      %v1515 = vld [vmem:[%s6 + $0xe8] sm:$0xff]
      %v1516 = vld [vmem:[%s6 + $0xf0] sm:$0xff]
      %v1517 = vld [vmem:[%s6 + $0xf8] sm:$0xff]
      %v1518 = vld [vmem:[%s6 + $0x100] sm:$0xff]
      %v1519 = vld [vmem:[%s6 + $0x108] sm:$0xff]
      %v1520 = vld [vmem:[%s6 + $0x110] sm:$0xff]
      %v1521 = vld [vmem:[%s6 + $0x118] sm:$0xff]
      %v1522 = vld [vmem:[%s6 + $0x120] sm:$0xff]
      %v1523 = vld [vmem:[%s6 + $0x128] sm:$0xff]
      %v1524 = vld [vmem:[%s6 + $0x130] sm:$0xff]
      %v1525 = vld [vmem:[%s6 + $0x138] sm:$0xff]
      %v1526 = vld [vmem:[%s6 + $0x140] sm:$0xff]
      %v1527 = vld [vmem:[%s6 + $0x148] sm:$0xff]
      %v1528 = vld [vmem:[%s6 + $0x150] sm:$0xff]
      %v1529 = vld [vmem:[%s6 + $0x158] sm:$0xff]
      %v1530 = vld [vmem:[%s6 + $0x160] sm:$0xff]
      %v1531 = vld [vmem:[%s6 + $0x168] sm:$0xff]
      %v1532 = vld [vmem:[%s6 + $0x170] sm:$0xff]
      %v1533 = vld [vmem:[%s6 + $0x178] sm:$0xff]
      %v1534 = vld [vmem:[%s6 + $0x180] sm:$0xff]
      %v1535 = vld [vmem:[%s6 + $0x188] sm:$0xff]
      %v1536 = vld [vmem:[%s6 + $0x190] sm:$0xff]
      %v1537 = vld [vmem:[%s6 + $0x198] sm:$0xff]
      %v1538 = vld [vmem:[%s6 + $0x1a0] sm:$0xff]
      %v1539 = vld [vmem:[%s6 + $0x1a8] sm:$0xff]
      %v1540 = vld [vmem:[%s6 + $0x1b0] sm:$0xff]
      %v1541 = vld [vmem:[%s6 + $0x1b8] sm:$0xff]
      %v1542 = vld [vmem:[%s6 + $0x1c0] sm:$0xff]
      %v1543 = vld [vmem:[%s6 + $0x1c8] sm:$0xff]
      %v1544 = vld [vmem:[%s6 + $0x1d0] sm:$0xff]
      %v1545 = vld [vmem:[%s6 + $0x1d8] sm:$0xff]
      %v1546 = vld [vmem:[%s6 + $0x1e0] sm:$0xff]
      %v1547 = vld [vmem:[%s6 + $0x1e8] sm:$0xff]
      %v1548 = vld [vmem:[%s6 + $0x1f0] sm:$0xff]
      %v1549 = vld [vmem:[%s6 + $0x1f8] sm:$0xff]
      %v1550 = vld [vmem:[%s6 + $0x200] sm:$0xff]
      %v1551 = vld [vmem:[%s6 + $0x208] sm:$0xff]
      %v1552 = vld [vmem:[%s6 + $0x210] sm:$0xff]
      %v1553 = vld [vmem:[%s6 + $0x218] sm:$0xff]
      %v1554 = vld [vmem:[%s6 + $0x220] sm:$0xff]
      %v1555 = vld [vmem:[%s6 + $0x228] sm:$0xff]
      %v1556 = vld [vmem:[%s6 + $0x230] sm:$0xff]
      %v1557 = vld [vmem:[%s6 + $0x238] sm:$0xff]
      %v1558 = vld [vmem:[%s6 + $0x240] sm:$0xff]
      %v1559 = vld [vmem:[%s6 + $0x248] sm:$0xff]
      %v1560 = vld [vmem:[%s6 + $0x250] sm:$0xff]
      %v1561 = vld [vmem:[%s6 + $0x258] sm:$0xff]
      %v1562 = vld [vmem:[%s6 + $0x260] sm:$0xff]
      %v1563 = vld [vmem:[%s6 + $0x268] sm:$0xff]
      %v1564 = vld [vmem:[%s6 + $0x270] sm:$0xff]
      %v1565 = vld [vmem:[%s6 + $0x278] sm:$0xff]
      %v1566 = vld [vmem:[%s6 + $0x280] sm:$0xff]
      %v1567 = vld [vmem:[%s6 + $0x288] sm:$0xff]
      %v1568 = vld [vmem:[%s6 + $0x290] sm:$0xff]
      %v1569 = vld [vmem:[%s6 + $0x298] sm:$0xff]
      %v1570 = vld [vmem:[%s6 + $0x2a0] sm:$0xff]
      %v1571 = vld [vmem:[%s6 + $0x2a8] sm:$0xff]
      %v1572 = vld [vmem:[%s6 + $0x2b0] sm:$0xff]
      %v1573 = vld [vmem:[%s6 + $0x2b8] sm:$0xff]
      %v1574 = vld [vmem:[%s6 + $0x2c0] sm:$0xff]
      %v1575 = vld [vmem:[%s6 + $0x2c8] sm:$0xff]
      %vm1576 = vcmask 318464
      %v1578 = vsel %vm1576, %v1490, 0
      %v1581 = vsel %vm1576, %v1495, 0
      %v1584 = vsel %vm1576, %v1500, 0
      %v1587 = vsel %vm1576, %v1505, 0
      %v1590 = vsel %vm1576, %v1510, 0
      %v1593 = vsel %vm1576, %v1515, 0
      %v1596 = vsel %vm1576, %v1520, 0
      %v1599 = vsel %vm1576, %v1525, 0
      %v1602 = vsel %vm1576, %v1530, 0
      %v1605 = vsel %vm1576, %v1535, 0
      %v1608 = vsel %vm1576, %v1540, 0
      %v1611 = vsel %vm1576, %v1545, 0
      %v1614 = vsel %vm1576, %v1550, 0
      %v1617 = vsel %vm1576, %v1555, 0
      %v1620 = vsel %vm1576, %v1560, 0
      %v1623 = vsel %vm1576, %v1565, 0
      %v1626 = vsel %vm1576, %v1570, 0
      %v1629 = vsel %vm1576, %v1575, 0
      %v1632 = vsel %vm1129, %v1485, 0
      %1634 = vmatpush.msra.mxu0 %v1432
      %1635 = vmatpush.msra.mxu0 %v1431
      %1636 = vmatpush.msra.mxu0 %v1430
      %1637 = vmatpush.msra.mxu0 %v1429
      %1638 = vmatpush.msra.mxu0 %v1428
      %1639 = vmatpush.msra.mxu0 %v1427
      %1640 = vmatpush.msra.mxu0 %v1426
      %1641 = vmatpush.msra.mxu0 %v1425
      %1642 = vmatpush.msra.mxu0 %v1424
      %1643 = vmatpush.msra.mxu0 %v1423
      %1644 = vmatpush.msra.mxu0 %v1422
      %1645 = vmatpush.msra.mxu0 %v1421
      %1646 = vmatpush.msra.mxu0 %v1420
      %1647 = vmatpush.msra.mxu0 %v1419
      %1648 = vmatpush.msra.mxu0 %v1418
      %1649 = vmatpush.msra.mxu0 %v1417
      %1650 = vmatmul.f32.gmra.mxu0 %v1486
      %v1651 = vpop.f32.mrf.mxu0
      %v1652 = vadd.f32 0.0, %v1651
      %1653 = vmatmul.f32.gmra.mxu0 %v1491
      %v1654 = vpop.f32.mrf.mxu0
      %v1655 = vadd.f32 0.0, %v1654
      %1656 = vmatmul.f32.gmra.mxu0 %v1496
      %v1657 = vpop.f32.mrf.mxu0
      %v1658 = vadd.f32 0.0, %v1657
      %1659 = vmatmul.f32.gmra.mxu0 %v1501
      %v1660 = vpop.f32.mrf.mxu0
      %v1661 = vadd.f32 0.0, %v1660
      %1662 = vmatmul.f32.gmra.mxu0 %v1506
      %v1663 = vpop.f32.mrf.mxu0
      %v1664 = vadd.f32 0.0, %v1663
      %1665 = vmatmul.f32.gmra.mxu0 %v1511
      %v1666 = vpop.f32.mrf.mxu0
      %v1667 = vadd.f32 0.0, %v1666
      %1668 = vmatmul.f32.gmra.mxu0 %v1516
      %v1669 = vpop.f32.mrf.mxu0
      %v1670 = vadd.f32 0.0, %v1669
      %1671 = vmatmul.f32.gmra.mxu0 %v1521
      %v1672 = vpop.f32.mrf.mxu0
      %v1673 = vadd.f32 0.0, %v1672
      %1674 = vmatmul.f32.gmra.mxu0 %v1526
      %v1675 = vpop.f32.mrf.mxu0
      %v1676 = vadd.f32 0.0, %v1675
      %1677 = vmatmul.f32.gmra.mxu0 %v1531
      %v1678 = vpop.f32.mrf.mxu0
      %v1679 = vadd.f32 0.0, %v1678
      %1680 = vmatmul.f32.gmra.mxu0 %v1536
      %v1681 = vpop.f32.mrf.mxu0
      %v1682 = vadd.f32 0.0, %v1681
      %1683 = vmatmul.f32.gmra.mxu0 %v1541
      %v1684 = vpop.f32.mrf.mxu0
      %v1685 = vadd.f32 0.0, %v1684
      %1686 = vmatmul.f32.gmra.mxu0 %v1546
      %v1687 = vpop.f32.mrf.mxu0
      %v1688 = vadd.f32 0.0, %v1687
      %1689 = vmatmul.f32.gmra.mxu0 %v1551
      %v1690 = vpop.f32.mrf.mxu0
      %v1691 = vadd.f32 0.0, %v1690
      %1692 = vmatmul.f32.gmra.mxu0 %v1556
      %v1693 = vpop.f32.mrf.mxu0
      %v1694 = vadd.f32 0.0, %v1693
      %1695 = vmatmul.f32.gmra.mxu0 %v1561
      %v1696 = vpop.f32.mrf.mxu0
      %v1697 = vadd.f32 0.0, %v1696
      %1698 = vmatmul.f32.gmra.mxu0 %v1566
      %v1699 = vpop.f32.mrf.mxu0
      %v1700 = vadd.f32 0.0, %v1699
      %1701 = vmatmul.f32.gmra.mxu0 %v1571
      %v1702 = vpop.f32.mrf.mxu0
      %v1703 = vadd.f32 0.0, %v1702
      %1704 = vdwg.mxu0
      %1705 = vmatpush.msra.mxu0 %v1448
      %1706 = vmatpush.msra.mxu0 %v1447
      %1707 = vmatpush.msra.mxu0 %v1446
      %1708 = vmatpush.msra.mxu0 %v1445
      %1709 = vmatpush.msra.mxu0 %v1444
      %1710 = vmatpush.msra.mxu0 %v1443
      %1711 = vmatpush.msra.mxu0 %v1442
      %1712 = vmatpush.msra.mxu0 %v1441
      %1713 = vmatpush.msra.mxu0 %v1440
      %1714 = vmatpush.msra.mxu0 %v1439
      %1715 = vmatpush.msra.mxu0 %v1438
      %1716 = vmatpush.msra.mxu0 %v1437
      %1717 = vmatpush.msra.mxu0 %v1436
      %1718 = vmatpush.msra.mxu0 %v1435
      %1719 = vmatpush.msra.mxu0 %v1434
      %1720 = vmatpush.msra.mxu0 %v1433
      %1721 = vmatmul.f32.gmra.mxu0 %v1487
      %v1722 = vpop.f32.mrf.mxu0
      %v1723 = vadd.f32 %v1652, %v1722
      %1724 = vmatmul.f32.gmra.mxu0 %v1492
      %v1725 = vpop.f32.mrf.mxu0
      %v1726 = vadd.f32 %v1655, %v1725
      %1727 = vmatmul.f32.gmra.mxu0 %v1497
      %v1728 = vpop.f32.mrf.mxu0
      %v1729 = vadd.f32 %v1658, %v1728
      %1730 = vmatmul.f32.gmra.mxu0 %v1502
      %v1731 = vpop.f32.mrf.mxu0
      %v1732 = vadd.f32 %v1661, %v1731
      %1733 = vmatmul.f32.gmra.mxu0 %v1507
      %v1734 = vpop.f32.mrf.mxu0
      %v1735 = vadd.f32 %v1664, %v1734
      %1736 = vmatmul.f32.gmra.mxu0 %v1512
      %v1737 = vpop.f32.mrf.mxu0
      %v1738 = vadd.f32 %v1667, %v1737
      %1739 = vmatmul.f32.gmra.mxu0 %v1517
      %v1740 = vpop.f32.mrf.mxu0
      %v1741 = vadd.f32 %v1670, %v1740
      %1742 = vmatmul.f32.gmra.mxu0 %v1522
      %v1743 = vpop.f32.mrf.mxu0
      %v1744 = vadd.f32 %v1673, %v1743
      %1745 = vmatmul.f32.gmra.mxu0 %v1527
      %v1746 = vpop.f32.mrf.mxu0
      %v1747 = vadd.f32 %v1676, %v1746
      %1748 = vmatmul.f32.gmra.mxu0 %v1532
      %v1749 = vpop.f32.mrf.mxu0
      %v1750 = vadd.f32 %v1679, %v1749
      %1751 = vmatmul.f32.gmra.mxu0 %v1537
      %v1752 = vpop.f32.mrf.mxu0
      %v1753 = vadd.f32 %v1682, %v1752
      %1754 = vmatmul.f32.gmra.mxu0 %v1542
      %v1755 = vpop.f32.mrf.mxu0
      %v1756 = vadd.f32 %v1685, %v1755
      %1757 = vmatmul.f32.gmra.mxu0 %v1547
      %v1758 = vpop.f32.mrf.mxu0
      %v1759 = vadd.f32 %v1688, %v1758
      %1760 = vmatmul.f32.gmra.mxu0 %v1552
      %v1761 = vpop.f32.mrf.mxu0
      %v1762 = vadd.f32 %v1691, %v1761
      %1763 = vmatmul.f32.gmra.mxu0 %v1557
      %v1764 = vpop.f32.mrf.mxu0
      %v1765 = vadd.f32 %v1694, %v1764
      %1766 = vmatmul.f32.gmra.mxu0 %v1562
      %v1767 = vpop.f32.mrf.mxu0
      %v1768 = vadd.f32 %v1697, %v1767
      %1769 = vmatmul.f32.gmra.mxu0 %v1567
      %v1770 = vpop.f32.mrf.mxu0
      %v1771 = vadd.f32 %v1700, %v1770
      %1772 = vmatmul.f32.gmra.mxu0 %v1572
      %v1773 = vpop.f32.mrf.mxu0
      %v1774 = vadd.f32 %v1703, %v1773
      %1775 = vdwg.mxu0
      %1776 = vmatpush.msra.mxu0 %v1464
      %1777 = vmatpush.msra.mxu0 %v1463
      %1778 = vmatpush.msra.mxu0 %v1462
      %1779 = vmatpush.msra.mxu0 %v1461
      %1780 = vmatpush.msra.mxu0 %v1460
      %1781 = vmatpush.msra.mxu0 %v1459
      %1782 = vmatpush.msra.mxu0 %v1458
      %1783 = vmatpush.msra.mxu0 %v1457
      %1784 = vmatpush.msra.mxu0 %v1456
      %1785 = vmatpush.msra.mxu0 %v1455
      %1786 = vmatpush.msra.mxu0 %v1454
      %1787 = vmatpush.msra.mxu0 %v1453
      %1788 = vmatpush.msra.mxu0 %v1452
      %1789 = vmatpush.msra.mxu0 %v1451
      %1790 = vmatpush.msra.mxu0 %v1450
      %1791 = vmatpush.msra.mxu0 %v1449
      %1792 = vmatmul.f32.gmra.mxu0 %v1488
      %v1793 = vpop.f32.mrf.mxu0
      %v1794 = vadd.f32 %v1723, %v1793
      %1795 = vmatmul.f32.gmra.mxu0 %v1493
      %v1796 = vpop.f32.mrf.mxu0
      %v1797 = vadd.f32 %v1726, %v1796
      %1798 = vmatmul.f32.gmra.mxu0 %v1498
      %v1799 = vpop.f32.mrf.mxu0
      %v1800 = vadd.f32 %v1729, %v1799
      %1801 = vmatmul.f32.gmra.mxu0 %v1503
      %v1802 = vpop.f32.mrf.mxu0
      %v1803 = vadd.f32 %v1732, %v1802
      %1804 = vmatmul.f32.gmra.mxu0 %v1508
      %v1805 = vpop.f32.mrf.mxu0
      %v1806 = vadd.f32 %v1735, %v1805
      %1807 = vmatmul.f32.gmra.mxu0 %v1513
      %v1808 = vpop.f32.mrf.mxu0
      %v1809 = vadd.f32 %v1738, %v1808
      %1810 = vmatmul.f32.gmra.mxu0 %v1518
      %v1811 = vpop.f32.mrf.mxu0
      %v1812 = vadd.f32 %v1741, %v1811
      %1813 = vmatmul.f32.gmra.mxu0 %v1523
      %v1814 = vpop.f32.mrf.mxu0
      %v1815 = vadd.f32 %v1744, %v1814
      %1816 = vmatmul.f32.gmra.mxu0 %v1528
      %v1817 = vpop.f32.mrf.mxu0
      %v1818 = vadd.f32 %v1747, %v1817
      %1819 = vmatmul.f32.gmra.mxu0 %v1533
      %v1820 = vpop.f32.mrf.mxu0
      %v1821 = vadd.f32 %v1750, %v1820
      %1822 = vmatmul.f32.gmra.mxu0 %v1538
      %v1823 = vpop.f32.mrf.mxu0
      %v1824 = vadd.f32 %v1753, %v1823
      %1825 = vmatmul.f32.gmra.mxu0 %v1543
      %v1826 = vpop.f32.mrf.mxu0
      %v1827 = vadd.f32 %v1756, %v1826
      %1828 = vmatmul.f32.gmra.mxu0 %v1548
      %v1829 = vpop.f32.mrf.mxu0
      %v1830 = vadd.f32 %v1759, %v1829
      %1831 = vmatmul.f32.gmra.mxu0 %v1553
      %v1832 = vpop.f32.mrf.mxu0
      %v1833 = vadd.f32 %v1762, %v1832
      %1834 = vmatmul.f32.gmra.mxu0 %v1558
      %v1835 = vpop.f32.mrf.mxu0
      %v1836 = vadd.f32 %v1765, %v1835
      %1837 = vmatmul.f32.gmra.mxu0 %v1563
      %v1838 = vpop.f32.mrf.mxu0
      %v1839 = vadd.f32 %v1768, %v1838
      %1840 = vmatmul.f32.gmra.mxu0 %v1568
      %v1841 = vpop.f32.mrf.mxu0
      %v1842 = vadd.f32 %v1771, %v1841
      %1843 = vmatmul.f32.gmra.mxu0 %v1573
      %v1844 = vpop.f32.mrf.mxu0
      %v1845 = vadd.f32 %v1774, %v1844
      %1846 = vdwg.mxu0
      %1847 = vmatpush.msra.mxu0 %v1480
      %1848 = vmatpush.msra.mxu0 %v1479
      %1849 = vmatpush.msra.mxu0 %v1478
      %1850 = vmatpush.msra.mxu0 %v1477
      %1851 = vmatpush.msra.mxu0 %v1476
      %1852 = vmatpush.msra.mxu0 %v1475
      %1853 = vmatpush.msra.mxu0 %v1474
      %1854 = vmatpush.msra.mxu0 %v1473
      %1855 = vmatpush.msra.mxu0 %v1472
      %1856 = vmatpush.msra.mxu0 %v1471
      %1857 = vmatpush.msra.mxu0 %v1470
      %1858 = vmatpush.msra.mxu0 %v1469
      %1859 = vmatpush.msra.mxu0 %v1468
      %1860 = vmatpush.msra.mxu0 %v1467
      %1861 = vmatpush.msra.mxu0 %v1466
      %1862 = vmatpush.msra.mxu0 %v1465
      %1863 = vmatmul.f32.gmra.mxu0 %v1489
      %v1864 = vpop.f32.mrf.mxu0
      %v1865 = vadd.f32 %v1794, %v1864
      %1866 = vmatmul.f32.gmra.mxu0 %v1494
      %v1867 = vpop.f32.mrf.mxu0
      %v1868 = vadd.f32 %v1797, %v1867
      %1869 = vmatmul.f32.gmra.mxu0 %v1499
      %v1870 = vpop.f32.mrf.mxu0
      %v1871 = vadd.f32 %v1800, %v1870
      %1872 = vmatmul.f32.gmra.mxu0 %v1504
      %v1873 = vpop.f32.mrf.mxu0
      %v1874 = vadd.f32 %v1803, %v1873
      %1875 = vmatmul.f32.gmra.mxu0 %v1509
      %v1876 = vpop.f32.mrf.mxu0
      %v1877 = vadd.f32 %v1806, %v1876
      %1878 = vmatmul.f32.gmra.mxu0 %v1514
      %v1879 = vpop.f32.mrf.mxu0
      %v1880 = vadd.f32 %v1809, %v1879
      %1881 = vmatmul.f32.gmra.mxu0 %v1519
      %v1882 = vpop.f32.mrf.mxu0
      %v1883 = vadd.f32 %v1812, %v1882
      %1884 = vmatmul.f32.gmra.mxu0 %v1524
      %v1885 = vpop.f32.mrf.mxu0
      %v1886 = vadd.f32 %v1815, %v1885
      %1887 = vmatmul.f32.gmra.mxu0 %v1529
      %v1888 = vpop.f32.mrf.mxu0
      %v1889 = vadd.f32 %v1818, %v1888
      %1890 = vmatmul.f32.gmra.mxu0 %v1534
      %v1891 = vpop.f32.mrf.mxu0
      %v1892 = vadd.f32 %v1821, %v1891
      %1893 = vmatmul.f32.gmra.mxu0 %v1539
      %v1894 = vpop.f32.mrf.mxu0
      %v1895 = vadd.f32 %v1824, %v1894
      %1896 = vmatmul.f32.gmra.mxu0 %v1544
      %v1897 = vpop.f32.mrf.mxu0
      %v1898 = vadd.f32 %v1827, %v1897
      %1899 = vmatmul.f32.gmra.mxu0 %v1549
      %v1900 = vpop.f32.mrf.mxu0
      %v1901 = vadd.f32 %v1830, %v1900
      %1902 = vmatmul.f32.gmra.mxu0 %v1554
      %v1903 = vpop.f32.mrf.mxu0
      %v1904 = vadd.f32 %v1833, %v1903
      %1905 = vmatmul.f32.gmra.mxu0 %v1559
      %v1906 = vpop.f32.mrf.mxu0
      %v1907 = vadd.f32 %v1836, %v1906
      %1908 = vmatmul.f32.gmra.mxu0 %v1564
      %v1909 = vpop.f32.mrf.mxu0
      %v1910 = vadd.f32 %v1839, %v1909
      %1911 = vmatmul.f32.gmra.mxu0 %v1569
      %v1912 = vpop.f32.mrf.mxu0
      %v1913 = vadd.f32 %v1842, %v1912
      %1914 = vmatmul.f32.gmra.mxu0 %v1574
      %v1915 = vpop.f32.mrf.mxu0
      %v1916 = vadd.f32 %v1845, %v1915
      %1917 = vdwg.mxu0
      %1918 = vmatpush.msra.mxu0 0.0
      %1919 = vmatpush.msra.mxu0 0.0
      %1920 = vmatpush.msra.mxu0 0.0
      %1921 = vmatpush.msra.mxu0 0.0
      %1922 = vmatpush.msra.mxu0 0.0
      %1923 = vmatpush.msra.mxu0 0.0
      %1924 = vmatpush.msra.mxu0 0.0
      %1925 = vmatpush.msra.mxu0 0.0
      %1926 = vmatpush.msra.mxu0 0.0
      %1927 = vmatpush.msra.mxu0 0.0
      %1928 = vmatpush.msra.mxu0 0.0
      %1929 = vmatpush.msra.mxu0 %v1632
      %1930 = vmatpush.msra.mxu0 %v1484
      %1931 = vmatpush.msra.mxu0 %v1483
      %1932 = vmatpush.msra.mxu0 %v1482
      %1933 = vmatpush.msra.mxu0 %v1481
      %1934 = vmatmul.f32.gmra.mxu0 %v1578
      %v1935 = vpop.f32.mrf.mxu0
      %v1936 = vadd.f32 %v1865, %v1935
      %1937 = vmatmul.f32.gmra.mxu0 %v1581
      %v1938 = vpop.f32.mrf.mxu0
      %v1939 = vadd.f32 %v1868, %v1938
      %1940 = vmatmul.f32.gmra.mxu0 %v1584
      %v1941 = vpop.f32.mrf.mxu0
      %v1942 = vadd.f32 %v1871, %v1941
      %1943 = vmatmul.f32.gmra.mxu0 %v1587
      %v1944 = vpop.f32.mrf.mxu0
      %v1945 = vadd.f32 %v1874, %v1944
      %1946 = vmatmul.f32.gmra.mxu0 %v1590
      %v1947 = vpop.f32.mrf.mxu0
      %v1948 = vadd.f32 %v1877, %v1947
      %1949 = vmatmul.f32.gmra.mxu0 %v1593
      %v1950 = vpop.f32.mrf.mxu0
      %v1951 = vadd.f32 %v1880, %v1950
      %1952 = vmatmul.f32.gmra.mxu0 %v1596
      %v1953 = vpop.f32.mrf.mxu0
      %v1954 = vadd.f32 %v1883, %v1953
      %1955 = vmatmul.f32.gmra.mxu0 %v1599
      %v1956 = vpop.f32.mrf.mxu0
      %v1957 = vadd.f32 %v1886, %v1956
      %1958 = vmatmul.f32.gmra.mxu0 %v1602
      %v1959 = vpop.f32.mrf.mxu0
      %v1960 = vadd.f32 %v1889, %v1959
      %1961 = vmatmul.f32.gmra.mxu0 %v1605
      %v1962 = vpop.f32.mrf.mxu0
      %v1963 = vadd.f32 %v1892, %v1962
      %1964 = vmatmul.f32.gmra.mxu0 %v1608
      %v1965 = vpop.f32.mrf.mxu0
      %v1966 = vadd.f32 %v1895, %v1965
      %1967 = vmatmul.f32.gmra.mxu0 %v1611
      %v1968 = vpop.f32.mrf.mxu0
      %v1969 = vadd.f32 %v1898, %v1968
      %1970 = vmatmul.f32.gmra.mxu0 %v1614
      %v1971 = vpop.f32.mrf.mxu0
      %v1972 = vadd.f32 %v1901, %v1971
      %1973 = vmatmul.f32.gmra.mxu0 %v1617
      %v1974 = vpop.f32.mrf.mxu0
      %v1975 = vadd.f32 %v1904, %v1974
      %1976 = vmatmul.f32.gmra.mxu0 %v1620
      %v1977 = vpop.f32.mrf.mxu0
      %v1978 = vadd.f32 %v1907, %v1977
      %1979 = vmatmul.f32.gmra.mxu0 %v1623
      %v1980 = vpop.f32.mrf.mxu0
      %v1981 = vadd.f32 %v1910, %v1980
      %1982 = vmatmul.f32.gmra.mxu0 %v1626
      %v1983 = vpop.f32.mrf.mxu0
      %v1984 = vadd.f32 %v1913, %v1983
      %1985 = vmatmul.f32.gmra.mxu0 %v1629
      %v1986 = vpop.f32.mrf.mxu0
      %v1987 = vadd.f32 %v1916, %v1986
      %1988 = vdwg.mxu0
      %v1989 = vld [vmem:[%s4] sm:$0xff]
      %v1990 = vld [vmem:[%s4 + $0x8] sm:$0x3]
      %v1991 = vld [vmem:[%s4 + $0xa] sm:$0xff]
      %v1992 = vld [vmem:[%s4 + $0x12] sm:$0x3]
      %v2005 = vrot.slane %v1936, 1
      %v2006 = vrot.slane %v1939, 1
      %v2007 = vsel %vm1129, %v2005, %v2006
      %v2008 = vrot.slane %v1942, 1
      %v2009 = vsel %vm1129, %v2006, %v2008
      %v2010 = vrot.slane %v1945, 1
      %v2011 = vsel %vm1129, %v2008, %v2010
      %v2012 = vrot.slane %v1948, 1
      %v2013 = vsel %vm1129, %v2010, %v2012
      %v2014 = vrot.slane %v1951, 1
      %v2015 = vsel %vm1129, %v2012, %v2014
      %v2016 = vrot.slane %v1954, 1
      %v2017 = vsel %vm1129, %v2014, %v2016
      %v2018 = vrot.slane %v1957, 1
      %v2019 = vsel %vm1129, %v2016, %v2018
      %v2020 = vrot.slane %v1960, 1
      %v2021 = vsel %vm1129, %v2018, %v2020
      %v2022 = vrot.slane %v1963, 1
      %v2023 = vsel %vm1129, %v2020, %v2022
      %v2024 = vrot.slane %v1966, 1
      %v2025 = vsel %vm1129, %v2022, %v2024
      %v2026 = vrot.slane %v1969, 1
      %v2027 = vsel %vm1129, %v2024, %v2026
      %vm2028 = vcmask 80896
      %v2029 = vsel %vm2028, %v2007, 0
      %v2031 = vsel %vm2028, %v2009, 0
      %v2033 = vsel %vm2028, %v2011, 0
      %v2035 = vsel %vm2028, %v2013, 0
      %v2037 = vsel %vm2028, %v2015, 0
      %v2039 = vsel %vm2028, %v2017, 0
      %v2041 = vsel %vm2028, %v2019, 0
      %v2043 = vsel %vm2028, %v2021, 0
      %v2045 = vsel %vm2028, %v2023, 0
      %v2047 = vsel %vm2028, %v2025, 0
      %v2049 = vsel %vm2028, %v2027, 0
      %v2051 = vsel %vm2028, %v2026, 0
      %vm2053 = vcmask 1041408
      %v2055 = vsel %vm2053, %v1992, 0
      %2057 = vmatpush.msra.mxu0 0.0
      %2058 = vmatpush.msra.mxu0 0.0
      %2059 = vmatpush.msra.mxu0 0.0
      %2060 = vmatpush.msra.mxu0 0.0
      %2061 = vmatpush.msra.mxu0 0.0
      %2062 = vmatpush.msra.mxu0 0.0
      %2063 = vmatpush.msra.mxu0 0.0
      %2064 = vmatpush.msra.mxu0 0.0
      %2065 = vmatpush.msra.mxu0 0.0
      %2066 = vmatpush.msra.mxu0 0.0
      %2067 = vmatpush.msra.mxu0 0.0
      %2068 = vmatpush.msra.mxu0 0.0
      %2069 = vmatpush.msra.mxu0 0.0
      %2070 = vmatpush.msra.mxu0 0.0
      %2071 = vmatpush.msra.mxu0 %v2055
      %2072 = vmatpush.msra.mxu0 %v1991
      %2073 = vmatmul.f32.gmra.mxu0 %v2029
      %v2074 = vpop.f32.mrf.mxu0
      %v2075 = vadd.f32 0.0, %v2074
      %2076 = vmatmul.f32.gmra.mxu0 %v2031
      %v2077 = vpop.f32.mrf.mxu0
      %v2078 = vadd.f32 0.0, %v2077
      %2079 = vmatmul.f32.gmra.mxu0 %v2033
      %v2080 = vpop.f32.mrf.mxu0
      %v2081 = vadd.f32 0.0, %v2080
      %2082 = vmatmul.f32.gmra.mxu0 %v2035
      %v2083 = vpop.f32.mrf.mxu0
      %v2084 = vadd.f32 0.0, %v2083
      %2085 = vmatmul.f32.gmra.mxu0 %v2037
      %v2086 = vpop.f32.mrf.mxu0
      %v2087 = vadd.f32 0.0, %v2086
      %2088 = vmatmul.f32.gmra.mxu0 %v2039
      %v2089 = vpop.f32.mrf.mxu0
      %v2090 = vadd.f32 0.0, %v2089
      %2091 = vmatmul.f32.gmra.mxu0 %v2041
      %v2092 = vpop.f32.mrf.mxu0
      %v2093 = vadd.f32 0.0, %v2092
      %2094 = vmatmul.f32.gmra.mxu0 %v2043
      %v2095 = vpop.f32.mrf.mxu0
      %v2096 = vadd.f32 0.0, %v2095
      %2097 = vmatmul.f32.gmra.mxu0 %v2045
      %v2098 = vpop.f32.mrf.mxu0
      %v2099 = vadd.f32 0.0, %v2098
      %2100 = vmatmul.f32.gmra.mxu0 %v2047
      %v2101 = vpop.f32.mrf.mxu0
      %v2102 = vadd.f32 0.0, %v2101
      %2103 = vmatmul.f32.gmra.mxu0 %v2049
      %v2104 = vpop.f32.mrf.mxu0
      %v2105 = vadd.f32 0.0, %v2104
      %2106 = vmatmul.f32.gmra.mxu0 %v2051
      %v2107 = vpop.f32.mrf.mxu0
      %v2108 = vadd.f32 0.0, %v2107
      %2109 = vdwg.mxu0
      %v2110 = vsel %vm2028, %v1936, 0
      %v2112 = vsel %vm2028, %v1939, 0
      %v2114 = vsel %vm2028, %v1942, 0
      %v2116 = vsel %vm2028, %v1945, 0
      %v2118 = vsel %vm2028, %v1948, 0
      %v2120 = vsel %vm2028, %v1951, 0
      %v2122 = vsel %vm2028, %v1954, 0
      %v2124 = vsel %vm2028, %v1957, 0
      %v2126 = vsel %vm2028, %v1960, 0
      %v2128 = vsel %vm2028, %v1963, 0
      %v2130 = vsel %vm2028, %v1966, 0
      %v2132 = vsel %vm2028, %v1969, 0
      %v2135 = vsel %vm2053, %v1990, 0
      %2137 = vmatpush.msra.mxu0 0.0
      %2138 = vmatpush.msra.mxu0 0.0
      %2139 = vmatpush.msra.mxu0 0.0
      %2140 = vmatpush.msra.mxu0 0.0
      %2141 = vmatpush.msra.mxu0 0.0
      %2142 = vmatpush.msra.mxu0 0.0
      %2143 = vmatpush.msra.mxu0 0.0
      %2144 = vmatpush.msra.mxu0 0.0
      %2145 = vmatpush.msra.mxu0 0.0
      %2146 = vmatpush.msra.mxu0 0.0
      %2147 = vmatpush.msra.mxu0 0.0
      %2148 = vmatpush.msra.mxu0 0.0
      %2149 = vmatpush.msra.mxu0 0.0
      %2150 = vmatpush.msra.mxu0 0.0
      %2151 = vmatpush.msra.mxu0 %v2135
      %2152 = vmatpush.msra.mxu0 %v1989
      %2153 = vmatmul.f32.gmra.mxu0 %v2110
      %v2154 = vpop.f32.mrf.mxu0
      %v2155 = vadd.f32 %v2075, %v2154
      %2156 = vmatmul.f32.gmra.mxu0 %v2112
      %v2157 = vpop.f32.mrf.mxu0
      %v2158 = vadd.f32 %v2078, %v2157
      %2159 = vmatmul.f32.gmra.mxu0 %v2114
      %v2160 = vpop.f32.mrf.mxu0
      %v2161 = vadd.f32 %v2081, %v2160
      %2162 = vmatmul.f32.gmra.mxu0 %v2116
      %v2163 = vpop.f32.mrf.mxu0
      %v2164 = vadd.f32 %v2084, %v2163
      %2165 = vmatmul.f32.gmra.mxu0 %v2118
      %v2166 = vpop.f32.mrf.mxu0
      %v2167 = vadd.f32 %v2087, %v2166
      %2168 = vmatmul.f32.gmra.mxu0 %v2120
      %v2169 = vpop.f32.mrf.mxu0
      %v2170 = vadd.f32 %v2090, %v2169
      %2171 = vmatmul.f32.gmra.mxu0 %v2122
      %v2172 = vpop.f32.mrf.mxu0
      %v2173 = vadd.f32 %v2093, %v2172
      %2174 = vmatmul.f32.gmra.mxu0 %v2124
      %v2175 = vpop.f32.mrf.mxu0
      %v2176 = vadd.f32 %v2096, %v2175
      %2177 = vmatmul.f32.gmra.mxu0 %v2126
      %v2178 = vpop.f32.mrf.mxu0
      %v2179 = vadd.f32 %v2099, %v2178
      %2180 = vmatmul.f32.gmra.mxu0 %v2128
      %v2181 = vpop.f32.mrf.mxu0
      %v2182 = vadd.f32 %v2102, %v2181
      %2183 = vmatmul.f32.gmra.mxu0 %v2130
      %v2184 = vpop.f32.mrf.mxu0
      %v2185 = vadd.f32 %v2105, %v2184
      %2186 = vmatmul.f32.gmra.mxu0 %v2132
      %v2187 = vpop.f32.mrf.mxu0
      %v2188 = vadd.f32 %v2108, %v2187
      %2189 = vdwg.mxu0
      %v2190 = vld [vmem:[%s4 + $0x14] sm:$0xff]
      %v2191 = vld [vmem:[%s4 + $0x1c] sm:$0x3]
      %vm2192 = vcmask 1045504
      %v2193 = vrot.slane %v1936, 2
      %v2194 = vrot.slane %v1939, 2
      %v2195 = vsel %vm2192, %v2193, %v2194
      %v2196 = vrot.slane %v1942, 2
      %v2197 = vsel %vm2192, %v2194, %v2196
      %v2198 = vrot.slane %v1945, 2
      %v2199 = vsel %vm2192, %v2196, %v2198
      %v2200 = vrot.slane %v1948, 2
      %v2201 = vsel %vm2192, %v2198, %v2200
      %v2202 = vrot.slane %v1951, 2
      %v2203 = vsel %vm2192, %v2200, %v2202
      %v2204 = vrot.slane %v1954, 2
      %v2205 = vsel %vm2192, %v2202, %v2204
      %v2206 = vrot.slane %v1957, 2
      %v2207 = vsel %vm2192, %v2204, %v2206
      %v2208 = vrot.slane %v1960, 2
      %v2209 = vsel %vm2192, %v2206, %v2208
      %v2210 = vrot.slane %v1963, 2
      %v2211 = vsel %vm2192, %v2208, %v2210
      %v2212 = vrot.slane %v1966, 2
      %v2213 = vsel %vm2192, %v2210, %v2212
      %v2214 = vrot.slane %v1969, 2
      %v2215 = vsel %vm2192, %v2212, %v2214
      %v2216 = vsel %vm2028, %v2195, 0
      %v2218 = vsel %vm2028, %v2197, 0
      %v2220 = vsel %vm2028, %v2199, 0
      %v2222 = vsel %vm2028, %v2201, 0
      %v2224 = vsel %vm2028, %v2203, 0
      %v2226 = vsel %vm2028, %v2205, 0
      %v2228 = vsel %vm2028, %v2207, 0
      %v2230 = vsel %vm2028, %v2209, 0
      %v2232 = vsel %vm2028, %v2211, 0
      %v2234 = vsel %vm2028, %v2213, 0
      %v2236 = vsel %vm2028, %v2215, 0
      %v2238 = vsel %vm2028, %v2214, 0
      %v2241 = vsel %vm2053, %v2191, 0
      %2243 = vmatpush.msra.mxu0 0.0
      %2244 = vmatpush.msra.mxu0 0.0
      %2245 = vmatpush.msra.mxu0 0.0
      %2246 = vmatpush.msra.mxu0 0.0
      %2247 = vmatpush.msra.mxu0 0.0
      %2248 = vmatpush.msra.mxu0 0.0
      %2249 = vmatpush.msra.mxu0 0.0
      %2250 = vmatpush.msra.mxu0 0.0
      %2251 = vmatpush.msra.mxu0 0.0
      %2252 = vmatpush.msra.mxu0 0.0
      %2253 = vmatpush.msra.mxu0 0.0
      %2254 = vmatpush.msra.mxu0 0.0
      %2255 = vmatpush.msra.mxu0 0.0
      %2256 = vmatpush.msra.mxu0 0.0
      %2257 = vmatpush.msra.mxu0 %v2241
      %2258 = vmatpush.msra.mxu0 %v2190
      %2259 = vmatmul.f32.gmra.mxu0 %v2216
      %v2260 = vpop.f32.mrf.mxu0
      %v2261 = vadd.f32 0.0, %v2260
      %2262 = vmatmul.f32.gmra.mxu0 %v2218
      %v2263 = vpop.f32.mrf.mxu0
      %v2264 = vadd.f32 0.0, %v2263
      %2265 = vmatmul.f32.gmra.mxu0 %v2220
      %v2266 = vpop.f32.mrf.mxu0
      %v2267 = vadd.f32 0.0, %v2266
      %2268 = vmatmul.f32.gmra.mxu0 %v2222
      %v2269 = vpop.f32.mrf.mxu0
      %v2270 = vadd.f32 0.0, %v2269
      %2271 = vmatmul.f32.gmra.mxu0 %v2224
      %v2272 = vpop.f32.mrf.mxu0
      %v2273 = vadd.f32 0.0, %v2272
      %2274 = vmatmul.f32.gmra.mxu0 %v2226
      %v2275 = vpop.f32.mrf.mxu0
      %v2276 = vadd.f32 0.0, %v2275
      %2277 = vmatmul.f32.gmra.mxu0 %v2228
      %v2278 = vpop.f32.mrf.mxu0
      %v2279 = vadd.f32 0.0, %v2278
      %2280 = vmatmul.f32.gmra.mxu0 %v2230
      %v2281 = vpop.f32.mrf.mxu0
      %v2282 = vadd.f32 0.0, %v2281
      %2283 = vmatmul.f32.gmra.mxu0 %v2232
      %v2284 = vpop.f32.mrf.mxu0
      %v2285 = vadd.f32 0.0, %v2284
      %2286 = vmatmul.f32.gmra.mxu0 %v2234
      %v2287 = vpop.f32.mrf.mxu0
      %v2288 = vadd.f32 0.0, %v2287
      %2289 = vmatmul.f32.gmra.mxu0 %v2236
      %v2290 = vpop.f32.mrf.mxu0
      %v2291 = vadd.f32 0.0, %v2290
      %2292 = vmatmul.f32.gmra.mxu0 %v2238
      %v2293 = vpop.f32.mrf.mxu0
      %v2294 = vadd.f32 0.0, %v2293
      %2295 = vdwg.mxu0
      %v2296 = vadd.f32 %v2155, %v2261
      %v2297 = vadd.f32 %v2158, %v2264
      %v2298 = vadd.f32 %v2161, %v2267
      %v2299 = vadd.f32 %v2164, %v2270
      %v2300 = vadd.f32 %v2167, %v2273
      %v2301 = vadd.f32 %v2170, %v2276
      %v2302 = vadd.f32 %v2173, %v2279
      %v2303 = vadd.f32 %v2176, %v2282
      %v2304 = vadd.f32 %v2179, %v2285
      %v2305 = vadd.f32 %v2182, %v2288
      %v2306 = vadd.f32 %v2185, %v2291
      %v2307 = vadd.f32 %v2188, %v2294
      %v2308 = vld [vmem:[%s4 + $0x1e] sm:$0xff]
      %v2309 = vld [vmem:[%s4 + $0x26] sm:$0x3]
      %vm2310 = vcmask 1044480
      %v2311 = vrot.slane %v1936, 3
      %v2312 = vrot.slane %v1939, 3
      %v2313 = vsel %vm2310, %v2311, %v2312
      %v2314 = vrot.slane %v1942, 3
      %v2315 = vsel %vm2310, %v2312, %v2314
      %v2316 = vrot.slane %v1945, 3
      %v2317 = vsel %vm2310, %v2314, %v2316
      %v2318 = vrot.slane %v1948, 3
      %v2319 = vsel %vm2310, %v2316, %v2318
      %v2320 = vrot.slane %v1951, 3
      %v2321 = vsel %vm2310, %v2318, %v2320
      %v2322 = vrot.slane %v1954, 3
      %v2323 = vsel %vm2310, %v2320, %v2322
      %v2324 = vrot.slane %v1957, 3
      %v2325 = vsel %vm2310, %v2322, %v2324
      %v2326 = vrot.slane %v1960, 3
      %v2327 = vsel %vm2310, %v2324, %v2326
      %v2328 = vrot.slane %v1963, 3
      %v2329 = vsel %vm2310, %v2326, %v2328
      %v2330 = vrot.slane %v1966, 3
      %v2331 = vsel %vm2310, %v2328, %v2330
      %v2332 = vrot.slane %v1969, 3
      %v2333 = vsel %vm2310, %v2330, %v2332
      %v2334 = vsel %vm2028, %v2313, 0
      %v2336 = vsel %vm2028, %v2315, 0
      %v2338 = vsel %vm2028, %v2317, 0
      %v2340 = vsel %vm2028, %v2319, 0
      %v2342 = vsel %vm2028, %v2321, 0
      %v2344 = vsel %vm2028, %v2323, 0
      %v2346 = vsel %vm2028, %v2325, 0
      %v2348 = vsel %vm2028, %v2327, 0
      %v2350 = vsel %vm2028, %v2329, 0
      %v2352 = vsel %vm2028, %v2331, 0
      %v2354 = vsel %vm2028, %v2333, 0
      %v2356 = vsel %vm2028, %v2332, 0
      %v2359 = vsel %vm2053, %v2309, 0
      %2361 = vmatpush.msra.mxu0 0.0
      %2362 = vmatpush.msra.mxu0 0.0
      %2363 = vmatpush.msra.mxu0 0.0
      %2364 = vmatpush.msra.mxu0 0.0
      %2365 = vmatpush.msra.mxu0 0.0
      %2366 = vmatpush.msra.mxu0 0.0
      %2367 = vmatpush.msra.mxu0 0.0
      %2368 = vmatpush.msra.mxu0 0.0
      %2369 = vmatpush.msra.mxu0 0.0
      %2370 = vmatpush.msra.mxu0 0.0
      %2371 = vmatpush.msra.mxu0 0.0
      %2372 = vmatpush.msra.mxu0 0.0
      %2373 = vmatpush.msra.mxu0 0.0
      %2374 = vmatpush.msra.mxu0 0.0
      %2375 = vmatpush.msra.mxu0 %v2359
      %2376 = vmatpush.msra.mxu0 %v2308
      %2377 = vmatmul.f32.gmra.mxu0 %v2334
      %v2378 = vpop.f32.mrf.mxu0
      %v2379 = vadd.f32 0.0, %v2378
      %2380 = vmatmul.f32.gmra.mxu0 %v2336
      %v2381 = vpop.f32.mrf.mxu0
      %v2382 = vadd.f32 0.0, %v2381
      %2383 = vmatmul.f32.gmra.mxu0 %v2338
      %v2384 = vpop.f32.mrf.mxu0
      %v2385 = vadd.f32 0.0, %v2384
      %2386 = vmatmul.f32.gmra.mxu0 %v2340
      %v2387 = vpop.f32.mrf.mxu0
      %v2388 = vadd.f32 0.0, %v2387
      %2389 = vmatmul.f32.gmra.mxu0 %v2342
      %v2390 = vpop.f32.mrf.mxu0
      %v2391 = vadd.f32 0.0, %v2390
      %2392 = vmatmul.f32.gmra.mxu0 %v2344
      %v2393 = vpop.f32.mrf.mxu0
      %v2394 = vadd.f32 0.0, %v2393
      %2395 = vmatmul.f32.gmra.mxu0 %v2346
      %v2396 = vpop.f32.mrf.mxu0
      %v2397 = vadd.f32 0.0, %v2396
      %2398 = vmatmul.f32.gmra.mxu0 %v2348
      %v2399 = vpop.f32.mrf.mxu0
      %v2400 = vadd.f32 0.0, %v2399
      %2401 = vmatmul.f32.gmra.mxu0 %v2350
      %v2402 = vpop.f32.mrf.mxu0
      %v2403 = vadd.f32 0.0, %v2402
      %2404 = vmatmul.f32.gmra.mxu0 %v2352
      %v2405 = vpop.f32.mrf.mxu0
      %v2406 = vadd.f32 0.0, %v2405
      %2407 = vmatmul.f32.gmra.mxu0 %v2354
      %v2408 = vpop.f32.mrf.mxu0
      %v2409 = vadd.f32 0.0, %v2408
      %2410 = vmatmul.f32.gmra.mxu0 %v2356
      %v2411 = vpop.f32.mrf.mxu0
      %v2412 = vadd.f32 0.0, %v2411
      %2413 = vdwg.mxu0
      %v2414 = vadd.f32 %v2296, %v2379
      %v2415 = vadd.f32 %v2297, %v2382
      %v2416 = vadd.f32 %v2298, %v2385
      %v2417 = vadd.f32 %v2299, %v2388
      %v2418 = vadd.f32 %v2300, %v2391
      %v2419 = vadd.f32 %v2301, %v2394
      %v2420 = vadd.f32 %v2302, %v2397
      %v2421 = vadd.f32 %v2303, %v2400
      %v2422 = vadd.f32 %v2304, %v2403
      %v2423 = vadd.f32 %v2305, %v2406
      %v2424 = vadd.f32 %v2306, %v2409
      %v2425 = vadd.f32 %v2307, %v2412
      %v2426 = vld [vmem:[%s4 + $0x28] sm:$0xff]
      %v2427 = vld [vmem:[%s4 + $0x30] sm:$0x3]
      %vm2428 = vcmask 1043456
      %v2429 = vrot.slane %v1936, 4
      %v2430 = vrot.slane %v1939, 4
      %v2431 = vsel %vm2428, %v2429, %v2430
      %v2432 = vrot.slane %v1942, 4
      %v2433 = vsel %vm2428, %v2430, %v2432
      %v2434 = vrot.slane %v1945, 4
      %v2435 = vsel %vm2428, %v2432, %v2434
      %v2436 = vrot.slane %v1948, 4
      %v2437 = vsel %vm2428, %v2434, %v2436
      %v2438 = vrot.slane %v1951, 4
      %v2439 = vsel %vm2428, %v2436, %v2438
      %v2440 = vrot.slane %v1954, 4
      %v2441 = vsel %vm2428, %v2438, %v2440
      %v2442 = vrot.slane %v1957, 4
      %v2443 = vsel %vm2428, %v2440, %v2442
      %v2444 = vrot.slane %v1960, 4
      %v2445 = vsel %vm2428, %v2442, %v2444
      %v2446 = vrot.slane %v1963, 4
      %v2447 = vsel %vm2428, %v2444, %v2446
      %v2448 = vrot.slane %v1966, 4
      %v2449 = vsel %vm2428, %v2446, %v2448
      %v2450 = vrot.slane %v1969, 4
      %v2451 = vsel %vm2428, %v2448, %v2450
      %v2452 = vsel %vm2028, %v2431, 0
      %v2454 = vsel %vm2028, %v2433, 0
      %v2456 = vsel %vm2028, %v2435, 0
      %v2458 = vsel %vm2028, %v2437, 0
      %v2460 = vsel %vm2028, %v2439, 0
      %v2462 = vsel %vm2028, %v2441, 0
      %v2464 = vsel %vm2028, %v2443, 0
      %v2466 = vsel %vm2028, %v2445, 0
      %v2468 = vsel %vm2028, %v2447, 0
      %v2470 = vsel %vm2028, %v2449, 0
      %v2472 = vsel %vm2028, %v2451, 0
      %v2474 = vsel %vm2028, %v2450, 0
      %v2477 = vsel %vm2053, %v2427, 0
      %2479 = vmatpush.msra.mxu0 0.0
      %2480 = vmatpush.msra.mxu0 0.0
      %2481 = vmatpush.msra.mxu0 0.0
      %2482 = vmatpush.msra.mxu0 0.0
      %2483 = vmatpush.msra.mxu0 0.0
      %2484 = vmatpush.msra.mxu0 0.0
      %2485 = vmatpush.msra.mxu0 0.0
      %2486 = vmatpush.msra.mxu0 0.0
      %2487 = vmatpush.msra.mxu0 0.0
      %2488 = vmatpush.msra.mxu0 0.0
      %2489 = vmatpush.msra.mxu0 0.0
      %2490 = vmatpush.msra.mxu0 0.0
      %2491 = vmatpush.msra.mxu0 0.0
      %2492 = vmatpush.msra.mxu0 0.0
      %2493 = vmatpush.msra.mxu0 %v2477
      %2494 = vmatpush.msra.mxu0 %v2426
      %2495 = vmatmul.f32.gmra.mxu0 %v2452
      %v2496 = vpop.f32.mrf.mxu0
      %v2497 = vadd.f32 0.0, %v2496
      %2498 = vmatmul.f32.gmra.mxu0 %v2454
      %v2499 = vpop.f32.mrf.mxu0
      %v2500 = vadd.f32 0.0, %v2499
      %2501 = vmatmul.f32.gmra.mxu0 %v2456
      %v2502 = vpop.f32.mrf.mxu0
      %v2503 = vadd.f32 0.0, %v2502
      %2504 = vmatmul.f32.gmra.mxu0 %v2458
      %v2505 = vpop.f32.mrf.mxu0
      %v2506 = vadd.f32 0.0, %v2505
      %2507 = vmatmul.f32.gmra.mxu0 %v2460
      %v2508 = vpop.f32.mrf.mxu0
      %v2509 = vadd.f32 0.0, %v2508
      %2510 = vmatmul.f32.gmra.mxu0 %v2462
      %v2511 = vpop.f32.mrf.mxu0
      %v2512 = vadd.f32 0.0, %v2511
      %2513 = vmatmul.f32.gmra.mxu0 %v2464
      %v2514 = vpop.f32.mrf.mxu0
      %v2515 = vadd.f32 0.0, %v2514
      %2516 = vmatmul.f32.gmra.mxu0 %v2466
      %v2517 = vpop.f32.mrf.mxu0
      %v2518 = vadd.f32 0.0, %v2517
      %2519 = vmatmul.f32.gmra.mxu0 %v2468
      %v2520 = vpop.f32.mrf.mxu0
      %v2521 = vadd.f32 0.0, %v2520
      %2522 = vmatmul.f32.gmra.mxu0 %v2470
      %v2523 = vpop.f32.mrf.mxu0
      %v2524 = vadd.f32 0.0, %v2523
      %2525 = vmatmul.f32.gmra.mxu0 %v2472
      %v2526 = vpop.f32.mrf.mxu0
      %v2527 = vadd.f32 0.0, %v2526
      %2528 = vmatmul.f32.gmra.mxu0 %v2474
      %v2529 = vpop.f32.mrf.mxu0
      %v2530 = vadd.f32 0.0, %v2529
      %2531 = vdwg.mxu0
      %v2532 = vadd.f32 %v2414, %v2497
      %v2533 = vadd.f32 %v2415, %v2500
      %v2534 = vadd.f32 %v2416, %v2503
      %v2535 = vadd.f32 %v2417, %v2506
      %v2536 = vadd.f32 %v2418, %v2509
      %v2537 = vadd.f32 %v2419, %v2512
      %v2538 = vadd.f32 %v2420, %v2515
      %v2539 = vadd.f32 %v2421, %v2518
      %v2540 = vadd.f32 %v2422, %v2521
      %v2541 = vadd.f32 %v2423, %v2524
      %v2542 = vadd.f32 %v2424, %v2527
      %v2543 = vadd.f32 %v2425, %v2530
      %v2544 = vld [vmem:[%s4 + $0x32] sm:$0xff]
      %v2545 = vld [vmem:[%s4 + $0x3a] sm:$0x3]
      %v2547 = vrot.slane %v1972, 4
      %v2548 = vsel %vm2428, %v2450, %v2547
      %v2549 = vsel %vm2028, %v2548, 0
      %v2551 = vsel %vm2028, %v2547, 0
      %v2554 = vsel %vm2053, %v2545, 0
      %2556 = vmatpush.msra.mxu0 0.0
      %2557 = vmatpush.msra.mxu0 0.0
      %2558 = vmatpush.msra.mxu0 0.0
      %2559 = vmatpush.msra.mxu0 0.0
      %2560 = vmatpush.msra.mxu0 0.0
      %2561 = vmatpush.msra.mxu0 0.0
      %2562 = vmatpush.msra.mxu0 0.0
      %2563 = vmatpush.msra.mxu0 0.0
      %2564 = vmatpush.msra.mxu0 0.0
      %2565 = vmatpush.msra.mxu0 0.0
      %2566 = vmatpush.msra.mxu0 0.0
      %2567 = vmatpush.msra.mxu0 0.0
      %2568 = vmatpush.msra.mxu0 0.0
      %2569 = vmatpush.msra.mxu0 0.0
      %2570 = vmatpush.msra.mxu0 %v2554
      %2571 = vmatpush.msra.mxu0 %v2544
      %2572 = vmatmul.f32.gmra.mxu0 %v2454
      %v2573 = vpop.f32.mrf.mxu0
      %v2574 = vadd.f32 0.0, %v2573
      %2575 = vmatmul.f32.gmra.mxu0 %v2456
      %v2576 = vpop.f32.mrf.mxu0
      %v2577 = vadd.f32 0.0, %v2576
      %2578 = vmatmul.f32.gmra.mxu0 %v2458
      %v2579 = vpop.f32.mrf.mxu0
      %v2580 = vadd.f32 0.0, %v2579
      %2581 = vmatmul.f32.gmra.mxu0 %v2460
      %v2582 = vpop.f32.mrf.mxu0
      %v2583 = vadd.f32 0.0, %v2582
      %2584 = vmatmul.f32.gmra.mxu0 %v2462
      %v2585 = vpop.f32.mrf.mxu0
      %v2586 = vadd.f32 0.0, %v2585
      %2587 = vmatmul.f32.gmra.mxu0 %v2464
      %v2588 = vpop.f32.mrf.mxu0
      %v2589 = vadd.f32 0.0, %v2588
      %2590 = vmatmul.f32.gmra.mxu0 %v2466
      %v2591 = vpop.f32.mrf.mxu0
      %v2592 = vadd.f32 0.0, %v2591
      %2593 = vmatmul.f32.gmra.mxu0 %v2468
      %v2594 = vpop.f32.mrf.mxu0
      %v2595 = vadd.f32 0.0, %v2594
      %2596 = vmatmul.f32.gmra.mxu0 %v2470
      %v2597 = vpop.f32.mrf.mxu0
      %v2598 = vadd.f32 0.0, %v2597
      %2599 = vmatmul.f32.gmra.mxu0 %v2472
      %v2600 = vpop.f32.mrf.mxu0
      %v2601 = vadd.f32 0.0, %v2600
      %2602 = vmatmul.f32.gmra.mxu0 %v2549
      %v2603 = vpop.f32.mrf.mxu0
      %v2604 = vadd.f32 0.0, %v2603
      %2605 = vmatmul.f32.gmra.mxu0 %v2551
      %v2606 = vpop.f32.mrf.mxu0
      %v2607 = vadd.f32 0.0, %v2606
      %2608 = vdwg.mxu0
      %v2609 = vadd.f32 %v2532, %v2574
      %v2610 = vadd.f32 %v2533, %v2577
      %v2611 = vadd.f32 %v2534, %v2580
      %v2612 = vadd.f32 %v2535, %v2583
      %v2613 = vadd.f32 %v2536, %v2586
      %v2614 = vadd.f32 %v2537, %v2589
      %v2615 = vadd.f32 %v2538, %v2592
      %v2616 = vadd.f32 %v2539, %v2595
      %v2617 = vadd.f32 %v2540, %v2598
      %v2618 = vadd.f32 %v2541, %v2601
      %v2619 = vadd.f32 %v2542, %v2604
      %v2620 = vadd.f32 %v2543, %v2607
      %v2621 = vld [vmem:[%s4 + $0x3c] sm:$0xff]
      %v2622 = vld [vmem:[%s4 + $0x44] sm:$0x3]
      %vm2624 = vcmask 1042432
      %v2625 = vrot.slane %v1939, 5
      %v2626 = vrot.slane %v1942, 5
      %v2627 = vsel %vm2624, %v2625, %v2626
      %v2628 = vrot.slane %v1945, 5
      %v2629 = vsel %vm2624, %v2626, %v2628
      %v2630 = vrot.slane %v1948, 5
      %v2631 = vsel %vm2624, %v2628, %v2630
      %v2632 = vrot.slane %v1951, 5
      %v2633 = vsel %vm2624, %v2630, %v2632
      %v2634 = vrot.slane %v1954, 5
      %v2635 = vsel %vm2624, %v2632, %v2634
      %v2636 = vrot.slane %v1957, 5
      %v2637 = vsel %vm2624, %v2634, %v2636
      %v2638 = vrot.slane %v1960, 5
      %v2639 = vsel %vm2624, %v2636, %v2638
      %v2640 = vrot.slane %v1963, 5
      %v2641 = vsel %vm2624, %v2638, %v2640
      %v2642 = vrot.slane %v1966, 5
      %v2643 = vsel %vm2624, %v2640, %v2642
      %v2644 = vrot.slane %v1969, 5
      %v2645 = vsel %vm2624, %v2642, %v2644
      %v2646 = vrot.slane %v1972, 5
      %v2647 = vsel %vm2624, %v2644, %v2646
      %v2648 = vrot.slane %v1975, 5
      %v2649 = vsel %vm2624, %v2646, %v2648
      %v2650 = vsel %vm2028, %v2627, 0
      %v2652 = vsel %vm2028, %v2629, 0
      %v2654 = vsel %vm2028, %v2631, 0
      %v2656 = vsel %vm2028, %v2633, 0
      %v2658 = vsel %vm2028, %v2635, 0
      %v2660 = vsel %vm2028, %v2637, 0
      %v2662 = vsel %vm2028, %v2639, 0
      %v2664 = vsel %vm2028, %v2641, 0
      %v2666 = vsel %vm2028, %v2643, 0
      %v2668 = vsel %vm2028, %v2645, 0
      %v2670 = vsel %vm2028, %v2647, 0
      %v2672 = vsel %vm2028, %v2649, 0
      %v2675 = vsel %vm2053, %v2622, 0
      %2677 = vmatpush.msra.mxu0 0.0
      %2678 = vmatpush.msra.mxu0 0.0
      %2679 = vmatpush.msra.mxu0 0.0
      %2680 = vmatpush.msra.mxu0 0.0
      %2681 = vmatpush.msra.mxu0 0.0
      %2682 = vmatpush.msra.mxu0 0.0
      %2683 = vmatpush.msra.mxu0 0.0
      %2684 = vmatpush.msra.mxu0 0.0
      %2685 = vmatpush.msra.mxu0 0.0
      %2686 = vmatpush.msra.mxu0 0.0
      %2687 = vmatpush.msra.mxu0 0.0
      %2688 = vmatpush.msra.mxu0 0.0
      %2689 = vmatpush.msra.mxu0 0.0
      %2690 = vmatpush.msra.mxu0 0.0
      %2691 = vmatpush.msra.mxu0 %v2675
      %2692 = vmatpush.msra.mxu0 %v2621
      %2693 = vmatmul.f32.gmra.mxu0 %v2650
      %v2694 = vpop.f32.mrf.mxu0
      %v2695 = vadd.f32 0.0, %v2694
      %2696 = vmatmul.f32.gmra.mxu0 %v2652
      %v2697 = vpop.f32.mrf.mxu0
      %v2698 = vadd.f32 0.0, %v2697
      %2699 = vmatmul.f32.gmra.mxu0 %v2654
      %v2700 = vpop.f32.mrf.mxu0
      %v2701 = vadd.f32 0.0, %v2700
      %2702 = vmatmul.f32.gmra.mxu0 %v2656
      %v2703 = vpop.f32.mrf.mxu0
      %v2704 = vadd.f32 0.0, %v2703
      %2705 = vmatmul.f32.gmra.mxu0 %v2658
      %v2706 = vpop.f32.mrf.mxu0
      %v2707 = vadd.f32 0.0, %v2706
      %2708 = vmatmul.f32.gmra.mxu0 %v2660
      %v2709 = vpop.f32.mrf.mxu0
      %v2710 = vadd.f32 0.0, %v2709
      %2711 = vmatmul.f32.gmra.mxu0 %v2662
      %v2712 = vpop.f32.mrf.mxu0
      %v2713 = vadd.f32 0.0, %v2712
      %2714 = vmatmul.f32.gmra.mxu0 %v2664
      %v2715 = vpop.f32.mrf.mxu0
      %v2716 = vadd.f32 0.0, %v2715
      %2717 = vmatmul.f32.gmra.mxu0 %v2666
      %v2718 = vpop.f32.mrf.mxu0
      %v2719 = vadd.f32 0.0, %v2718
      %2720 = vmatmul.f32.gmra.mxu0 %v2668
      %v2721 = vpop.f32.mrf.mxu0
      %v2722 = vadd.f32 0.0, %v2721
      %2723 = vmatmul.f32.gmra.mxu0 %v2670
      %v2724 = vpop.f32.mrf.mxu0
      %v2725 = vadd.f32 0.0, %v2724
      %2726 = vmatmul.f32.gmra.mxu0 %v2672
      %v2727 = vpop.f32.mrf.mxu0
      %v2728 = vadd.f32 0.0, %v2727
      %2729 = vdwg.mxu0
      %v2730 = vadd.f32 %v2609, %v2695
      %v2731 = vadd.f32 %v2610, %v2698
      %v2732 = vadd.f32 %v2611, %v2701
      %v2733 = vadd.f32 %v2612, %v2704
      %v2734 = vadd.f32 %v2613, %v2707
      %v2735 = vadd.f32 %v2614, %v2710
      %v2736 = vadd.f32 %v2615, %v2713
      %v2737 = vadd.f32 %v2616, %v2716
      %v2738 = vadd.f32 %v2617, %v2719
      %v2739 = vadd.f32 %v2618, %v2722
      %v2740 = vadd.f32 %v2619, %v2725
      %v2741 = vadd.f32 %v2620, %v2728
      %v2742 = vld [vmem:[%s4 + $0x46] sm:$0xff]
      %v2743 = vld [vmem:[%s4 + $0x4e] sm:$0x3]
      %v2744 = vrot.slane %v1939, 6
      %v2745 = vrot.slane %v1942, 6
      %v2746 = vsel %vm2053, %v2744, %v2745
      %v2747 = vrot.slane %v1945, 6
      %v2748 = vsel %vm2053, %v2745, %v2747
      %v2749 = vrot.slane %v1948, 6
      %v2750 = vsel %vm2053, %v2747, %v2749
      %v2751 = vrot.slane %v1951, 6
      %v2752 = vsel %vm2053, %v2749, %v2751
      %v2753 = vrot.slane %v1954, 6
      %v2754 = vsel %vm2053, %v2751, %v2753
      %v2755 = vrot.slane %v1957, 6
      %v2756 = vsel %vm2053, %v2753, %v2755
      %v2757 = vrot.slane %v1960, 6
      %v2758 = vsel %vm2053, %v2755, %v2757
      %v2759 = vrot.slane %v1963, 6
      %v2760 = vsel %vm2053, %v2757, %v2759
      %v2761 = vrot.slane %v1966, 6
      %v2762 = vsel %vm2053, %v2759, %v2761
      %v2763 = vrot.slane %v1969, 6
      %v2764 = vsel %vm2053, %v2761, %v2763
      %v2765 = vrot.slane %v1972, 6
      %v2766 = vsel %vm2053, %v2763, %v2765
      %v2767 = vrot.slane %v1975, 6
      %v2768 = vsel %vm2053, %v2765, %v2767
      %v2769 = vsel %vm2028, %v2746, 0
      %v2771 = vsel %vm2028, %v2748, 0
      %v2773 = vsel %vm2028, %v2750, 0
      %v2775 = vsel %vm2028, %v2752, 0
      %v2777 = vsel %vm2028, %v2754, 0
      %v2779 = vsel %vm2028, %v2756, 0
      %v2781 = vsel %vm2028, %v2758, 0
      %v2783 = vsel %vm2028, %v2760, 0
      %v2785 = vsel %vm2028, %v2762, 0
      %v2787 = vsel %vm2028, %v2764, 0
      %v2789 = vsel %vm2028, %v2766, 0
      %v2791 = vsel %vm2028, %v2768, 0
      %v2794 = vsel %vm2053, %v2743, 0
      %2796 = vmatpush.msra.mxu0 0.0
      %2797 = vmatpush.msra.mxu0 0.0
      %2798 = vmatpush.msra.mxu0 0.0
      %2799 = vmatpush.msra.mxu0 0.0
      %2800 = vmatpush.msra.mxu0 0.0
      %2801 = vmatpush.msra.mxu0 0.0
      %2802 = vmatpush.msra.mxu0 0.0
      %2803 = vmatpush.msra.mxu0 0.0
      %2804 = vmatpush.msra.mxu0 0.0
      %2805 = vmatpush.msra.mxu0 0.0
      %2806 = vmatpush.msra.mxu0 0.0
      %2807 = vmatpush.msra.mxu0 0.0
      %2808 = vmatpush.msra.mxu0 0.0
      %2809 = vmatpush.msra.mxu0 0.0
      %2810 = vmatpush.msra.mxu0 %v2794
      %2811 = vmatpush.msra.mxu0 %v2742
      %2812 = vmatmul.f32.gmra.mxu0 %v2769
      %v2813 = vpop.f32.mrf.mxu0
      %v2814 = vadd.f32 0.0, %v2813
      %2815 = vmatmul.f32.gmra.mxu0 %v2771
      %v2816 = vpop.f32.mrf.mxu0
      %v2817 = vadd.f32 0.0, %v2816
      %2818 = vmatmul.f32.gmra.mxu0 %v2773
      %v2819 = vpop.f32.mrf.mxu0
      %v2820 = vadd.f32 0.0, %v2819
      %2821 = vmatmul.f32.gmra.mxu0 %v2775
      %v2822 = vpop.f32.mrf.mxu0
      %v2823 = vadd.f32 0.0, %v2822
      %2824 = vmatmul.f32.gmra.mxu0 %v2777
      %v2825 = vpop.f32.mrf.mxu0
      %v2826 = vadd.f32 0.0, %v2825
      %2827 = vmatmul.f32.gmra.mxu0 %v2779
      %v2828 = vpop.f32.mrf.mxu0
      %v2829 = vadd.f32 0.0, %v2828
      %2830 = vmatmul.f32.gmra.mxu0 %v2781
      %v2831 = vpop.f32.mrf.mxu0
      %v2832 = vadd.f32 0.0, %v2831
      %2833 = vmatmul.f32.gmra.mxu0 %v2783
      %v2834 = vpop.f32.mrf.mxu0
      %v2835 = vadd.f32 0.0, %v2834
      %2836 = vmatmul.f32.gmra.mxu0 %v2785
      %v2837 = vpop.f32.mrf.mxu0
      %v2838 = vadd.f32 0.0, %v2837
      %2839 = vmatmul.f32.gmra.mxu0 %v2787
      %v2840 = vpop.f32.mrf.mxu0
      %v2841 = vadd.f32 0.0, %v2840
      %2842 = vmatmul.f32.gmra.mxu0 %v2789
      %v2843 = vpop.f32.mrf.mxu0
      %v2844 = vadd.f32 0.0, %v2843
      %2845 = vmatmul.f32.gmra.mxu0 %v2791
      %v2846 = vpop.f32.mrf.mxu0
      %v2847 = vadd.f32 0.0, %v2846
      %2848 = vdwg.mxu0
      %v2849 = vadd.f32 %v2730, %v2814
      %v2850 = vadd.f32 %v2731, %v2817
      %v2851 = vadd.f32 %v2732, %v2820
      %v2852 = vadd.f32 %v2733, %v2823
      %v2853 = vadd.f32 %v2734, %v2826
      %v2854 = vadd.f32 %v2735, %v2829
      %v2855 = vadd.f32 %v2736, %v2832
      %v2856 = vadd.f32 %v2737, %v2835
      %v2857 = vadd.f32 %v2738, %v2838
      %v2858 = vadd.f32 %v2739, %v2841
      %v2859 = vadd.f32 %v2740, %v2844
      %v2860 = vadd.f32 %v2741, %v2847
      %v2861 = vld [vmem:[%s4 + $0x50] sm:$0xff]
      %v2862 = vld [vmem:[%s4 + $0x58] sm:$0x3]
      %v2863 = vrot.slane %v1939, 7
      %v2864 = vrot.slane %v1942, 7
      %v2865 = vsel %vm748, %v2863, %v2864
      %v2866 = vrot.slane %v1945, 7
      %v2867 = vsel %vm748, %v2864, %v2866
      %v2868 = vrot.slane %v1948, 7
      %v2869 = vsel %vm748, %v2866, %v2868
      %v2870 = vrot.slane %v1951, 7
      %v2871 = vsel %vm748, %v2868, %v2870
      %v2872 = vrot.slane %v1954, 7
      %v2873 = vsel %vm748, %v2870, %v2872
      %v2874 = vrot.slane %v1957, 7
      %v2875 = vsel %vm748, %v2872, %v2874
      %v2876 = vrot.slane %v1960, 7
      %v2877 = vsel %vm748, %v2874, %v2876
      %v2878 = vrot.slane %v1963, 7
      %v2879 = vsel %vm748, %v2876, %v2878
      %v2880 = vrot.slane %v1966, 7
      %v2881 = vsel %vm748, %v2878, %v2880
      %v2882 = vrot.slane %v1969, 7
      %v2883 = vsel %vm748, %v2880, %v2882
      %v2884 = vrot.slane %v1972, 7
      %v2885 = vsel %vm748, %v2882, %v2884
      %v2886 = vrot.slane %v1975, 7
      %v2887 = vsel %vm748, %v2884, %v2886
      %v2888 = vsel %vm2028, %v2865, 0
      %v2890 = vsel %vm2028, %v2867, 0
      %v2892 = vsel %vm2028, %v2869, 0
      %v2894 = vsel %vm2028, %v2871, 0
      %v2896 = vsel %vm2028, %v2873, 0
      %v2898 = vsel %vm2028, %v2875, 0
      %v2900 = vsel %vm2028, %v2877, 0
      %v2902 = vsel %vm2028, %v2879, 0
      %v2904 = vsel %vm2028, %v2881, 0
      %v2906 = vsel %vm2028, %v2883, 0
      %v2908 = vsel %vm2028, %v2885, 0
      %v2910 = vsel %vm2028, %v2887, 0
      %v2913 = vsel %vm2053, %v2862, 0
      %2915 = vmatpush.msra.mxu0 0.0
      %2916 = vmatpush.msra.mxu0 0.0
      %2917 = vmatpush.msra.mxu0 0.0
      %2918 = vmatpush.msra.mxu0 0.0
      %2919 = vmatpush.msra.mxu0 0.0
      %2920 = vmatpush.msra.mxu0 0.0
      %2921 = vmatpush.msra.mxu0 0.0
      %2922 = vmatpush.msra.mxu0 0.0
      %2923 = vmatpush.msra.mxu0 0.0
      %2924 = vmatpush.msra.mxu0 0.0
      %2925 = vmatpush.msra.mxu0 0.0
      %2926 = vmatpush.msra.mxu0 0.0
      %2927 = vmatpush.msra.mxu0 0.0
      %2928 = vmatpush.msra.mxu0 0.0
      %2929 = vmatpush.msra.mxu0 %v2913
      %2930 = vmatpush.msra.mxu0 %v2861
      %2931 = vmatmul.f32.gmra.mxu0 %v2888
      %v2932 = vpop.f32.mrf.mxu0
      %v2933 = vadd.f32 0.0, %v2932
      %2934 = vmatmul.f32.gmra.mxu0 %v2890
      %v2935 = vpop.f32.mrf.mxu0
      %v2936 = vadd.f32 0.0, %v2935
      %2937 = vmatmul.f32.gmra.mxu0 %v2892
      %v2938 = vpop.f32.mrf.mxu0
      %v2939 = vadd.f32 0.0, %v2938
      %2940 = vmatmul.f32.gmra.mxu0 %v2894
      %v2941 = vpop.f32.mrf.mxu0
      %v2942 = vadd.f32 0.0, %v2941
      %2943 = vmatmul.f32.gmra.mxu0 %v2896
      %v2944 = vpop.f32.mrf.mxu0
      %v2945 = vadd.f32 0.0, %v2944
      %2946 = vmatmul.f32.gmra.mxu0 %v2898
      %v2947 = vpop.f32.mrf.mxu0
      %v2948 = vadd.f32 0.0, %v2947
      %2949 = vmatmul.f32.gmra.mxu0 %v2900
      %v2950 = vpop.f32.mrf.mxu0
      %v2951 = vadd.f32 0.0, %v2950
      %2952 = vmatmul.f32.gmra.mxu0 %v2902
      %v2953 = vpop.f32.mrf.mxu0
      %v2954 = vadd.f32 0.0, %v2953
      %2955 = vmatmul.f32.gmra.mxu0 %v2904
      %v2956 = vpop.f32.mrf.mxu0
      %v2957 = vadd.f32 0.0, %v2956
      %2958 = vmatmul.f32.gmra.mxu0 %v2906
      %v2959 = vpop.f32.mrf.mxu0
      %v2960 = vadd.f32 0.0, %v2959
      %2961 = vmatmul.f32.gmra.mxu0 %v2908
      %v2962 = vpop.f32.mrf.mxu0
      %v2963 = vadd.f32 0.0, %v2962
      %2964 = vmatmul.f32.gmra.mxu0 %v2910
      %v2965 = vpop.f32.mrf.mxu0
      %v2966 = vadd.f32 0.0, %v2965
      %2967 = vdwg.mxu0
      %v2968 = vadd.f32 %v2849, %v2933
      %v2969 = vadd.f32 %v2850, %v2936
      %v2970 = vadd.f32 %v2851, %v2939
      %v2971 = vadd.f32 %v2852, %v2942
      %v2972 = vadd.f32 %v2853, %v2945
      %v2973 = vadd.f32 %v2854, %v2948
      %v2974 = vadd.f32 %v2855, %v2951
      %v2975 = vadd.f32 %v2856, %v2954
      %v2976 = vadd.f32 %v2857, %v2957
      %v2977 = vadd.f32 %v2858, %v2960
      %v2978 = vadd.f32 %v2859, %v2963
      %v2979 = vadd.f32 %v2860, %v2966
      %v2980 = vld [vmem:[%s4 + $0x5a] sm:$0xff]
      %v2981 = vld [vmem:[%s4 + $0x62] sm:$0x3]
      %v2982 = vsel %vm2028, %v1972, 0
      %v2984 = vsel %vm2028, %v1975, 0
      %v2987 = vsel %vm2053, %v2981, 0
      %2989 = vmatpush.msra.mxu0 0.0
      %2990 = vmatpush.msra.mxu0 0.0
      %2991 = vmatpush.msra.mxu0 0.0
      %2992 = vmatpush.msra.mxu0 0.0
      %2993 = vmatpush.msra.mxu0 0.0
      %2994 = vmatpush.msra.mxu0 0.0
      %2995 = vmatpush.msra.mxu0 0.0
      %2996 = vmatpush.msra.mxu0 0.0
      %2997 = vmatpush.msra.mxu0 0.0
      %2998 = vmatpush.msra.mxu0 0.0
      %2999 = vmatpush.msra.mxu0 0.0
      %3000 = vmatpush.msra.mxu0 0.0
      %3001 = vmatpush.msra.mxu0 0.0
      %3002 = vmatpush.msra.mxu0 0.0
      %3003 = vmatpush.msra.mxu0 %v2987
      %3004 = vmatpush.msra.mxu0 %v2980
      %3005 = vmatmul.f32.gmra.mxu0 %v2114
      %v3006 = vpop.f32.mrf.mxu0
      %v3007 = vadd.f32 0.0, %v3006
      %3008 = vmatmul.f32.gmra.mxu0 %v2116
      %v3009 = vpop.f32.mrf.mxu0
      %v3010 = vadd.f32 0.0, %v3009
      %3011 = vmatmul.f32.gmra.mxu0 %v2118
      %v3012 = vpop.f32.mrf.mxu0
      %v3013 = vadd.f32 0.0, %v3012
      %3014 = vmatmul.f32.gmra.mxu0 %v2120
      %v3015 = vpop.f32.mrf.mxu0
      %v3016 = vadd.f32 0.0, %v3015
      %3017 = vmatmul.f32.gmra.mxu0 %v2122
      %v3018 = vpop.f32.mrf.mxu0
      %v3019 = vadd.f32 0.0, %v3018
      %3020 = vmatmul.f32.gmra.mxu0 %v2124
      %v3021 = vpop.f32.mrf.mxu0
      %v3022 = vadd.f32 0.0, %v3021
      %3023 = vmatmul.f32.gmra.mxu0 %v2126
      %v3024 = vpop.f32.mrf.mxu0
      %v3025 = vadd.f32 0.0, %v3024
      %3026 = vmatmul.f32.gmra.mxu0 %v2128
      %v3027 = vpop.f32.mrf.mxu0
      %v3028 = vadd.f32 0.0, %v3027
      %3029 = vmatmul.f32.gmra.mxu0 %v2130
      %v3030 = vpop.f32.mrf.mxu0
      %v3031 = vadd.f32 0.0, %v3030
      %3032 = vmatmul.f32.gmra.mxu0 %v2132
      %v3033 = vpop.f32.mrf.mxu0
      %v3034 = vadd.f32 0.0, %v3033
      %3035 = vmatmul.f32.gmra.mxu0 %v2982
      %v3036 = vpop.f32.mrf.mxu0
      %v3037 = vadd.f32 0.0, %v3036
      %3038 = vmatmul.f32.gmra.mxu0 %v2984
      %v3039 = vpop.f32.mrf.mxu0
      %v3040 = vadd.f32 0.0, %v3039
      %3041 = vdwg.mxu0
      %v3042 = vadd.f32 %v2968, %v3007
      %v3043 = vadd.f32 %v2969, %v3010
      %v3044 = vadd.f32 %v2970, %v3013
      %v3045 = vadd.f32 %v2971, %v3016
      %v3046 = vadd.f32 %v2972, %v3019
      %v3047 = vadd.f32 %v2973, %v3022
      %v3048 = vadd.f32 %v2974, %v3025
      %v3049 = vadd.f32 %v2975, %v3028
      %v3050 = vadd.f32 %v2976, %v3031
      %v3051 = vadd.f32 %v2977, %v3034
      %v3052 = vadd.f32 %v2978, %v3037
      %v3053 = vadd.f32 %v2979, %v3040
      %v3054 = vld [vmem:[%s4 + $0x64] sm:$0xff]
      %v3055 = vld [vmem:[%s4 + $0x6c] sm:$0x3]
      %v3057 = vsel %vm2028, %v1978, 0
      %v3060 = vsel %vm2053, %v3055, 0
      %3062 = vmatpush.msra.mxu0 0.0
      %3063 = vmatpush.msra.mxu0 0.0
      %3064 = vmatpush.msra.mxu0 0.0
      %3065 = vmatpush.msra.mxu0 0.0
      %3066 = vmatpush.msra.mxu0 0.0
      %3067 = vmatpush.msra.mxu0 0.0
      %3068 = vmatpush.msra.mxu0 0.0
      %3069 = vmatpush.msra.mxu0 0.0
      %3070 = vmatpush.msra.mxu0 0.0
      %3071 = vmatpush.msra.mxu0 0.0
      %3072 = vmatpush.msra.mxu0 0.0
      %3073 = vmatpush.msra.mxu0 0.0
      %3074 = vmatpush.msra.mxu0 0.0
      %3075 = vmatpush.msra.mxu0 0.0
      %3076 = vmatpush.msra.mxu0 %v3060
      %3077 = vmatpush.msra.mxu0 %v3054
      %3078 = vmatmul.f32.gmra.mxu0 %v2116
      %v3079 = vpop.f32.mrf.mxu0
      %v3080 = vadd.f32 0.0, %v3079
      %3081 = vmatmul.f32.gmra.mxu0 %v2118
      %v3082 = vpop.f32.mrf.mxu0
      %v3083 = vadd.f32 0.0, %v3082
      %3084 = vmatmul.f32.gmra.mxu0 %v2120
      %v3085 = vpop.f32.mrf.mxu0
      %v3086 = vadd.f32 0.0, %v3085
      %3087 = vmatmul.f32.gmra.mxu0 %v2122
      %v3088 = vpop.f32.mrf.mxu0
      %v3089 = vadd.f32 0.0, %v3088
      %3090 = vmatmul.f32.gmra.mxu0 %v2124
      %v3091 = vpop.f32.mrf.mxu0
      %v3092 = vadd.f32 0.0, %v3091
      %3093 = vmatmul.f32.gmra.mxu0 %v2126
      %v3094 = vpop.f32.mrf.mxu0
      %v3095 = vadd.f32 0.0, %v3094
      %3096 = vmatmul.f32.gmra.mxu0 %v2128
      %v3097 = vpop.f32.mrf.mxu0
      %v3098 = vadd.f32 0.0, %v3097
      %3099 = vmatmul.f32.gmra.mxu0 %v2130
      %v3100 = vpop.f32.mrf.mxu0
      %v3101 = vadd.f32 0.0, %v3100
      %3102 = vmatmul.f32.gmra.mxu0 %v2132
      %v3103 = vpop.f32.mrf.mxu0
      %v3104 = vadd.f32 0.0, %v3103
      %3105 = vmatmul.f32.gmra.mxu0 %v2982
      %v3106 = vpop.f32.mrf.mxu0
      %v3107 = vadd.f32 0.0, %v3106
      %3108 = vmatmul.f32.gmra.mxu0 %v2984
      %v3109 = vpop.f32.mrf.mxu0
      %v3110 = vadd.f32 0.0, %v3109
      %3111 = vmatmul.f32.gmra.mxu0 %v3057
      %v3112 = vpop.f32.mrf.mxu0
      %v3113 = vadd.f32 0.0, %v3112
      %3114 = vdwg.mxu0
      %v3115 = vadd.f32 %v3042, %v3080
      %v3116 = vadd.f32 %v3043, %v3083
      %v3117 = vadd.f32 %v3044, %v3086
      %v3118 = vadd.f32 %v3045, %v3089
      %v3119 = vadd.f32 %v3046, %v3092
      %v3120 = vadd.f32 %v3047, %v3095
      %v3121 = vadd.f32 %v3048, %v3098
      %v3122 = vadd.f32 %v3049, %v3101
      %v3123 = vadd.f32 %v3050, %v3104
      %v3124 = vadd.f32 %v3051, %v3107
      %v3125 = vadd.f32 %v3052, %v3110
      %v3126 = vadd.f32 %v3053, %v3113
      %v3127 = vld [vmem:[%s4 + $0x6e] sm:$0xff]
      %v3128 = vld [vmem:[%s4 + $0x76] sm:$0x3]
      %v3129 = vrot.slane %v1972, 1
      %v3130 = vsel %vm1129, %v2026, %v3129
      %v3131 = vrot.slane %v1975, 1
      %v3132 = vsel %vm1129, %v3129, %v3131
      %v3133 = vrot.slane %v1978, 1
      %v3134 = vsel %vm1129, %v3131, %v3133
      %v3135 = vsel %vm2028, %v3130, 0
      %v3137 = vsel %vm2028, %v3132, 0
      %v3139 = vsel %vm2028, %v3134, 0
      %v3141 = vsel %vm2028, %v3133, 0
      %v3144 = vsel %vm2053, %v3128, 0
      %3146 = vmatpush.msra.mxu0 0.0
      %3147 = vmatpush.msra.mxu0 0.0
      %3148 = vmatpush.msra.mxu0 0.0
      %3149 = vmatpush.msra.mxu0 0.0
      %3150 = vmatpush.msra.mxu0 0.0
      %3151 = vmatpush.msra.mxu0 0.0
      %3152 = vmatpush.msra.mxu0 0.0
      %3153 = vmatpush.msra.mxu0 0.0
      %3154 = vmatpush.msra.mxu0 0.0
      %3155 = vmatpush.msra.mxu0 0.0
      %3156 = vmatpush.msra.mxu0 0.0
      %3157 = vmatpush.msra.mxu0 0.0
      %3158 = vmatpush.msra.mxu0 0.0
      %3159 = vmatpush.msra.mxu0 0.0
      %3160 = vmatpush.msra.mxu0 %v3144
      %3161 = vmatpush.msra.mxu0 %v3127
      %3162 = vmatmul.f32.gmra.mxu0 %v2035
      %v3163 = vpop.f32.mrf.mxu0
      %v3164 = vadd.f32 0.0, %v3163
      %3165 = vmatmul.f32.gmra.mxu0 %v2037
      %v3166 = vpop.f32.mrf.mxu0
      %v3167 = vadd.f32 0.0, %v3166
      %3168 = vmatmul.f32.gmra.mxu0 %v2039
      %v3169 = vpop.f32.mrf.mxu0
      %v3170 = vadd.f32 0.0, %v3169
      %3171 = vmatmul.f32.gmra.mxu0 %v2041
      %v3172 = vpop.f32.mrf.mxu0
      %v3173 = vadd.f32 0.0, %v3172
      %3174 = vmatmul.f32.gmra.mxu0 %v2043
      %v3175 = vpop.f32.mrf.mxu0
      %v3176 = vadd.f32 0.0, %v3175
      %3177 = vmatmul.f32.gmra.mxu0 %v2045
      %v3178 = vpop.f32.mrf.mxu0
      %v3179 = vadd.f32 0.0, %v3178
      %3180 = vmatmul.f32.gmra.mxu0 %v2047
      %v3181 = vpop.f32.mrf.mxu0
      %v3182 = vadd.f32 0.0, %v3181
      %3183 = vmatmul.f32.gmra.mxu0 %v2049
      %v3184 = vpop.f32.mrf.mxu0
      %v3185 = vadd.f32 0.0, %v3184
      %3186 = vmatmul.f32.gmra.mxu0 %v3135
      %v3187 = vpop.f32.mrf.mxu0
      %v3188 = vadd.f32 0.0, %v3187
      %3189 = vmatmul.f32.gmra.mxu0 %v3137
      %v3190 = vpop.f32.mrf.mxu0
      %v3191 = vadd.f32 0.0, %v3190
      %3192 = vmatmul.f32.gmra.mxu0 %v3139
      %v3193 = vpop.f32.mrf.mxu0
      %v3194 = vadd.f32 0.0, %v3193
      %3195 = vmatmul.f32.gmra.mxu0 %v3141
      %v3196 = vpop.f32.mrf.mxu0
      %v3197 = vadd.f32 0.0, %v3196
      %3198 = vdwg.mxu0
      %v3199 = vadd.f32 %v3115, %v3164
      %v3200 = vadd.f32 %v3116, %v3167
      %v3201 = vadd.f32 %v3117, %v3170
      %v3202 = vadd.f32 %v3118, %v3173
      %v3203 = vadd.f32 %v3119, %v3176
      %v3204 = vadd.f32 %v3120, %v3179
      %v3205 = vadd.f32 %v3121, %v3182
      %v3206 = vadd.f32 %v3122, %v3185
      %v3207 = vadd.f32 %v3123, %v3188
      %v3208 = vadd.f32 %v3124, %v3191
      %v3209 = vadd.f32 %v3125, %v3194
      %v3210 = vadd.f32 %v3126, %v3197
      %v3211 = vld [vmem:[%s4 + $0x78] sm:$0xff]
      %v3212 = vld [vmem:[%s4 + $0x80] sm:$0x3]
      %v3213 = vrot.slane %v1972, 2
      %v3214 = vsel %vm2192, %v2214, %v3213
      %v3215 = vrot.slane %v1975, 2
      %v3216 = vsel %vm2192, %v3213, %v3215
      %v3217 = vrot.slane %v1978, 2
      %v3218 = vsel %vm2192, %v3215, %v3217
      %v3219 = vsel %vm2028, %v3214, 0
      %v3221 = vsel %vm2028, %v3216, 0
      %v3223 = vsel %vm2028, %v3218, 0
      %v3225 = vsel %vm2028, %v3217, 0
      %v3228 = vsel %vm2053, %v3212, 0
      %3230 = vmatpush.msra.mxu0 0.0
      %3231 = vmatpush.msra.mxu0 0.0
      %3232 = vmatpush.msra.mxu0 0.0
      %3233 = vmatpush.msra.mxu0 0.0
      %3234 = vmatpush.msra.mxu0 0.0
      %3235 = vmatpush.msra.mxu0 0.0
      %3236 = vmatpush.msra.mxu0 0.0
      %3237 = vmatpush.msra.mxu0 0.0
      %3238 = vmatpush.msra.mxu0 0.0
      %3239 = vmatpush.msra.mxu0 0.0
      %3240 = vmatpush.msra.mxu0 0.0
      %3241 = vmatpush.msra.mxu0 0.0
      %3242 = vmatpush.msra.mxu0 0.0
      %3243 = vmatpush.msra.mxu0 0.0
      %3244 = vmatpush.msra.mxu0 %v3228
      %3245 = vmatpush.msra.mxu0 %v3211
      %3246 = vmatmul.f32.gmra.mxu0 %v2222
      %v3247 = vpop.f32.mrf.mxu0
      %v3248 = vadd.f32 0.0, %v3247
      %3249 = vmatmul.f32.gmra.mxu0 %v2224
      %v3250 = vpop.f32.mrf.mxu0
      %v3251 = vadd.f32 0.0, %v3250
      %3252 = vmatmul.f32.gmra.mxu0 %v2226
      %v3253 = vpop.f32.mrf.mxu0
      %v3254 = vadd.f32 0.0, %v3253
      %3255 = vmatmul.f32.gmra.mxu0 %v2228
      %v3256 = vpop.f32.mrf.mxu0
      %v3257 = vadd.f32 0.0, %v3256
      %3258 = vmatmul.f32.gmra.mxu0 %v2230
      %v3259 = vpop.f32.mrf.mxu0
      %v3260 = vadd.f32 0.0, %v3259
      %3261 = vmatmul.f32.gmra.mxu0 %v2232
      %v3262 = vpop.f32.mrf.mxu0
      %v3263 = vadd.f32 0.0, %v3262
      %3264 = vmatmul.f32.gmra.mxu0 %v2234
      %v3265 = vpop.f32.mrf.mxu0
      %v3266 = vadd.f32 0.0, %v3265
      %3267 = vmatmul.f32.gmra.mxu0 %v2236
      %v3268 = vpop.f32.mrf.mxu0
      %v3269 = vadd.f32 0.0, %v3268
      %3270 = vmatmul.f32.gmra.mxu0 %v3219
      %v3271 = vpop.f32.mrf.mxu0
      %v3272 = vadd.f32 0.0, %v3271
      %3273 = vmatmul.f32.gmra.mxu0 %v3221
      %v3274 = vpop.f32.mrf.mxu0
      %v3275 = vadd.f32 0.0, %v3274
      %3276 = vmatmul.f32.gmra.mxu0 %v3223
      %v3277 = vpop.f32.mrf.mxu0
      %v3278 = vadd.f32 0.0, %v3277
      %3279 = vmatmul.f32.gmra.mxu0 %v3225
      %v3280 = vpop.f32.mrf.mxu0
      %v3281 = vadd.f32 0.0, %v3280
      %3282 = vdwg.mxu0
      %v3283 = vadd.f32 %v3199, %v3248
      %v3284 = vadd.f32 %v3200, %v3251
      %v3285 = vadd.f32 %v3201, %v3254
      %v3286 = vadd.f32 %v3202, %v3257
      %v3287 = vadd.f32 %v3203, %v3260
      %v3288 = vadd.f32 %v3204, %v3263
      %v3289 = vadd.f32 %v3205, %v3266
      %v3290 = vadd.f32 %v3206, %v3269
      %v3291 = vadd.f32 %v3207, %v3272
      %v3292 = vadd.f32 %v3208, %v3275
      %v3293 = vadd.f32 %v3209, %v3278
      %v3294 = vadd.f32 %v3210, %v3281
      %v3295 = vld [vmem:[%s4 + $0x82] sm:$0xff]
      %v3296 = vld [vmem:[%s4 + $0x8a] sm:$0x3]
      %v3297 = vrot.slane %v1972, 3
      %v3298 = vsel %vm2310, %v2332, %v3297
      %v3299 = vrot.slane %v1975, 3
      %v3300 = vsel %vm2310, %v3297, %v3299
      %v3301 = vrot.slane %v1978, 3
      %v3302 = vsel %vm2310, %v3299, %v3301
      %v3303 = vsel %vm2028, %v3298, 0
      %v3305 = vsel %vm2028, %v3300, 0
      %v3307 = vsel %vm2028, %v3302, 0
      %v3309 = vsel %vm2028, %v3301, 0
      %v3312 = vsel %vm2053, %v3296, 0
      %3314 = vmatpush.msra.mxu0 0.0
      %3315 = vmatpush.msra.mxu0 0.0
      %3316 = vmatpush.msra.mxu0 0.0
      %3317 = vmatpush.msra.mxu0 0.0
      %3318 = vmatpush.msra.mxu0 0.0
      %3319 = vmatpush.msra.mxu0 0.0
      %3320 = vmatpush.msra.mxu0 0.0
      %3321 = vmatpush.msra.mxu0 0.0
      %3322 = vmatpush.msra.mxu0 0.0
      %3323 = vmatpush.msra.mxu0 0.0
      %3324 = vmatpush.msra.mxu0 0.0
      %3325 = vmatpush.msra.mxu0 0.0
      %3326 = vmatpush.msra.mxu0 0.0
      %3327 = vmatpush.msra.mxu0 0.0
      %3328 = vmatpush.msra.mxu0 %v3312
      %3329 = vmatpush.msra.mxu0 %v3295
      %3330 = vmatmul.f32.gmra.mxu0 %v2340
      %v3331 = vpop.f32.mrf.mxu0
      %v3332 = vadd.f32 0.0, %v3331
      %3333 = vmatmul.f32.gmra.mxu0 %v2342
      %v3334 = vpop.f32.mrf.mxu0
      %v3335 = vadd.f32 0.0, %v3334
      %3336 = vmatmul.f32.gmra.mxu0 %v2344
      %v3337 = vpop.f32.mrf.mxu0
      %v3338 = vadd.f32 0.0, %v3337
      %3339 = vmatmul.f32.gmra.mxu0 %v2346
      %v3340 = vpop.f32.mrf.mxu0
      %v3341 = vadd.f32 0.0, %v3340
      %3342 = vmatmul.f32.gmra.mxu0 %v2348
      %v3343 = vpop.f32.mrf.mxu0
      %v3344 = vadd.f32 0.0, %v3343
      %3345 = vmatmul.f32.gmra.mxu0 %v2350
      %v3346 = vpop.f32.mrf.mxu0
      %v3347 = vadd.f32 0.0, %v3346
      %3348 = vmatmul.f32.gmra.mxu0 %v2352
      %v3349 = vpop.f32.mrf.mxu0
      %v3350 = vadd.f32 0.0, %v3349
      %3351 = vmatmul.f32.gmra.mxu0 %v2354
      %v3352 = vpop.f32.mrf.mxu0
      %v3353 = vadd.f32 0.0, %v3352
      %3354 = vmatmul.f32.gmra.mxu0 %v3303
      %v3355 = vpop.f32.mrf.mxu0
      %v3356 = vadd.f32 0.0, %v3355
      %3357 = vmatmul.f32.gmra.mxu0 %v3305
      %v3358 = vpop.f32.mrf.mxu0
      %v3359 = vadd.f32 0.0, %v3358
      %3360 = vmatmul.f32.gmra.mxu0 %v3307
      %v3361 = vpop.f32.mrf.mxu0
      %v3362 = vadd.f32 0.0, %v3361
      %3363 = vmatmul.f32.gmra.mxu0 %v3309
      %v3364 = vpop.f32.mrf.mxu0
      %v3365 = vadd.f32 0.0, %v3364
      %3366 = vdwg.mxu0
      %v3367 = vadd.f32 %v3283, %v3332
      %v3368 = vadd.f32 %v3284, %v3335
      %v3369 = vadd.f32 %v3285, %v3338
      %v3370 = vadd.f32 %v3286, %v3341
      %v3371 = vadd.f32 %v3287, %v3344
      %v3372 = vadd.f32 %v3288, %v3347
      %v3373 = vadd.f32 %v3289, %v3350
      %v3374 = vadd.f32 %v3290, %v3353
      %v3375 = vadd.f32 %v3291, %v3356
      %v3376 = vadd.f32 %v3292, %v3359
      %v3377 = vadd.f32 %v3293, %v3362
      %v3378 = vadd.f32 %v3294, %v3365
      %v3379 = vld [vmem:[%s4 + $0x8c] sm:$0xff]
      %v3380 = vld [vmem:[%s4 + $0x94] sm:$0x3]
      %v3381 = vrot.slane %v1975, 4
      %v3382 = vsel %vm2428, %v2547, %v3381
      %v3383 = vrot.slane %v1978, 4
      %v3384 = vsel %vm2428, %v3381, %v3383
      %v3385 = vsel %vm2028, %v3382, 0
      %v3387 = vsel %vm2028, %v3384, 0
      %v3389 = vsel %vm2028, %v3383, 0
      %v3392 = vsel %vm2053, %v3380, 0
      %3394 = vmatpush.msra.mxu0 0.0
      %3395 = vmatpush.msra.mxu0 0.0
      %3396 = vmatpush.msra.mxu0 0.0
      %3397 = vmatpush.msra.mxu0 0.0
      %3398 = vmatpush.msra.mxu0 0.0
      %3399 = vmatpush.msra.mxu0 0.0
      %3400 = vmatpush.msra.mxu0 0.0
      %3401 = vmatpush.msra.mxu0 0.0
      %3402 = vmatpush.msra.mxu0 0.0
      %3403 = vmatpush.msra.mxu0 0.0
      %3404 = vmatpush.msra.mxu0 0.0
      %3405 = vmatpush.msra.mxu0 0.0
      %3406 = vmatpush.msra.mxu0 0.0
      %3407 = vmatpush.msra.mxu0 0.0
      %3408 = vmatpush.msra.mxu0 %v3392
      %3409 = vmatpush.msra.mxu0 %v3379
      %3410 = vmatmul.f32.gmra.mxu0 %v2458
      %v3411 = vpop.f32.mrf.mxu0
      %v3412 = vadd.f32 0.0, %v3411
      %3413 = vmatmul.f32.gmra.mxu0 %v2460
      %v3414 = vpop.f32.mrf.mxu0
      %v3415 = vadd.f32 0.0, %v3414
      %3416 = vmatmul.f32.gmra.mxu0 %v2462
      %v3417 = vpop.f32.mrf.mxu0
      %v3418 = vadd.f32 0.0, %v3417
      %3419 = vmatmul.f32.gmra.mxu0 %v2464
      %v3420 = vpop.f32.mrf.mxu0
      %v3421 = vadd.f32 0.0, %v3420
      %3422 = vmatmul.f32.gmra.mxu0 %v2466
      %v3423 = vpop.f32.mrf.mxu0
      %v3424 = vadd.f32 0.0, %v3423
      %3425 = vmatmul.f32.gmra.mxu0 %v2468
      %v3426 = vpop.f32.mrf.mxu0
      %v3427 = vadd.f32 0.0, %v3426
      %3428 = vmatmul.f32.gmra.mxu0 %v2470
      %v3429 = vpop.f32.mrf.mxu0
      %v3430 = vadd.f32 0.0, %v3429
      %3431 = vmatmul.f32.gmra.mxu0 %v2472
      %v3432 = vpop.f32.mrf.mxu0
      %v3433 = vadd.f32 0.0, %v3432
      %3434 = vmatmul.f32.gmra.mxu0 %v2549
      %v3435 = vpop.f32.mrf.mxu0
      %v3436 = vadd.f32 0.0, %v3435
      %3437 = vmatmul.f32.gmra.mxu0 %v3385
      %v3438 = vpop.f32.mrf.mxu0
      %v3439 = vadd.f32 0.0, %v3438
      %3440 = vmatmul.f32.gmra.mxu0 %v3387
      %v3441 = vpop.f32.mrf.mxu0
      %v3442 = vadd.f32 0.0, %v3441
      %3443 = vmatmul.f32.gmra.mxu0 %v3389
      %v3444 = vpop.f32.mrf.mxu0
      %v3445 = vadd.f32 0.0, %v3444
      %3446 = vdwg.mxu0
      %v3447 = vadd.f32 %v3367, %v3412
      %v3448 = vadd.f32 %v3368, %v3415
      %v3449 = vadd.f32 %v3369, %v3418
      %v3450 = vadd.f32 %v3370, %v3421
      %v3451 = vadd.f32 %v3371, %v3424
      %v3452 = vadd.f32 %v3372, %v3427
      %v3453 = vadd.f32 %v3373, %v3430
      %v3454 = vadd.f32 %v3374, %v3433
      %v3455 = vadd.f32 %v3375, %v3436
      %v3456 = vadd.f32 %v3376, %v3439
      %v3457 = vadd.f32 %v3377, %v3442
      %v3458 = vadd.f32 %v3378, %v3445
      %v3459 = vld [vmem:[%s4 + $0x96] sm:$0xff]
      %v3460 = vld [vmem:[%s4 + $0x9e] sm:$0x3]
      %v3462 = vrot.slane %v1981, 4
      %v3463 = vsel %vm2428, %v3383, %v3462
      %v3464 = vsel %vm2028, %v3463, 0
      %v3466 = vsel %vm2028, %v3462, 0
      %v3469 = vsel %vm2053, %v3460, 0
      %3471 = vmatpush.msra.mxu0 0.0
      %3472 = vmatpush.msra.mxu0 0.0
      %3473 = vmatpush.msra.mxu0 0.0
      %3474 = vmatpush.msra.mxu0 0.0
      %3475 = vmatpush.msra.mxu0 0.0
      %3476 = vmatpush.msra.mxu0 0.0
      %3477 = vmatpush.msra.mxu0 0.0
      %3478 = vmatpush.msra.mxu0 0.0
      %3479 = vmatpush.msra.mxu0 0.0
      %3480 = vmatpush.msra.mxu0 0.0
      %3481 = vmatpush.msra.mxu0 0.0
      %3482 = vmatpush.msra.mxu0 0.0
      %3483 = vmatpush.msra.mxu0 0.0
      %3484 = vmatpush.msra.mxu0 0.0
      %3485 = vmatpush.msra.mxu0 %v3469
      %3486 = vmatpush.msra.mxu0 %v3459
      %3487 = vmatmul.f32.gmra.mxu0 %v2460
      %v3488 = vpop.f32.mrf.mxu0
      %v3489 = vadd.f32 0.0, %v3488
      %3490 = vmatmul.f32.gmra.mxu0 %v2462
      %v3491 = vpop.f32.mrf.mxu0
      %v3492 = vadd.f32 0.0, %v3491
      %3493 = vmatmul.f32.gmra.mxu0 %v2464
      %v3494 = vpop.f32.mrf.mxu0
      %v3495 = vadd.f32 0.0, %v3494
      %3496 = vmatmul.f32.gmra.mxu0 %v2466
      %v3497 = vpop.f32.mrf.mxu0
      %v3498 = vadd.f32 0.0, %v3497
      %3499 = vmatmul.f32.gmra.mxu0 %v2468
      %v3500 = vpop.f32.mrf.mxu0
      %v3501 = vadd.f32 0.0, %v3500
      %3502 = vmatmul.f32.gmra.mxu0 %v2470
      %v3503 = vpop.f32.mrf.mxu0
      %v3504 = vadd.f32 0.0, %v3503
      %3505 = vmatmul.f32.gmra.mxu0 %v2472
      %v3506 = vpop.f32.mrf.mxu0
      %v3507 = vadd.f32 0.0, %v3506
      %3508 = vmatmul.f32.gmra.mxu0 %v2549
      %v3509 = vpop.f32.mrf.mxu0
      %v3510 = vadd.f32 0.0, %v3509
      %3511 = vmatmul.f32.gmra.mxu0 %v3385
      %v3512 = vpop.f32.mrf.mxu0
      %v3513 = vadd.f32 0.0, %v3512
      %3514 = vmatmul.f32.gmra.mxu0 %v3387
      %v3515 = vpop.f32.mrf.mxu0
      %v3516 = vadd.f32 0.0, %v3515
      %3517 = vmatmul.f32.gmra.mxu0 %v3464
      %v3518 = vpop.f32.mrf.mxu0
      %v3519 = vadd.f32 0.0, %v3518
      %3520 = vmatmul.f32.gmra.mxu0 %v3466
      %v3521 = vpop.f32.mrf.mxu0
      %v3522 = vadd.f32 0.0, %v3521
      %3523 = vdwg.mxu0
      %v3524 = vadd.f32 %v3447, %v3489
      %v3525 = vadd.f32 %v3448, %v3492
      %v3526 = vadd.f32 %v3449, %v3495
      %v3527 = vadd.f32 %v3450, %v3498
      %v3528 = vadd.f32 %v3451, %v3501
      %v3529 = vadd.f32 %v3452, %v3504
      %v3530 = vadd.f32 %v3453, %v3507
      %v3531 = vadd.f32 %v3454, %v3510
      %v3532 = vadd.f32 %v3455, %v3513
      %v3533 = vadd.f32 %v3456, %v3516
      %v3534 = vadd.f32 %v3457, %v3519
      %v3535 = vadd.f32 %v3458, %v3522
      %v3536 = vld [vmem:[%s4 + $0xa0] sm:$0xff]
      %v3537 = vld [vmem:[%s4 + $0xa8] sm:$0x3]
      %v3539 = vrot.slane %v1978, 5
      %v3540 = vsel %vm2624, %v2648, %v3539
      %v3541 = vrot.slane %v1981, 5
      %v3542 = vsel %vm2624, %v3539, %v3541
      %v3543 = vrot.slane %v1984, 5
      %v3544 = vsel %vm2624, %v3541, %v3543
      %v3545 = vsel %vm2028, %v3540, 0
      %v3547 = vsel %vm2028, %v3542, 0
      %v3549 = vsel %vm2028, %v3544, 0
      %v3552 = vsel %vm2053, %v3537, 0
      %3554 = vmatpush.msra.mxu0 0.0
      %3555 = vmatpush.msra.mxu0 0.0
      %3556 = vmatpush.msra.mxu0 0.0
      %3557 = vmatpush.msra.mxu0 0.0
      %3558 = vmatpush.msra.mxu0 0.0
      %3559 = vmatpush.msra.mxu0 0.0
      %3560 = vmatpush.msra.mxu0 0.0
      %3561 = vmatpush.msra.mxu0 0.0
      %3562 = vmatpush.msra.mxu0 0.0
      %3563 = vmatpush.msra.mxu0 0.0
      %3564 = vmatpush.msra.mxu0 0.0
      %3565 = vmatpush.msra.mxu0 0.0
      %3566 = vmatpush.msra.mxu0 0.0
      %3567 = vmatpush.msra.mxu0 0.0
      %3568 = vmatpush.msra.mxu0 %v3552
      %3569 = vmatpush.msra.mxu0 %v3536
      %3570 = vmatmul.f32.gmra.mxu0 %v2656
      %v3571 = vpop.f32.mrf.mxu0
      %v3572 = vadd.f32 0.0, %v3571
      %3573 = vmatmul.f32.gmra.mxu0 %v2658
      %v3574 = vpop.f32.mrf.mxu0
      %v3575 = vadd.f32 0.0, %v3574
      %3576 = vmatmul.f32.gmra.mxu0 %v2660
      %v3577 = vpop.f32.mrf.mxu0
      %v3578 = vadd.f32 0.0, %v3577
      %3579 = vmatmul.f32.gmra.mxu0 %v2662
      %v3580 = vpop.f32.mrf.mxu0
      %v3581 = vadd.f32 0.0, %v3580
      %3582 = vmatmul.f32.gmra.mxu0 %v2664
      %v3583 = vpop.f32.mrf.mxu0
      %v3584 = vadd.f32 0.0, %v3583
      %3585 = vmatmul.f32.gmra.mxu0 %v2666
      %v3586 = vpop.f32.mrf.mxu0
      %v3587 = vadd.f32 0.0, %v3586
      %3588 = vmatmul.f32.gmra.mxu0 %v2668
      %v3589 = vpop.f32.mrf.mxu0
      %v3590 = vadd.f32 0.0, %v3589
      %3591 = vmatmul.f32.gmra.mxu0 %v2670
      %v3592 = vpop.f32.mrf.mxu0
      %v3593 = vadd.f32 0.0, %v3592
      %3594 = vmatmul.f32.gmra.mxu0 %v2672
      %v3595 = vpop.f32.mrf.mxu0
      %v3596 = vadd.f32 0.0, %v3595
      %3597 = vmatmul.f32.gmra.mxu0 %v3545
      %v3598 = vpop.f32.mrf.mxu0
      %v3599 = vadd.f32 0.0, %v3598
      %3600 = vmatmul.f32.gmra.mxu0 %v3547
      %v3601 = vpop.f32.mrf.mxu0
      %v3602 = vadd.f32 0.0, %v3601
      %3603 = vmatmul.f32.gmra.mxu0 %v3549
      %v3604 = vpop.f32.mrf.mxu0
      %v3605 = vadd.f32 0.0, %v3604
      %3606 = vdwg.mxu0
      %v3607 = vadd.f32 %v3524, %v3572
      %v3608 = vadd.f32 %v3525, %v3575
      %v3609 = vadd.f32 %v3526, %v3578
      %v3610 = vadd.f32 %v3527, %v3581
      %v3611 = vadd.f32 %v3528, %v3584
      %v3612 = vadd.f32 %v3529, %v3587
      %v3613 = vadd.f32 %v3530, %v3590
      %v3614 = vadd.f32 %v3531, %v3593
      %v3615 = vadd.f32 %v3532, %v3596
      %v3616 = vadd.f32 %v3533, %v3599
      %v3617 = vadd.f32 %v3534, %v3602
      %v3618 = vadd.f32 %v3535, %v3605
      %v3619 = vld [vmem:[%s4 + $0xaa] sm:$0xff]
      %v3620 = vld [vmem:[%s4 + $0xb2] sm:$0x3]
      %v3621 = vrot.slane %v1978, 6
      %v3622 = vsel %vm2053, %v2767, %v3621
      %v3623 = vrot.slane %v1981, 6
      %v3624 = vsel %vm2053, %v3621, %v3623
      %v3625 = vrot.slane %v1984, 6
      %v3626 = vsel %vm2053, %v3623, %v3625
      %v3627 = vsel %vm2028, %v3622, 0
      %v3629 = vsel %vm2028, %v3624, 0
      %v3631 = vsel %vm2028, %v3626, 0
      %v3634 = vsel %vm2053, %v3620, 0
      %3636 = vmatpush.msra.mxu0 0.0
      %3637 = vmatpush.msra.mxu0 0.0
      %3638 = vmatpush.msra.mxu0 0.0
      %3639 = vmatpush.msra.mxu0 0.0
      %3640 = vmatpush.msra.mxu0 0.0
      %3641 = vmatpush.msra.mxu0 0.0
      %3642 = vmatpush.msra.mxu0 0.0
      %3643 = vmatpush.msra.mxu0 0.0
      %3644 = vmatpush.msra.mxu0 0.0
      %3645 = vmatpush.msra.mxu0 0.0
      %3646 = vmatpush.msra.mxu0 0.0
      %3647 = vmatpush.msra.mxu0 0.0
      %3648 = vmatpush.msra.mxu0 0.0
      %3649 = vmatpush.msra.mxu0 0.0
      %3650 = vmatpush.msra.mxu0 %v3634
      %3651 = vmatpush.msra.mxu0 %v3619
      %3652 = vmatmul.f32.gmra.mxu0 %v2775
      %v3653 = vpop.f32.mrf.mxu0
      %v3654 = vadd.f32 0.0, %v3653
      %3655 = vmatmul.f32.gmra.mxu0 %v2777
      %v3656 = vpop.f32.mrf.mxu0
      %v3657 = vadd.f32 0.0, %v3656
      %3658 = vmatmul.f32.gmra.mxu0 %v2779
      %v3659 = vpop.f32.mrf.mxu0
      %v3660 = vadd.f32 0.0, %v3659
      %3661 = vmatmul.f32.gmra.mxu0 %v2781
      %v3662 = vpop.f32.mrf.mxu0
      %v3663 = vadd.f32 0.0, %v3662
      %3664 = vmatmul.f32.gmra.mxu0 %v2783
      %v3665 = vpop.f32.mrf.mxu0
      %v3666 = vadd.f32 0.0, %v3665
      %3667 = vmatmul.f32.gmra.mxu0 %v2785
      %v3668 = vpop.f32.mrf.mxu0
      %v3669 = vadd.f32 0.0, %v3668
      %3670 = vmatmul.f32.gmra.mxu0 %v2787
      %v3671 = vpop.f32.mrf.mxu0
      %v3672 = vadd.f32 0.0, %v3671
      %3673 = vmatmul.f32.gmra.mxu0 %v2789
      %v3674 = vpop.f32.mrf.mxu0
      %v3675 = vadd.f32 0.0, %v3674
      %3676 = vmatmul.f32.gmra.mxu0 %v2791
      %v3677 = vpop.f32.mrf.mxu0
      %v3678 = vadd.f32 0.0, %v3677
      %3679 = vmatmul.f32.gmra.mxu0 %v3627
      %v3680 = vpop.f32.mrf.mxu0
      %v3681 = vadd.f32 0.0, %v3680
      %3682 = vmatmul.f32.gmra.mxu0 %v3629
      %v3683 = vpop.f32.mrf.mxu0
      %v3684 = vadd.f32 0.0, %v3683
      %3685 = vmatmul.f32.gmra.mxu0 %v3631
      %v3686 = vpop.f32.mrf.mxu0
      %v3687 = vadd.f32 0.0, %v3686
      %3688 = vdwg.mxu0
      %v3689 = vadd.f32 %v3607, %v3654
      %v3690 = vadd.f32 %v3608, %v3657
      %v3691 = vadd.f32 %v3609, %v3660
      %v3692 = vadd.f32 %v3610, %v3663
      %v3693 = vadd.f32 %v3611, %v3666
      %v3694 = vadd.f32 %v3612, %v3669
      %v3695 = vadd.f32 %v3613, %v3672
      %v3696 = vadd.f32 %v3614, %v3675
      %v3697 = vadd.f32 %v3615, %v3678
      %v3698 = vadd.f32 %v3616, %v3681
      %v3699 = vadd.f32 %v3617, %v3684
      %v3700 = vadd.f32 %v3618, %v3687
      %v3701 = vld [vmem:[%s4 + $0xb4] sm:$0xff]
      %v3702 = vld [vmem:[%s4 + $0xbc] sm:$0x3]
      %v3703 = vrot.slane %v1978, 7
      %v3704 = vsel %vm748, %v2886, %v3703
      %v3705 = vrot.slane %v1981, 7
      %v3706 = vsel %vm748, %v3703, %v3705
      %v3707 = vrot.slane %v1984, 7
      %v3708 = vsel %vm748, %v3705, %v3707
      %v3709 = vsel %vm2028, %v3704, 0
      %v3711 = vsel %vm2028, %v3706, 0
      %v3713 = vsel %vm2028, %v3708, 0
      %v3716 = vsel %vm2053, %v3702, 0
      %3718 = vmatpush.msra.mxu0 0.0
      %3719 = vmatpush.msra.mxu0 0.0
      %3720 = vmatpush.msra.mxu0 0.0
      %3721 = vmatpush.msra.mxu0 0.0
      %3722 = vmatpush.msra.mxu0 0.0
      %3723 = vmatpush.msra.mxu0 0.0
      %3724 = vmatpush.msra.mxu0 0.0
      %3725 = vmatpush.msra.mxu0 0.0
      %3726 = vmatpush.msra.mxu0 0.0
      %3727 = vmatpush.msra.mxu0 0.0
      %3728 = vmatpush.msra.mxu0 0.0
      %3729 = vmatpush.msra.mxu0 0.0
      %3730 = vmatpush.msra.mxu0 0.0
      %3731 = vmatpush.msra.mxu0 0.0
      %3732 = vmatpush.msra.mxu0 %v3716
      %3733 = vmatpush.msra.mxu0 %v3701
      %3734 = vmatmul.f32.gmra.mxu0 %v2894
      %v3735 = vpop.f32.mrf.mxu0
      %v3736 = vadd.f32 0.0, %v3735
      %3737 = vmatmul.f32.gmra.mxu0 %v2896
      %v3738 = vpop.f32.mrf.mxu0
      %v3739 = vadd.f32 0.0, %v3738
      %3740 = vmatmul.f32.gmra.mxu0 %v2898
      %v3741 = vpop.f32.mrf.mxu0
      %v3742 = vadd.f32 0.0, %v3741
      %3743 = vmatmul.f32.gmra.mxu0 %v2900
      %v3744 = vpop.f32.mrf.mxu0
      %v3745 = vadd.f32 0.0, %v3744
      %3746 = vmatmul.f32.gmra.mxu0 %v2902
      %v3747 = vpop.f32.mrf.mxu0
      %v3748 = vadd.f32 0.0, %v3747
      %3749 = vmatmul.f32.gmra.mxu0 %v2904
      %v3750 = vpop.f32.mrf.mxu0
      %v3751 = vadd.f32 0.0, %v3750
      %3752 = vmatmul.f32.gmra.mxu0 %v2906
      %v3753 = vpop.f32.mrf.mxu0
      %v3754 = vadd.f32 0.0, %v3753
      %3755 = vmatmul.f32.gmra.mxu0 %v2908
      %v3756 = vpop.f32.mrf.mxu0
      %v3757 = vadd.f32 0.0, %v3756
      %3758 = vmatmul.f32.gmra.mxu0 %v2910
      %v3759 = vpop.f32.mrf.mxu0
      %v3760 = vadd.f32 0.0, %v3759
      %3761 = vmatmul.f32.gmra.mxu0 %v3709
      %v3762 = vpop.f32.mrf.mxu0
      %v3763 = vadd.f32 0.0, %v3762
      %3764 = vmatmul.f32.gmra.mxu0 %v3711
      %v3765 = vpop.f32.mrf.mxu0
      %v3766 = vadd.f32 0.0, %v3765
      %3767 = vmatmul.f32.gmra.mxu0 %v3713
      %v3768 = vpop.f32.mrf.mxu0
      %v3769 = vadd.f32 0.0, %v3768
      %3770 = vdwg.mxu0
      %v3771 = vadd.f32 %v3689, %v3736
      %v3772 = vadd.f32 %v3690, %v3739
      %v3773 = vadd.f32 %v3691, %v3742
      %v3774 = vadd.f32 %v3692, %v3745
      %v3775 = vadd.f32 %v3693, %v3748
      %v3776 = vadd.f32 %v3694, %v3751
      %v3777 = vadd.f32 %v3695, %v3754
      %v3778 = vadd.f32 %v3696, %v3757
      %v3779 = vadd.f32 %v3697, %v3760
      %v3780 = vadd.f32 %v3698, %v3763
      %v3781 = vadd.f32 %v3699, %v3766
      %v3782 = vadd.f32 %v3700, %v3769
      %v3783 = vld [vmem:[%s4 + $0xbe] sm:$0xff]
      %v3784 = vld [vmem:[%s4 + $0xc6] sm:$0x3]
      %v3785 = vsel %vm2028, %v1981, 0
      %v3787 = vsel %vm2028, %v1984, 0
      %v3790 = vsel %vm2053, %v3784, 0
      %3792 = vmatpush.msra.mxu0 0.0
      %3793 = vmatpush.msra.mxu0 0.0
      %3794 = vmatpush.msra.mxu0 0.0
      %3795 = vmatpush.msra.mxu0 0.0
      %3796 = vmatpush.msra.mxu0 0.0
      %3797 = vmatpush.msra.mxu0 0.0
      %3798 = vmatpush.msra.mxu0 0.0
      %3799 = vmatpush.msra.mxu0 0.0
      %3800 = vmatpush.msra.mxu0 0.0
      %3801 = vmatpush.msra.mxu0 0.0
      %3802 = vmatpush.msra.mxu0 0.0
      %3803 = vmatpush.msra.mxu0 0.0
      %3804 = vmatpush.msra.mxu0 0.0
      %3805 = vmatpush.msra.mxu0 0.0
      %3806 = vmatpush.msra.mxu0 %v3790
      %3807 = vmatpush.msra.mxu0 %v3783
      %3808 = vmatmul.f32.gmra.mxu0 %v2120
      %v3809 = vpop.f32.mrf.mxu0
      %v3810 = vadd.f32 0.0, %v3809
      %3811 = vmatmul.f32.gmra.mxu0 %v2122
      %v3812 = vpop.f32.mrf.mxu0
      %v3813 = vadd.f32 0.0, %v3812
      %3814 = vmatmul.f32.gmra.mxu0 %v2124
      %v3815 = vpop.f32.mrf.mxu0
      %v3816 = vadd.f32 0.0, %v3815
      %3817 = vmatmul.f32.gmra.mxu0 %v2126
      %v3818 = vpop.f32.mrf.mxu0
      %v3819 = vadd.f32 0.0, %v3818
      %3820 = vmatmul.f32.gmra.mxu0 %v2128
      %v3821 = vpop.f32.mrf.mxu0
      %v3822 = vadd.f32 0.0, %v3821
      %3823 = vmatmul.f32.gmra.mxu0 %v2130
      %v3824 = vpop.f32.mrf.mxu0
      %v3825 = vadd.f32 0.0, %v3824
      %3826 = vmatmul.f32.gmra.mxu0 %v2132
      %v3827 = vpop.f32.mrf.mxu0
      %v3828 = vadd.f32 0.0, %v3827
      %3829 = vmatmul.f32.gmra.mxu0 %v2982
      %v3830 = vpop.f32.mrf.mxu0
      %v3831 = vadd.f32 0.0, %v3830
      %3832 = vmatmul.f32.gmra.mxu0 %v2984
      %v3833 = vpop.f32.mrf.mxu0
      %v3834 = vadd.f32 0.0, %v3833
      %3835 = vmatmul.f32.gmra.mxu0 %v3057
      %v3836 = vpop.f32.mrf.mxu0
      %v3837 = vadd.f32 0.0, %v3836
      %3838 = vmatmul.f32.gmra.mxu0 %v3785
      %v3839 = vpop.f32.mrf.mxu0
      %v3840 = vadd.f32 0.0, %v3839
      %3841 = vmatmul.f32.gmra.mxu0 %v3787
      %v3842 = vpop.f32.mrf.mxu0
      %v3843 = vadd.f32 0.0, %v3842
      %3844 = vdwg.mxu0
      %v3845 = vadd.f32 %v3771, %v3810
      %v3846 = vadd.f32 %v3772, %v3813
      %v3847 = vadd.f32 %v3773, %v3816
      %v3848 = vadd.f32 %v3774, %v3819
      %v3849 = vadd.f32 %v3775, %v3822
      %v3850 = vadd.f32 %v3776, %v3825
      %v3851 = vadd.f32 %v3777, %v3828
      %v3852 = vadd.f32 %v3778, %v3831
      %v3853 = vadd.f32 %v3779, %v3834
      %v3854 = vadd.f32 %v3780, %v3837
      %v3855 = vadd.f32 %v3781, %v3840
      %v3856 = vadd.f32 %v3782, %v3843
      %v3857 = vld [vmem:[%s4 + $0xc8] sm:$0xff]
      %v3858 = vld [vmem:[%s4 + $0xd0] sm:$0x3]
      %v3860 = vsel %vm2028, %v1987, 0
      %v3863 = vsel %vm2053, %v3858, 0
      %3865 = vmatpush.msra.mxu0 0.0
      %3866 = vmatpush.msra.mxu0 0.0
      %3867 = vmatpush.msra.mxu0 0.0
      %3868 = vmatpush.msra.mxu0 0.0
      %3869 = vmatpush.msra.mxu0 0.0
      %3870 = vmatpush.msra.mxu0 0.0
      %3871 = vmatpush.msra.mxu0 0.0
      %3872 = vmatpush.msra.mxu0 0.0
      %3873 = vmatpush.msra.mxu0 0.0
      %3874 = vmatpush.msra.mxu0 0.0
      %3875 = vmatpush.msra.mxu0 0.0
      %3876 = vmatpush.msra.mxu0 0.0
      %3877 = vmatpush.msra.mxu0 0.0
      %3878 = vmatpush.msra.mxu0 0.0
      %3879 = vmatpush.msra.mxu0 %v3863
      %3880 = vmatpush.msra.mxu0 %v3857
      %3881 = vmatmul.f32.gmra.mxu0 %v2122
      %v3882 = vpop.f32.mrf.mxu0
      %v3883 = vadd.f32 0.0, %v3882
      %3884 = vmatmul.f32.gmra.mxu0 %v2124
      %v3885 = vpop.f32.mrf.mxu0
      %v3886 = vadd.f32 0.0, %v3885
      %3887 = vmatmul.f32.gmra.mxu0 %v2126
      %v3888 = vpop.f32.mrf.mxu0
      %v3889 = vadd.f32 0.0, %v3888
      %3890 = vmatmul.f32.gmra.mxu0 %v2128
      %v3891 = vpop.f32.mrf.mxu0
      %v3892 = vadd.f32 0.0, %v3891
      %3893 = vmatmul.f32.gmra.mxu0 %v2130
      %v3894 = vpop.f32.mrf.mxu0
      %v3895 = vadd.f32 0.0, %v3894
      %3896 = vmatmul.f32.gmra.mxu0 %v2132
      %v3897 = vpop.f32.mrf.mxu0
      %v3898 = vadd.f32 0.0, %v3897
      %3899 = vmatmul.f32.gmra.mxu0 %v2982
      %v3900 = vpop.f32.mrf.mxu0
      %v3901 = vadd.f32 0.0, %v3900
      %3902 = vmatmul.f32.gmra.mxu0 %v2984
      %v3903 = vpop.f32.mrf.mxu0
      %v3904 = vadd.f32 0.0, %v3903
      %3905 = vmatmul.f32.gmra.mxu0 %v3057
      %v3906 = vpop.f32.mrf.mxu0
      %v3907 = vadd.f32 0.0, %v3906
      %3908 = vmatmul.f32.gmra.mxu0 %v3785
      %v3909 = vpop.f32.mrf.mxu0
      %v3910 = vadd.f32 0.0, %v3909
      %3911 = vmatmul.f32.gmra.mxu0 %v3787
      %v3912 = vpop.f32.mrf.mxu0
      %v3913 = vadd.f32 0.0, %v3912
      %3914 = vmatmul.f32.gmra.mxu0 %v3860
      %v3915 = vpop.f32.mrf.mxu0
      %v3916 = vadd.f32 0.0, %v3915
      %3917 = vdwg.mxu0
      %v3918 = vadd.f32 %v3845, %v3883
      %v3919 = vadd.f32 %v3846, %v3886
      %v3920 = vadd.f32 %v3847, %v3889
      %v3921 = vadd.f32 %v3848, %v3892
      %v3922 = vadd.f32 %v3849, %v3895
      %v3923 = vadd.f32 %v3850, %v3898
      %v3924 = vadd.f32 %v3851, %v3901
      %v3925 = vadd.f32 %v3852, %v3904
      %v3926 = vadd.f32 %v3853, %v3907
      %v3927 = vadd.f32 %v3854, %v3910
      %v3928 = vadd.f32 %v3855, %v3913
      %v3929 = vadd.f32 %v3856, %v3916
      %v3930 = vld [vmem:[%s4 + $0xd2] sm:$0xff]
      %v3931 = vld [vmem:[%s4 + $0xda] sm:$0x3]
      %v3932 = vrot.slane %v1981, 1
      %v3933 = vsel %vm1129, %v3133, %v3932
      %v3934 = vrot.slane %v1984, 1
      %v3935 = vsel %vm1129, %v3932, %v3934
      %v3936 = vrot.slane %v1987, 1
      %v3937 = vsel %vm1129, %v3934, %v3936
      %v3938 = vsel %vm2028, %v3933, 0
      %v3940 = vsel %vm2028, %v3935, 0
      %v3942 = vsel %vm2028, %v3937, 0
      %v3944 = vsel %vm2028, %v3936, 0
      %v3947 = vsel %vm2053, %v3931, 0
      %3949 = vmatpush.msra.mxu0 0.0
      %3950 = vmatpush.msra.mxu0 0.0
      %3951 = vmatpush.msra.mxu0 0.0
      %3952 = vmatpush.msra.mxu0 0.0
      %3953 = vmatpush.msra.mxu0 0.0
      %3954 = vmatpush.msra.mxu0 0.0
      %3955 = vmatpush.msra.mxu0 0.0
      %3956 = vmatpush.msra.mxu0 0.0
      %3957 = vmatpush.msra.mxu0 0.0
      %3958 = vmatpush.msra.mxu0 0.0
      %3959 = vmatpush.msra.mxu0 0.0
      %3960 = vmatpush.msra.mxu0 0.0
      %3961 = vmatpush.msra.mxu0 0.0
      %3962 = vmatpush.msra.mxu0 0.0
      %3963 = vmatpush.msra.mxu0 %v3947
      %3964 = vmatpush.msra.mxu0 %v3930
      %3965 = vmatmul.f32.gmra.mxu0 %v2041
      %v3966 = vpop.f32.mrf.mxu0
      %v3967 = vadd.f32 0.0, %v3966
      %3968 = vmatmul.f32.gmra.mxu0 %v2043
      %v3969 = vpop.f32.mrf.mxu0
      %v3970 = vadd.f32 0.0, %v3969
      %3971 = vmatmul.f32.gmra.mxu0 %v2045
      %v3972 = vpop.f32.mrf.mxu0
      %v3973 = vadd.f32 0.0, %v3972
      %3974 = vmatmul.f32.gmra.mxu0 %v2047
      %v3975 = vpop.f32.mrf.mxu0
      %v3976 = vadd.f32 0.0, %v3975
      %3977 = vmatmul.f32.gmra.mxu0 %v2049
      %v3978 = vpop.f32.mrf.mxu0
      %v3979 = vadd.f32 0.0, %v3978
      %3980 = vmatmul.f32.gmra.mxu0 %v3135
      %v3981 = vpop.f32.mrf.mxu0
      %v3982 = vadd.f32 0.0, %v3981
      %3983 = vmatmul.f32.gmra.mxu0 %v3137
      %v3984 = vpop.f32.mrf.mxu0
      %v3985 = vadd.f32 0.0, %v3984
      %3986 = vmatmul.f32.gmra.mxu0 %v3139
      %v3987 = vpop.f32.mrf.mxu0
      %v3988 = vadd.f32 0.0, %v3987
      %3989 = vmatmul.f32.gmra.mxu0 %v3938
      %v3990 = vpop.f32.mrf.mxu0
      %v3991 = vadd.f32 0.0, %v3990
      %3992 = vmatmul.f32.gmra.mxu0 %v3940
      %v3993 = vpop.f32.mrf.mxu0
      %v3994 = vadd.f32 0.0, %v3993
      %3995 = vmatmul.f32.gmra.mxu0 %v3942
      %v3996 = vpop.f32.mrf.mxu0
      %v3997 = vadd.f32 0.0, %v3996
      %3998 = vmatmul.f32.gmra.mxu0 %v3944
      %v3999 = vpop.f32.mrf.mxu0
      %v4000 = vadd.f32 0.0, %v3999
      %4001 = vdwg.mxu0
      %v4002 = vadd.f32 %v3918, %v3967
      %v4003 = vadd.f32 %v3919, %v3970
      %v4004 = vadd.f32 %v3920, %v3973
      %v4005 = vadd.f32 %v3921, %v3976
      %v4006 = vadd.f32 %v3922, %v3979
      %v4007 = vadd.f32 %v3923, %v3982
      %v4008 = vadd.f32 %v3924, %v3985
      %v4009 = vadd.f32 %v3925, %v3988
      %v4010 = vadd.f32 %v3926, %v3991
      %v4011 = vadd.f32 %v3927, %v3994
      %v4012 = vadd.f32 %v3928, %v3997
      %v4013 = vadd.f32 %v3929, %v4000
      %v4014 = vld [vmem:[%s4 + $0xdc] sm:$0xff]
      %v4015 = vld [vmem:[%s4 + $0xe4] sm:$0x3]
      %v4016 = vrot.slane %v1981, 2
      %v4017 = vsel %vm2192, %v3217, %v4016
      %v4018 = vrot.slane %v1984, 2
      %v4019 = vsel %vm2192, %v4016, %v4018
      %v4020 = vrot.slane %v1987, 2
      %v4021 = vsel %vm2192, %v4018, %v4020
      %v4022 = vsel %vm2028, %v4017, 0
      %v4024 = vsel %vm2028, %v4019, 0
      %v4026 = vsel %vm2028, %v4021, 0
      %v4028 = vsel %vm2028, %v4020, 0
      %v4031 = vsel %vm2053, %v4015, 0
      %4033 = vmatpush.msra.mxu0 0.0
      %4034 = vmatpush.msra.mxu0 0.0
      %4035 = vmatpush.msra.mxu0 0.0
      %4036 = vmatpush.msra.mxu0 0.0
      %4037 = vmatpush.msra.mxu0 0.0
      %4038 = vmatpush.msra.mxu0 0.0
      %4039 = vmatpush.msra.mxu0 0.0
      %4040 = vmatpush.msra.mxu0 0.0
      %4041 = vmatpush.msra.mxu0 0.0
      %4042 = vmatpush.msra.mxu0 0.0
      %4043 = vmatpush.msra.mxu0 0.0
      %4044 = vmatpush.msra.mxu0 0.0
      %4045 = vmatpush.msra.mxu0 0.0
      %4046 = vmatpush.msra.mxu0 0.0
      %4047 = vmatpush.msra.mxu0 %v4031
      %4048 = vmatpush.msra.mxu0 %v4014
      %4049 = vmatmul.f32.gmra.mxu0 %v2228
      %v4050 = vpop.f32.mrf.mxu0
      %v4051 = vadd.f32 0.0, %v4050
      %4052 = vmatmul.f32.gmra.mxu0 %v2230
      %v4053 = vpop.f32.mrf.mxu0
      %v4054 = vadd.f32 0.0, %v4053
      %4055 = vmatmul.f32.gmra.mxu0 %v2232
      %v4056 = vpop.f32.mrf.mxu0
      %v4057 = vadd.f32 0.0, %v4056
      %4058 = vmatmul.f32.gmra.mxu0 %v2234
      %v4059 = vpop.f32.mrf.mxu0
      %v4060 = vadd.f32 0.0, %v4059
      %4061 = vmatmul.f32.gmra.mxu0 %v2236
      %v4062 = vpop.f32.mrf.mxu0
      %v4063 = vadd.f32 0.0, %v4062
      %4064 = vmatmul.f32.gmra.mxu0 %v3219
      %v4065 = vpop.f32.mrf.mxu0
      %v4066 = vadd.f32 0.0, %v4065
      %4067 = vmatmul.f32.gmra.mxu0 %v3221
      %v4068 = vpop.f32.mrf.mxu0
      %v4069 = vadd.f32 0.0, %v4068
      %4070 = vmatmul.f32.gmra.mxu0 %v3223
      %v4071 = vpop.f32.mrf.mxu0
      %v4072 = vadd.f32 0.0, %v4071
      %4073 = vmatmul.f32.gmra.mxu0 %v4022
      %v4074 = vpop.f32.mrf.mxu0
      %v4075 = vadd.f32 0.0, %v4074
      %4076 = vmatmul.f32.gmra.mxu0 %v4024
      %v4077 = vpop.f32.mrf.mxu0
      %v4078 = vadd.f32 0.0, %v4077
      %4079 = vmatmul.f32.gmra.mxu0 %v4026
      %v4080 = vpop.f32.mrf.mxu0
      %v4081 = vadd.f32 0.0, %v4080
      %4082 = vmatmul.f32.gmra.mxu0 %v4028
      %v4083 = vpop.f32.mrf.mxu0
      %v4084 = vadd.f32 0.0, %v4083
      %4085 = vdwg.mxu0
      %v4086 = vadd.f32 %v4002, %v4051
      %v4087 = vadd.f32 %v4003, %v4054
      %v4088 = vadd.f32 %v4004, %v4057
      %v4089 = vadd.f32 %v4005, %v4060
      %v4090 = vadd.f32 %v4006, %v4063
      %v4091 = vadd.f32 %v4007, %v4066
      %v4092 = vadd.f32 %v4008, %v4069
      %v4093 = vadd.f32 %v4009, %v4072
      %v4094 = vadd.f32 %v4010, %v4075
      %v4095 = vadd.f32 %v4011, %v4078
      %v4096 = vadd.f32 %v4012, %v4081
      %v4097 = vadd.f32 %v4013, %v4084
      %v4098 = vld [vmem:[%s4 + $0xe6] sm:$0xff]
      %v4099 = vld [vmem:[%s4 + $0xee] sm:$0x3]
      %v4100 = vrot.slane %v1981, 3
      %v4101 = vsel %vm2310, %v3301, %v4100
      %v4102 = vrot.slane %v1984, 3
      %v4103 = vsel %vm2310, %v4100, %v4102
      %v4104 = vrot.slane %v1987, 3
      %v4105 = vsel %vm2310, %v4102, %v4104
      %v4106 = vsel %vm2028, %v4101, 0
      %v4108 = vsel %vm2028, %v4103, 0
      %v4110 = vsel %vm2028, %v4105, 0
      %v4112 = vsel %vm2028, %v4104, 0
      %v4115 = vsel %vm2053, %v4099, 0
      %4117 = vmatpush.msra.mxu0 0.0
      %4118 = vmatpush.msra.mxu0 0.0
      %4119 = vmatpush.msra.mxu0 0.0
      %4120 = vmatpush.msra.mxu0 0.0
      %4121 = vmatpush.msra.mxu0 0.0
      %4122 = vmatpush.msra.mxu0 0.0
      %4123 = vmatpush.msra.mxu0 0.0
      %4124 = vmatpush.msra.mxu0 0.0
      %4125 = vmatpush.msra.mxu0 0.0
      %4126 = vmatpush.msra.mxu0 0.0
      %4127 = vmatpush.msra.mxu0 0.0
      %4128 = vmatpush.msra.mxu0 0.0
      %4129 = vmatpush.msra.mxu0 0.0
      %4130 = vmatpush.msra.mxu0 0.0
      %4131 = vmatpush.msra.mxu0 %v4115
      %4132 = vmatpush.msra.mxu0 %v4098
      %4133 = vmatmul.f32.gmra.mxu0 %v2346
      %v4134 = vpop.f32.mrf.mxu0
      %v4135 = vadd.f32 0.0, %v4134
      %4136 = vmatmul.f32.gmra.mxu0 %v2348
      %v4137 = vpop.f32.mrf.mxu0
      %v4138 = vadd.f32 0.0, %v4137
      %4139 = vmatmul.f32.gmra.mxu0 %v2350
      %v4140 = vpop.f32.mrf.mxu0
      %v4141 = vadd.f32 0.0, %v4140
      %4142 = vmatmul.f32.gmra.mxu0 %v2352
      %v4143 = vpop.f32.mrf.mxu0
      %v4144 = vadd.f32 0.0, %v4143
      %4145 = vmatmul.f32.gmra.mxu0 %v2354
      %v4146 = vpop.f32.mrf.mxu0
      %v4147 = vadd.f32 0.0, %v4146
      %4148 = vmatmul.f32.gmra.mxu0 %v3303
      %v4149 = vpop.f32.mrf.mxu0
      %v4150 = vadd.f32 0.0, %v4149
      %4151 = vmatmul.f32.gmra.mxu0 %v3305
      %v4152 = vpop.f32.mrf.mxu0
      %v4153 = vadd.f32 0.0, %v4152
      %4154 = vmatmul.f32.gmra.mxu0 %v3307
      %v4155 = vpop.f32.mrf.mxu0
      %v4156 = vadd.f32 0.0, %v4155
      %4157 = vmatmul.f32.gmra.mxu0 %v4106
      %v4158 = vpop.f32.mrf.mxu0
      %v4159 = vadd.f32 0.0, %v4158
      %4160 = vmatmul.f32.gmra.mxu0 %v4108
      %v4161 = vpop.f32.mrf.mxu0
      %v4162 = vadd.f32 0.0, %v4161
      %4163 = vmatmul.f32.gmra.mxu0 %v4110
      %v4164 = vpop.f32.mrf.mxu0
      %v4165 = vadd.f32 0.0, %v4164
      %4166 = vmatmul.f32.gmra.mxu0 %v4112
      %v4167 = vpop.f32.mrf.mxu0
      %v4168 = vadd.f32 0.0, %v4167
      %4169 = vdwg.mxu0
      %v4170 = vadd.f32 %v4086, %v4135
      %v4171 = vadd.f32 %v4087, %v4138
      %v4172 = vadd.f32 %v4088, %v4141
      %v4173 = vadd.f32 %v4089, %v4144
      %v4174 = vadd.f32 %v4090, %v4147
      %v4175 = vadd.f32 %v4091, %v4150
      %v4176 = vadd.f32 %v4092, %v4153
      %v4177 = vadd.f32 %v4093, %v4156
      %v4178 = vadd.f32 %v4094, %v4159
      %v4179 = vadd.f32 %v4095, %v4162
      %v4180 = vadd.f32 %v4096, %v4165
      %v4181 = vadd.f32 %v4097, %v4168
      %v4182 = vld [vmem:[%s4 + $0xf0] sm:$0xff]
      %v4183 = vld [vmem:[%s4 + $0xf8] sm:$0x3]
      %v4184 = vrot.slane %v1984, 4
      %v4185 = vsel %vm2428, %v3462, %v4184
      %v4186 = vrot.slane %v1987, 4
      %v4187 = vsel %vm2428, %v4184, %v4186
      %v4188 = vsel %vm2028, %v4185, 0
      %v4190 = vsel %vm2028, %v4187, 0
      %v4192 = vsel %vm2028, %v4186, 0
      %v4195 = vsel %vm2053, %v4183, 0
      %4197 = vmatpush.msra.mxu0 0.0
      %4198 = vmatpush.msra.mxu0 0.0
      %4199 = vmatpush.msra.mxu0 0.0
      %4200 = vmatpush.msra.mxu0 0.0
      %4201 = vmatpush.msra.mxu0 0.0
      %4202 = vmatpush.msra.mxu0 0.0
      %4203 = vmatpush.msra.mxu0 0.0
      %4204 = vmatpush.msra.mxu0 0.0
      %4205 = vmatpush.msra.mxu0 0.0
      %4206 = vmatpush.msra.mxu0 0.0
      %4207 = vmatpush.msra.mxu0 0.0
      %4208 = vmatpush.msra.mxu0 0.0
      %4209 = vmatpush.msra.mxu0 0.0
      %4210 = vmatpush.msra.mxu0 0.0
      %4211 = vmatpush.msra.mxu0 %v4195
      %4212 = vmatpush.msra.mxu0 %v4182
      %4213 = vmatmul.f32.gmra.mxu0 %v2464
      %v4214 = vpop.f32.mrf.mxu0
      %v4215 = vadd.f32 0.0, %v4214
      %4216 = vmatmul.f32.gmra.mxu0 %v2466
      %v4217 = vpop.f32.mrf.mxu0
      %v4218 = vadd.f32 0.0, %v4217
      %4219 = vmatmul.f32.gmra.mxu0 %v2468
      %v4220 = vpop.f32.mrf.mxu0
      %v4221 = vadd.f32 0.0, %v4220
      %4222 = vmatmul.f32.gmra.mxu0 %v2470
      %v4223 = vpop.f32.mrf.mxu0
      %v4224 = vadd.f32 0.0, %v4223
      %4225 = vmatmul.f32.gmra.mxu0 %v2472
      %v4226 = vpop.f32.mrf.mxu0
      %v4227 = vadd.f32 0.0, %v4226
      %4228 = vmatmul.f32.gmra.mxu0 %v2549
      %v4229 = vpop.f32.mrf.mxu0
      %v4230 = vadd.f32 0.0, %v4229
      %4231 = vmatmul.f32.gmra.mxu0 %v3385
      %v4232 = vpop.f32.mrf.mxu0
      %v4233 = vadd.f32 0.0, %v4232
      %4234 = vmatmul.f32.gmra.mxu0 %v3387
      %v4235 = vpop.f32.mrf.mxu0
      %v4236 = vadd.f32 0.0, %v4235
      %4237 = vmatmul.f32.gmra.mxu0 %v3464
      %v4238 = vpop.f32.mrf.mxu0
      %v4239 = vadd.f32 0.0, %v4238
      %4240 = vmatmul.f32.gmra.mxu0 %v4188
      %v4241 = vpop.f32.mrf.mxu0
      %v4242 = vadd.f32 0.0, %v4241
      %4243 = vmatmul.f32.gmra.mxu0 %v4190
      %v4244 = vpop.f32.mrf.mxu0
      %v4245 = vadd.f32 0.0, %v4244
      %4246 = vmatmul.f32.gmra.mxu0 %v4192
      %v4247 = vpop.f32.mrf.mxu0
      %v4248 = vadd.f32 0.0, %v4247
      %4249 = vdwg.mxu0
      %v4250 = vadd.f32 %v4170, %v4215
      %v4251 = vadd.f32 %v4171, %v4218
      %v4252 = vadd.f32 %v4172, %v4221
      %v4253 = vadd.f32 %v4173, %v4224
      %v4254 = vadd.f32 %v4174, %v4227
      %v4255 = vadd.f32 %v4175, %v4230
      %v4256 = vadd.f32 %v4176, %v4233
      %v4257 = vadd.f32 %v4177, %v4236
      %v4258 = vadd.f32 %v4178, %v4239
      %v4259 = vadd.f32 %v4179, %v4242
      %v4260 = vadd.f32 %v4180, %v4245
      %v4261 = vadd.f32 %v4181, %v4248
      %v4262 = vld [vmem:[%s5] sm:$0x1]
      %v4264 = vperm.slane %v4262, 0
      %v4266 = vadd.f32 %v4250, %v4264
      %v4267 = vadd.f32 %v4251, %v4264
      %v4268 = vadd.f32 %v4252, %v4264
      %v4269 = vadd.f32 %v4253, %v4264
      %v4270 = vadd.f32 %v4254, %v4264
      %v4271 = vadd.f32 %v4255, %v4264
      %v4272 = vadd.f32 %v4256, %v4264
      %v4273 = vadd.f32 %v4257, %v4264
      %v4274 = vadd.f32 %v4258, %v4264
      %v4275 = vadd.f32 %v4259, %v4264
      %v4276 = vadd.f32 %v4260, %v4264
      %v4277 = vadd.f32 %v4261, %v4264
      %v4278 = vmax.f32 %v4266, 0.0
      %v4279 = vmax.f32 %v4267, 0.0
      %v4280 = vmax.f32 %v4268, 0.0
      %v4281 = vmax.f32 %v4269, 0.0
      %v4282 = vmax.f32 %v4270, 0.0
      %v4283 = vmax.f32 %v4271, 0.0
      %v4284 = vmax.f32 %v4272, 0.0
      %v4285 = vmax.f32 %v4273, 0.0
      %v4286 = vmax.f32 %v4274, 0.0
      %v4287 = vmax.f32 %v4275, 0.0
      %v4288 = vmax.f32 %v4276, 0.0
      %v4289 = vmax.f32 %v4277, 0.0
      %v4302 = vrot.slane %v4278, 1
      %v4303 = vrot.slane %v4279, 1
      %v4304 = vsel %vm1129, %v4302, %v4303
      %v4305 = vrot.slane %v4280, 1
      %v4306 = vsel %vm1129, %v4303, %v4305
      %v4307 = vrot.slane %v4281, 1
      %v4308 = vsel %vm1129, %v4305, %v4307
      %v4309 = vrot.slane %v4282, 1
      %v4310 = vsel %vm1129, %v4307, %v4309
      %v4311 = vrot.slane %v4283, 1
      %v4312 = vsel %vm1129, %v4309, %v4311
      %v4313 = vrot.slane %v4284, 1
      %v4314 = vsel %vm1129, %v4311, %v4313
      %v4315 = vrot.slane %v4285, 1
      %v4316 = vsel %vm1129, %v4313, %v4315
      %v4317 = vrot.slane %v4286, 1
      %v4318 = vsel %vm1129, %v4315, %v4317
      %v4319 = vrot.slane %v4287, 1
      %v4320 = vsel %vm1129, %v4317, %v4319
      %v4321 = vrot.slane %v4288, 1
      %v4322 = vsel %vm1129, %v4319, %v4321
      %v4323 = vrot.slane %v4289, 1
      %v4324 = vsel %vm1129, %v4321, %v4323
      %v4337 = vmax.f32 %v4278, %v4304
      %v4338 = vmax.f32 %v4279, %v4306
      %v4339 = vmax.f32 %v4280, %v4308
      %v4340 = vmax.f32 %v4281, %v4310
      %v4341 = vmax.f32 %v4282, %v4312
      %v4342 = vmax.f32 %v4283, %v4314
      %v4343 = vmax.f32 %v4284, %v4316
      %v4344 = vmax.f32 %v4285, %v4318
      %v4345 = vmax.f32 %v4286, %v4320
      %v4346 = vmax.f32 %v4287, %v4322
      %v4347 = vmax.f32 %v4288, %v4324
      %v4348 = vmax.f32 %v4289, %v4323
      %v4360 = vrot.slane %v4338, 4
      %v4361 = vrot.slane %v4339, 4
      %v4362 = vsel %vm2428, %v4360, %v4361
      %v4363 = vrot.slane %v4340, 4
      %v4364 = vsel %vm2428, %v4361, %v4363
      %v4365 = vrot.slane %v4341, 4
      %v4366 = vsel %vm2428, %v4363, %v4365
      %v4367 = vrot.slane %v4342, 4
      %v4368 = vsel %vm2428, %v4365, %v4367
      %v4369 = vrot.slane %v4343, 4
      %v4370 = vsel %vm2428, %v4367, %v4369
      %v4371 = vrot.slane %v4344, 4
      %v4372 = vsel %vm2428, %v4369, %v4371
      %v4373 = vrot.slane %v4345, 4
      %v4374 = vsel %vm2428, %v4371, %v4373
      %v4375 = vrot.slane %v4346, 4
      %v4376 = vsel %vm2428, %v4373, %v4375
      %v4377 = vrot.slane %v4347, 4
      %v4378 = vsel %vm2428, %v4375, %v4377
      %v4379 = vrot.slane %v4348, 4
      %v4380 = vsel %vm2428, %v4377, %v4379
      %v4391 = vmax.f32 %v4337, %v4362
      %v4392 = vmax.f32 %v4338, %v4364
      %v4393 = vmax.f32 %v4339, %v4366
      %v4394 = vmax.f32 %v4340, %v4368
      %v4395 = vmax.f32 %v4341, %v4370
      %v4396 = vmax.f32 %v4342, %v4372
      %v4397 = vmax.f32 %v4343, %v4374
      %v4398 = vmax.f32 %v4344, %v4376
      %v4399 = vmax.f32 %v4345, %v4378
      %v4400 = vmax.f32 %v4346, %v4380
      %v4401 = vld [vmem:[%s7] sm:$0xff]
      %v4402 = vld [vmem:[%s7 + $0x8] sm:$0xff]
      %vm4403 = vcmask 646144
      %v4405 = vsel %vm4403, %v4401, 0
      %v4408 = vsel %vm4403, %v4402, 0
      %v4411 = vsel %vm1129, %v4400, 0
      %4413 = vmatpush.msra.mxu0 0.0
      %4414 = vmatpush.msra.mxu0 0.0
      %4415 = vmatpush.msra.mxu0 0.0
      %4416 = vmatpush.msra.mxu0 0.0
      %4417 = vmatpush.msra.mxu0 0.0
      %4418 = vmatpush.msra.mxu0 0.0
      %4419 = vmatpush.msra.mxu0 %v4411
      %4420 = vmatpush.msra.mxu0 %v4399
      %4421 = vmatpush.msra.mxu0 %v4398
      %4422 = vmatpush.msra.mxu0 %v4397
      %4423 = vmatpush.msra.mxu0 %v4396
      %4424 = vmatpush.msra.mxu0 %v4395
      %4425 = vmatpush.msra.mxu0 %v4394
      %4426 = vmatpush.msra.mxu0 %v4393
      %4427 = vmatpush.msra.mxu0 %v4392
      %4428 = vmatpush.msra.mxu0 %v4391
      %4429 = vmatmul.f32.gmra.mxu0 %v4405
      %v4430 = vpop.f32.mrf.mxu0
      %v4431 = vadd.f32 0.0, %v4430
      %4432 = vmatmul.f32.gmra.mxu0 %v4408
      %v4433 = vpop.f32.mrf.mxu0
      %v4434 = vadd.f32 0.0, %v4433
      %4435 = vdwg.mxu0
      %v4436 = vld [vmem:[%s447] sm:$0x1]
      %v4437 = vld [vmem:[%s8] sm:$0x7]
      %v4438 = vld [vmem:[%s9] sm:$0xff]
      %v4439 = vld [vmem:[%s9 + $0x8] sm:$0x3]
      %v4441 = vsel %vm2028, %v4431, 0
      %v4444 = vsel %vm2053, %v4439, 0
      %4446 = vmatpush.msra.mxu0 0.0
      %4447 = vmatpush.msra.mxu0 0.0
      %4448 = vmatpush.msra.mxu0 0.0
      %4449 = vmatpush.msra.mxu0 0.0
      %4450 = vmatpush.msra.mxu0 0.0
      %4451 = vmatpush.msra.mxu0 0.0
      %4452 = vmatpush.msra.mxu0 0.0
      %4453 = vmatpush.msra.mxu0 0.0
      %4454 = vmatpush.msra.mxu0 0.0
      %4455 = vmatpush.msra.mxu0 0.0
      %4456 = vmatpush.msra.mxu0 0.0
      %4457 = vmatpush.msra.mxu0 0.0
      %4458 = vmatpush.msra.mxu0 0.0
      %4459 = vmatpush.msra.mxu0 0.0
      %4460 = vmatpush.msra.mxu0 %v4444
      %4461 = vmatpush.msra.mxu0 %v4438
      %4462 = vmatmul.f32.gmra.mxu0 %v4441
      %v4463 = vpop.f32.mrf.mxu0
      %v4464 = vadd.f32 0.0, %v4463
      %4465 = vdwg.mxu0
      %vm4466 = vcmask 23552
      %v4468 = vsel %vm4466, %v4436, 0
      %v4471 = vsel %vm2624, %v4437, 0
      %4473 = vmatpush.msra.mxu0 0.0
      %4474 = vmatpush.msra.mxu0 0.0
      %4475 = vmatpush.msra.mxu0 0.0
      %4476 = vmatpush.msra.mxu0 0.0
      %4477 = vmatpush.msra.mxu0 0.0
      %4478 = vmatpush.msra.mxu0 0.0
      %4479 = vmatpush.msra.mxu0 0.0
      %4480 = vmatpush.msra.mxu0 0.0
      %4481 = vmatpush.msra.mxu0 0.0
      %4482 = vmatpush.msra.mxu0 0.0
      %4483 = vmatpush.msra.mxu0 0.0
      %4484 = vmatpush.msra.mxu0 0.0
      %4485 = vmatpush.msra.mxu0 0.0
      %4486 = vmatpush.msra.mxu0 0.0
      %4487 = vmatpush.msra.mxu0 0.0
      %4488 = vmatpush.msra.mxu0 %v4471
      %4489 = vmatmul.f32.gmra.mxu0 %v4468
      %v4490 = vpop.f32.mrf.mxu0
      %v4491 = vadd.f32 %v4464, %v4490
      %4492 = vdwg.mxu0
      %s4493 = scalar_lea.vmem %s9, 16
      %v4494 = vld [vmem:[%s4493] sm:$0xff]
      %v4495 = vld [vmem:[%s4493 + $0x8] sm:$0x3]
      %v4496 = vrot.slane %v4431, 1
      %v4497 = vsel %vm2028, %v4496, 0
      %v4500 = vsel %vm2053, %v4495, 0
      %4502 = vmatpush.msra.mxu0 0.0
      %4503 = vmatpush.msra.mxu0 0.0
      %4504 = vmatpush.msra.mxu0 0.0
      %4505 = vmatpush.msra.mxu0 0.0
      %4506 = vmatpush.msra.mxu0 0.0
      %4507 = vmatpush.msra.mxu0 0.0
      %4508 = vmatpush.msra.mxu0 0.0
      %4509 = vmatpush.msra.mxu0 0.0
      %4510 = vmatpush.msra.mxu0 0.0
      %4511 = vmatpush.msra.mxu0 0.0
      %4512 = vmatpush.msra.mxu0 0.0
      %4513 = vmatpush.msra.mxu0 0.0
      %4514 = vmatpush.msra.mxu0 0.0
      %4515 = vmatpush.msra.mxu0 0.0
      %4516 = vmatpush.msra.mxu0 %v4500
      %4517 = vmatpush.msra.mxu0 %v4494
      %4518 = vmatmul.f32.gmra.mxu0 %v4497
      %v4519 = vpop.f32.mrf.mxu0
      %v4520 = vadd.f32 0.0, %v4519
      %4521 = vdwg.mxu0
      %v4522 = vadd.f32 %v4491, %v4520
      %s4523 = scalar_lea.vmem %s9, 32
      %v4524 = vld [vmem:[%s4523] sm:$0xff]
      %v4525 = vld [vmem:[%s4523 + $0x8] sm:$0x3]
      %v4526 = vrot.slane %v4431, 2
      %v4527 = vsel %vm2028, %v4526, 0
      %v4530 = vsel %vm2053, %v4525, 0
      %4532 = vmatpush.msra.mxu0 0.0
      %4533 = vmatpush.msra.mxu0 0.0
      %4534 = vmatpush.msra.mxu0 0.0
      %4535 = vmatpush.msra.mxu0 0.0
      %4536 = vmatpush.msra.mxu0 0.0
      %4537 = vmatpush.msra.mxu0 0.0
      %4538 = vmatpush.msra.mxu0 0.0
      %4539 = vmatpush.msra.mxu0 0.0
      %4540 = vmatpush.msra.mxu0 0.0
      %4541 = vmatpush.msra.mxu0 0.0
      %4542 = vmatpush.msra.mxu0 0.0
      %4543 = vmatpush.msra.mxu0 0.0
      %4544 = vmatpush.msra.mxu0 0.0
      %4545 = vmatpush.msra.mxu0 0.0
      %4546 = vmatpush.msra.mxu0 %v4530
      %4547 = vmatpush.msra.mxu0 %v4524
      %4548 = vmatmul.f32.gmra.mxu0 %v4527
      %v4549 = vpop.f32.mrf.mxu0
      %v4550 = vadd.f32 0.0, %v4549
      %4551 = vdwg.mxu0
      %v4552 = vadd.f32 %v4522, %v4550
      %s4553 = scalar_lea.vmem %s9, 48
      %v4554 = vld [vmem:[%s4553] sm:$0xff]
      %v4555 = vld [vmem:[%s4553 + $0x8] sm:$0x3]
      %v4556 = vrot.slane %v4431, 3
      %v4557 = vsel %vm2028, %v4556, 0
      %v4560 = vsel %vm2053, %v4555, 0
      %4562 = vmatpush.msra.mxu0 0.0
      %4563 = vmatpush.msra.mxu0 0.0
      %4564 = vmatpush.msra.mxu0 0.0
      %4565 = vmatpush.msra.mxu0 0.0
      %4566 = vmatpush.msra.mxu0 0.0
      %4567 = vmatpush.msra.mxu0 0.0
      %4568 = vmatpush.msra.mxu0 0.0
      %4569 = vmatpush.msra.mxu0 0.0
      %4570 = vmatpush.msra.mxu0 0.0
      %4571 = vmatpush.msra.mxu0 0.0
      %4572 = vmatpush.msra.mxu0 0.0
      %4573 = vmatpush.msra.mxu0 0.0
      %4574 = vmatpush.msra.mxu0 0.0
      %4575 = vmatpush.msra.mxu0 0.0
      %4576 = vmatpush.msra.mxu0 %v4560
      %4577 = vmatpush.msra.mxu0 %v4554
      %4578 = vmatmul.f32.gmra.mxu0 %v4557
      %v4579 = vpop.f32.mrf.mxu0
      %v4580 = vadd.f32 0.0, %v4579
      %4581 = vdwg.mxu0
      %v4582 = vadd.f32 %v4552, %v4580
      %s4583 = scalar_lea.vmem %s9, 64
      %v4584 = vld [vmem:[%s4583] sm:$0xff]
      %v4585 = vld [vmem:[%s4583 + $0x8] sm:$0x3]
      %v4586 = vrot.slane %v4431, 4
      %v4587 = vsel %vm2028, %v4586, 0
      %v4590 = vsel %vm2053, %v4585, 0
      %4592 = vmatpush.msra.mxu0 0.0
      %4593 = vmatpush.msra.mxu0 0.0
      %4594 = vmatpush.msra.mxu0 0.0
      %4595 = vmatpush.msra.mxu0 0.0
      %4596 = vmatpush.msra.mxu0 0.0
      %4597 = vmatpush.msra.mxu0 0.0
      %4598 = vmatpush.msra.mxu0 0.0
      %4599 = vmatpush.msra.mxu0 0.0
      %4600 = vmatpush.msra.mxu0 0.0
      %4601 = vmatpush.msra.mxu0 0.0
      %4602 = vmatpush.msra.mxu0 0.0
      %4603 = vmatpush.msra.mxu0 0.0
      %4604 = vmatpush.msra.mxu0 0.0
      %4605 = vmatpush.msra.mxu0 0.0
      %4606 = vmatpush.msra.mxu0 %v4590
      %4607 = vmatpush.msra.mxu0 %v4584
      %4608 = vmatmul.f32.gmra.mxu0 %v4587
      %v4609 = vpop.f32.mrf.mxu0
      %v4610 = vadd.f32 0.0, %v4609
      %4611 = vdwg.mxu0
      %v4612 = vadd.f32 %v4582, %v4610
      %s4613 = scalar_lea.vmem %s9, 80
      %v4614 = vld [vmem:[%s4613] sm:$0xff]
      %v4615 = vld [vmem:[%s4613 + $0x8] sm:$0x3]
      %v4616 = vrot.slane %v4431, 5
      %v4617 = vsel %vm2028, %v4616, 0
      %v4620 = vsel %vm2053, %v4615, 0
      %4622 = vmatpush.msra.mxu0 0.0
      %4623 = vmatpush.msra.mxu0 0.0
      %4624 = vmatpush.msra.mxu0 0.0
      %4625 = vmatpush.msra.mxu0 0.0
      %4626 = vmatpush.msra.mxu0 0.0
      %4627 = vmatpush.msra.mxu0 0.0
      %4628 = vmatpush.msra.mxu0 0.0
      %4629 = vmatpush.msra.mxu0 0.0
      %4630 = vmatpush.msra.mxu0 0.0
      %4631 = vmatpush.msra.mxu0 0.0
      %4632 = vmatpush.msra.mxu0 0.0
      %4633 = vmatpush.msra.mxu0 0.0
      %4634 = vmatpush.msra.mxu0 0.0
      %4635 = vmatpush.msra.mxu0 0.0
      %4636 = vmatpush.msra.mxu0 %v4620
      %4637 = vmatpush.msra.mxu0 %v4614
      %4638 = vmatmul.f32.gmra.mxu0 %v4617
      %v4639 = vpop.f32.mrf.mxu0
      %v4640 = vadd.f32 0.0, %v4639
      %4641 = vdwg.mxu0
      %v4642 = vadd.f32 %v4612, %v4640
      %s4643 = scalar_lea.vmem %s9, 96
      %v4644 = vld [vmem:[%s4643] sm:$0xff]
      %v4645 = vld [vmem:[%s4643 + $0x8] sm:$0x3]
      %v4646 = vrot.slane %v4431, 6
      %v4647 = vsel %vm2028, %v4646, 0
      %v4650 = vsel %vm2053, %v4645, 0
      %4652 = vmatpush.msra.mxu0 0.0
      %4653 = vmatpush.msra.mxu0 0.0
      %4654 = vmatpush.msra.mxu0 0.0
      %4655 = vmatpush.msra.mxu0 0.0
      %4656 = vmatpush.msra.mxu0 0.0
      %4657 = vmatpush.msra.mxu0 0.0
      %4658 = vmatpush.msra.mxu0 0.0
      %4659 = vmatpush.msra.mxu0 0.0
      %4660 = vmatpush.msra.mxu0 0.0
      %4661 = vmatpush.msra.mxu0 0.0
      %4662 = vmatpush.msra.mxu0 0.0
      %4663 = vmatpush.msra.mxu0 0.0
      %4664 = vmatpush.msra.mxu0 0.0
      %4665 = vmatpush.msra.mxu0 0.0
      %4666 = vmatpush.msra.mxu0 %v4650
      %4667 = vmatpush.msra.mxu0 %v4644
      %4668 = vmatmul.f32.gmra.mxu0 %v4647
      %v4669 = vpop.f32.mrf.mxu0
      %v4670 = vadd.f32 0.0, %v4669
      %4671 = vdwg.mxu0
      %v4672 = vadd.f32 %v4642, %v4670
      %s4673 = scalar_lea.vmem %s9, 112
      %v4674 = vld [vmem:[%s4673] sm:$0xff]
      %v4675 = vld [vmem:[%s4673 + $0x8] sm:$0x3]
      %v4676 = vrot.slane %v4431, 7
      %v4677 = vsel %vm2028, %v4676, 0
      %v4680 = vsel %vm2053, %v4675, 0
      %4682 = vmatpush.msra.mxu0 0.0
      %4683 = vmatpush.msra.mxu0 0.0
      %4684 = vmatpush.msra.mxu0 0.0
      %4685 = vmatpush.msra.mxu0 0.0
      %4686 = vmatpush.msra.mxu0 0.0
      %4687 = vmatpush.msra.mxu0 0.0
      %4688 = vmatpush.msra.mxu0 0.0
      %4689 = vmatpush.msra.mxu0 0.0
      %4690 = vmatpush.msra.mxu0 0.0
      %4691 = vmatpush.msra.mxu0 0.0
      %4692 = vmatpush.msra.mxu0 0.0
      %4693 = vmatpush.msra.mxu0 0.0
      %4694 = vmatpush.msra.mxu0 0.0
      %4695 = vmatpush.msra.mxu0 0.0
      %4696 = vmatpush.msra.mxu0 %v4680
      %4697 = vmatpush.msra.mxu0 %v4674
      %4698 = vmatmul.f32.gmra.mxu0 %v4677
      %v4699 = vpop.f32.mrf.mxu0
      %v4700 = vadd.f32 0.0, %v4699
      %4701 = vdwg.mxu0
      %v4702 = vadd.f32 %v4672, %v4700
      %s4703 = scalar_lea.vmem %s9, 128
      %v4704 = vld [vmem:[%s4703] sm:$0xff]
      %v4705 = vld [vmem:[%s4703 + $0x8] sm:$0x3]
      %v4707 = vsel %vm2028, %v4434, 0
      %v4710 = vsel %vm2053, %v4705, 0
      %4712 = vmatpush.msra.mxu0 0.0
      %4713 = vmatpush.msra.mxu0 0.0
      %4714 = vmatpush.msra.mxu0 0.0
      %4715 = vmatpush.msra.mxu0 0.0
      %4716 = vmatpush.msra.mxu0 0.0
      %4717 = vmatpush.msra.mxu0 0.0
      %4718 = vmatpush.msra.mxu0 0.0
      %4719 = vmatpush.msra.mxu0 0.0
      %4720 = vmatpush.msra.mxu0 0.0
      %4721 = vmatpush.msra.mxu0 0.0
      %4722 = vmatpush.msra.mxu0 0.0
      %4723 = vmatpush.msra.mxu0 0.0
      %4724 = vmatpush.msra.mxu0 0.0
      %4725 = vmatpush.msra.mxu0 0.0
      %4726 = vmatpush.msra.mxu0 %v4710
      %4727 = vmatpush.msra.mxu0 %v4704
      %4728 = vmatmul.f32.gmra.mxu0 %v4707
      %v4729 = vpop.f32.mrf.mxu0
      %v4730 = vadd.f32 0.0, %v4729
      %4731 = vdwg.mxu0
      %v4732 = vadd.f32 %v4702, %v4730
      %s4733 = scalar_lea.vmem %s9, 144
      %v4734 = vld [vmem:[%s4733] sm:$0xff]
      %v4735 = vld [vmem:[%s4733 + $0x8] sm:$0x3]
      %v4736 = vrot.slane %v4434, 1
      %v4737 = vsel %vm2028, %v4736, 0
      %v4740 = vsel %vm2053, %v4735, 0
      %4742 = vmatpush.msra.mxu0 0.0
      %4743 = vmatpush.msra.mxu0 0.0
      %4744 = vmatpush.msra.mxu0 0.0
      %4745 = vmatpush.msra.mxu0 0.0
      %4746 = vmatpush.msra.mxu0 0.0
      %4747 = vmatpush.msra.mxu0 0.0
      %4748 = vmatpush.msra.mxu0 0.0
      %4749 = vmatpush.msra.mxu0 0.0
      %4750 = vmatpush.msra.mxu0 0.0
      %4751 = vmatpush.msra.mxu0 0.0
      %4752 = vmatpush.msra.mxu0 0.0
      %4753 = vmatpush.msra.mxu0 0.0
      %4754 = vmatpush.msra.mxu0 0.0
      %4755 = vmatpush.msra.mxu0 0.0
      %4756 = vmatpush.msra.mxu0 %v4740
      %4757 = vmatpush.msra.mxu0 %v4734
      %4758 = vmatmul.f32.gmra.mxu0 %v4737
      %v4759 = vpop.f32.mrf.mxu0
      %v4760 = vadd.f32 0.0, %v4759
      %4761 = vdwg.mxu0
      %v4762 = vadd.f32 %v4732, %v4760
      %s4763 = scalar_lea.vmem %s9, 160
      %v4764 = vld [vmem:[%s4763] sm:$0xff]
      %v4765 = vld [vmem:[%s4763 + $0x8] sm:$0x3]
      %v4766 = vrot.slane %v4434, 2
      %v4767 = vsel %vm2028, %v4766, 0
      %v4770 = vsel %vm2053, %v4765, 0
      %4772 = vmatpush.msra.mxu0 0.0
      %4773 = vmatpush.msra.mxu0 0.0
      %4774 = vmatpush.msra.mxu0 0.0
      %4775 = vmatpush.msra.mxu0 0.0
      %4776 = vmatpush.msra.mxu0 0.0
      %4777 = vmatpush.msra.mxu0 0.0
      %4778 = vmatpush.msra.mxu0 0.0
      %4779 = vmatpush.msra.mxu0 0.0
      %4780 = vmatpush.msra.mxu0 0.0
      %4781 = vmatpush.msra.mxu0 0.0
      %4782 = vmatpush.msra.mxu0 0.0
      %4783 = vmatpush.msra.mxu0 0.0
      %4784 = vmatpush.msra.mxu0 0.0
      %4785 = vmatpush.msra.mxu0 0.0
      %4786 = vmatpush.msra.mxu0 %v4770
      %4787 = vmatpush.msra.mxu0 %v4764
      %4788 = vmatmul.f32.gmra.mxu0 %v4767
      %v4789 = vpop.f32.mrf.mxu0
      %v4790 = vadd.f32 0.0, %v4789
      %4791 = vdwg.mxu0
      %v4792 = vadd.f32 %v4762, %v4790
      %s4793 = scalar_lea.vmem %s9, 176
      %v4794 = vld [vmem:[%s4793] sm:$0xff]
      %v4795 = vld [vmem:[%s4793 + $0x8] sm:$0x3]
      %v4796 = vrot.slane %v4434, 3
      %v4797 = vsel %vm2028, %v4796, 0
      %v4800 = vsel %vm2053, %v4795, 0
      %4802 = vmatpush.msra.mxu0 0.0
      %4803 = vmatpush.msra.mxu0 0.0
      %4804 = vmatpush.msra.mxu0 0.0
      %4805 = vmatpush.msra.mxu0 0.0
      %4806 = vmatpush.msra.mxu0 0.0
      %4807 = vmatpush.msra.mxu0 0.0
      %4808 = vmatpush.msra.mxu0 0.0
      %4809 = vmatpush.msra.mxu0 0.0
      %4810 = vmatpush.msra.mxu0 0.0
      %4811 = vmatpush.msra.mxu0 0.0
      %4812 = vmatpush.msra.mxu0 0.0
      %4813 = vmatpush.msra.mxu0 0.0
      %4814 = vmatpush.msra.mxu0 0.0
      %4815 = vmatpush.msra.mxu0 0.0
      %4816 = vmatpush.msra.mxu0 %v4800
      %4817 = vmatpush.msra.mxu0 %v4794
      %4818 = vmatmul.f32.gmra.mxu0 %v4797
      %v4819 = vpop.f32.mrf.mxu0
      %v4820 = vadd.f32 0.0, %v4819
      %4821 = vdwg.mxu0
      %v4822 = vadd.f32 %v4792, %v4820
      %s4823 = scalar_lea.vmem %s9, 192
      %v4824 = vld [vmem:[%s4823] sm:$0xff]
      %v4825 = vld [vmem:[%s4823 + $0x8] sm:$0x3]
      %v4826 = vrot.slane %v4434, 4
      %v4827 = vsel %vm2028, %v4826, 0
      %v4830 = vsel %vm2053, %v4825, 0
      %4832 = vmatpush.msra.mxu0 0.0
      %4833 = vmatpush.msra.mxu0 0.0
      %4834 = vmatpush.msra.mxu0 0.0
      %4835 = vmatpush.msra.mxu0 0.0
      %4836 = vmatpush.msra.mxu0 0.0
      %4837 = vmatpush.msra.mxu0 0.0
      %4838 = vmatpush.msra.mxu0 0.0
      %4839 = vmatpush.msra.mxu0 0.0
      %4840 = vmatpush.msra.mxu0 0.0
      %4841 = vmatpush.msra.mxu0 0.0
      %4842 = vmatpush.msra.mxu0 0.0
      %4843 = vmatpush.msra.mxu0 0.0
      %4844 = vmatpush.msra.mxu0 0.0
      %4845 = vmatpush.msra.mxu0 0.0
      %4846 = vmatpush.msra.mxu0 %v4830
      %4847 = vmatpush.msra.mxu0 %v4824
      %4848 = vmatmul.f32.gmra.mxu0 %v4827
      %v4849 = vpop.f32.mrf.mxu0
      %v4850 = vadd.f32 0.0, %v4849
      %4851 = vdwg.mxu0
      %v4852 = vadd.f32 %v4822, %v4850
      %s4853 = scalar_lea.vmem %s9, 208
      %v4854 = vld [vmem:[%s4853] sm:$0xff]
      %v4855 = vld [vmem:[%s4853 + $0x8] sm:$0x3]
      %v4856 = vrot.slane %v4434, 5
      %v4857 = vsel %vm2028, %v4856, 0
      %v4860 = vsel %vm2053, %v4855, 0
      %4862 = vmatpush.msra.mxu0 0.0
      %4863 = vmatpush.msra.mxu0 0.0
      %4864 = vmatpush.msra.mxu0 0.0
      %4865 = vmatpush.msra.mxu0 0.0
      %4866 = vmatpush.msra.mxu0 0.0
      %4867 = vmatpush.msra.mxu0 0.0
      %4868 = vmatpush.msra.mxu0 0.0
      %4869 = vmatpush.msra.mxu0 0.0
      %4870 = vmatpush.msra.mxu0 0.0
      %4871 = vmatpush.msra.mxu0 0.0
      %4872 = vmatpush.msra.mxu0 0.0
      %4873 = vmatpush.msra.mxu0 0.0
      %4874 = vmatpush.msra.mxu0 0.0
      %4875 = vmatpush.msra.mxu0 0.0
      %4876 = vmatpush.msra.mxu0 %v4860
      %4877 = vmatpush.msra.mxu0 %v4854
      %4878 = vmatmul.f32.gmra.mxu0 %v4857
      %v4879 = vpop.f32.mrf.mxu0
      %v4880 = vadd.f32 0.0, %v4879
      %4881 = vdwg.mxu0
      %v4882 = vadd.f32 %v4852, %v4880
      %s4883 = scalar_lea.vmem %s9, 224
      %v4884 = vld [vmem:[%s4883] sm:$0xff]
      %v4885 = vld [vmem:[%s4883 + $0x8] sm:$0x3]
      %v4886 = vrot.slane %v4434, 6
      %v4887 = vsel %vm2028, %v4886, 0
      %v4890 = vsel %vm2053, %v4885, 0
      %4892 = vmatpush.msra.mxu0 0.0
      %4893 = vmatpush.msra.mxu0 0.0
      %4894 = vmatpush.msra.mxu0 0.0
      %4895 = vmatpush.msra.mxu0 0.0
      %4896 = vmatpush.msra.mxu0 0.0
      %4897 = vmatpush.msra.mxu0 0.0
      %4898 = vmatpush.msra.mxu0 0.0
      %4899 = vmatpush.msra.mxu0 0.0
      %4900 = vmatpush.msra.mxu0 0.0
      %4901 = vmatpush.msra.mxu0 0.0
      %4902 = vmatpush.msra.mxu0 0.0
      %4903 = vmatpush.msra.mxu0 0.0
      %4904 = vmatpush.msra.mxu0 0.0
      %4905 = vmatpush.msra.mxu0 0.0
      %4906 = vmatpush.msra.mxu0 %v4890
      %4907 = vmatpush.msra.mxu0 %v4884
      %4908 = vmatmul.f32.gmra.mxu0 %v4887
      %v4909 = vpop.f32.mrf.mxu0
      %v4910 = vadd.f32 0.0, %v4909
      %4911 = vdwg.mxu0
      %v4912 = vadd.f32 %v4882, %v4910
      %s4913 = scalar_lea.vmem %s9, 240
      %v4914 = vld [vmem:[%s4913] sm:$0xff]
      %v4915 = vld [vmem:[%s4913 + $0x8] sm:$0x3]
      %v4916 = vrot.slane %v4434, 7
      %v4917 = vsel %vm2028, %v4916, 0
      %v4920 = vsel %vm2053, %v4915, 0
      %4922 = vmatpush.msra.mxu0 0.0
      %4923 = vmatpush.msra.mxu0 0.0
      %4924 = vmatpush.msra.mxu0 0.0
      %4925 = vmatpush.msra.mxu0 0.0
      %4926 = vmatpush.msra.mxu0 0.0
      %4927 = vmatpush.msra.mxu0 0.0
      %4928 = vmatpush.msra.mxu0 0.0
      %4929 = vmatpush.msra.mxu0 0.0
      %4930 = vmatpush.msra.mxu0 0.0
      %4931 = vmatpush.msra.mxu0 0.0
      %4932 = vmatpush.msra.mxu0 0.0
      %4933 = vmatpush.msra.mxu0 0.0
      %4934 = vmatpush.msra.mxu0 0.0
      %4935 = vmatpush.msra.mxu0 0.0
      %4936 = vmatpush.msra.mxu0 %v4920
      %4937 = vmatpush.msra.mxu0 %v4914
      %4938 = vmatmul.f32.gmra.mxu0 %v4917
      %v4939 = vpop.f32.mrf.mxu0
      %v4940 = vadd.f32 0.0, %v4939
      %4941 = vdwg.mxu0
      %v4942 = vadd.f32 %v4912, %v4940
      %v4943 = vld [vmem:[%s10] sm:$0x1]
      %v4944 = vadd.f32 %v4942, %v4943
      %v4945 = vtanh.pop %v4944
      %v4946 = vld [vmem:[%s11] sm:$0xff]
      %v4947 = vld [vmem:[%s11 + $0x8] sm:$0xff]
      %v4948 = vld [vmem:[%s11 + $0x10] sm:$0xff]
      %v4949 = vld [vmem:[%s11 + $0x18] sm:$0xff]
      %v4950 = vld [vmem:[%s11 + $0x20] sm:$0xff]
      %v4951 = vld [vmem:[%s11 + $0x28] sm:$0xff]
      %v4952 = vld [vmem:[%s11 + $0x30] sm:$0xff]
      %v4953 = vld [vmem:[%s11 + $0x38] sm:$0xff]
      %v4954 = vld [vmem:[%s12] sm:$0x1]
      %vm4955 = vcmask 523264
      %v4957 = vsel %vm4955, %v4945, 0
      %4959 = vmatpush.msra.mxu0 0.0
      %4960 = vmatpush.msra.mxu0 0.0
      %4961 = vmatpush.msra.mxu0 0.0
      %4962 = vmatpush.msra.mxu0 0.0
      %4963 = vmatpush.msra.mxu0 0.0
      %4964 = vmatpush.msra.mxu0 0.0
      %4965 = vmatpush.msra.mxu0 0.0
      %4966 = vmatpush.msra.mxu0 0.0
      %4967 = vmatpush.msra.mxu0 %v4953
      %4968 = vmatpush.msra.mxu0 %v4952
      %4969 = vmatpush.msra.mxu0 %v4951
      %4970 = vmatpush.msra.mxu0 %v4950
      %4971 = vmatpush.msra.mxu0 %v4949
      %4972 = vmatpush.msra.mxu0 %v4948
      %4973 = vmatpush.msra.mxu0 %v4947
      %4974 = vmatpush.msra.mxu0 %v4946
      %4975 = vmatmul.f32.gmra.mxu0 %v4957
      %v4976 = vpop.f32.mrf.mxu0
      %v4977 = vadd.f32 %v4954, %v4976
      %4978 = vdwg.mxu0
      %v4979 = vlaneseq
      %v4980 = vand.u32 %v4979, 127
      %vm4981 = vcmp.ge.s32.totalorder %v4980, 2
      %vm4982 = vcmp.lt.s32.totalorder %v4980, 4
      %vm4983 = vmand %vm4981, %vm4982
      %v4984 = vxor.u32 %v4977, 2147483648
      %v4985 = vmul.f32 %v4984, 1.442695
      %v4986 = vpow.pop %v4985
      %v4987 = vadd.f32 %v4986, 1.0
      %v4988 = vrcp.pop %v4987
      %v4989 = vmul.f32 %v4987, %v4988
      %v4990 = vsub.f32 1.0, %v4989
      %v4991 = vmul.f32 %v4988, %v4990
      %v4992 = vadd.f32 %v4988, %v4991
      %vm4993 = vweird.f32 %v4987
      %vm4994 = vweird.f32 %v4988
      %vm4995 = vmor %vm4993, %vm4994
      %v4996 = vsel %vm4995, %v4988, %v4992
      %v4997 = vand.u32 2147483647, %v4987
      %vm4998 = vcmp.eq.f32.partialorder %v4997, 8.507059e+37
      %v4999 = vand.u32 %v4987, 2147483648
      %v5000 = vor.u32 1.1754944e-38, %v4999
      %v5001 = vsel %vm4998, %v5000, %v4996
      %v5002 = vmul.f32 1.0, %v5001
      %v5003 = vadd.f32 %v5002, 0.001
      %v5004 = vsel %vm4983, %v5003, %v4977
      %vm5005 = vcmask 40960
      %5006 = vst.msk [vmem:[%s450] sm:$0x1] %vm5005, %v5004
      %p5007 = scmp.lt.s32.totalorder %s24, 1
      %s5008 = scalar_select %p5007, %s24, 1
      %s5009 = scalar_lea.vmem %s13, %s5008
      // Predicated region
      $region73: #{policy_forward.1} parent=71 // pred_check
        %p5010 = pneg %p325
      $region74: #{policy_forward.1} parent=71 // pred_check_branch
        %5012 = sbr.rel (%p5010) target = $region76
      $region75: #{policy_forward.1} parent=71 // pred_region
        _
      $region76: #{policy_forward.1} parent=71 // pred_fallthru
        _
    $region72: #{policy_forward.1} parent=5 // pred_fallthru
      _
    %p5013 = scmp.le.s32.totalorder 2, %s19
    // Predicated region
    $region77: #{policy_forward.1} parent=5 // pred_check
      %p5014 = pneg %p5013
    $region78: #{policy_forward.1} parent=5 // pred_check_branch
      %5016 = sbr.rel (%p5014) target = $region80
    $region79: #{policy_forward.1} parent=5 // pred_region
      %s5017 = ssub.s32 %s19, 2
      // Predicated region
      $region81: #{policy_forward.1} parent=79 // pred_check
        %p5018 = pneg %p331
      $region82: #{policy_forward.1} parent=79 // pred_check_branch
        %5020 = sbr.rel (%p5018) target = $region84
      $region83: #{policy_forward.1} parent=79 // pred_region
        %p5021 = scmp.lt.s32.totalorder %s25, 1
        %s5022 = scalar_select %p5021, %s25, 1
        %s5023 = scalar_lea.vmem %s13, %s5022
      $region84: #{policy_forward.1} parent=79 // pred_fallthru
        _
    $region80: #{policy_forward.1} parent=5 // pred_fallthru
      _
  $region6: #{policy_forward.1} parent=0 // loop_footer
    %s23 = sadd.s32 1, %s19
  $region7: #{policy_forward.1} parent=0 // loop_footer_branch
    %18 = sbr.rel target = $region3
  $region8: #{policy_forward.1} parent=0 // loop_exit
    _

</llo_original>
